<compile_context>
chip_gen: v6e
topology: v6e:2x2x1
jax: 0.10.0
libtpu: 0.0.40
codegen_flags: <defaults>
</compile_context>

<pallas_src>
import functools

import jax
import jax.numpy as jnp
from jax.experimental import pallas as pl
from jax.experimental.pallas import tpu as pltpu


def _round_up(n, m):
    return ((n + m - 1) // m) * m


# ---------------------------------------------------------------------------
# Fused kernel: one batch image per grid step, everything stays in VMEM.
# ---------------------------------------------------------------------------
def _bottleneck_kernel(x_ref, w1_ref, b1_ref, w2_ref, b2_ref, w3_ref, b3_ref,
                       o_ref, h1_ref, pk_ref, *, H, W):
    """Scratch:
      h1_ref : (HW + 16, Pp)  f32  staging for h1; 8 pad rows top/bottom so the
                                   +-1-row shifted reads stay in bounds (their
                                   boundary rows are always column-masked).
      pk_ref : (HW + 2W, 3Pp) bf16 packed conv2 operand: lane groups hold the
                                   [c-1 | c | c+1] copies of h1 (edge columns
                                   zeroed); W zero halo rows on each side give
                                   the dy = -1/+1 row shifts for free.
    """
    HW = H * W
    Pp = w2_ref.shape[2]

    x = x_ref[0]                                            # (HW, Cp) input dtype

    # ---- conv1 (1x1) + folded BN1 + ReLU ---------------------------------
    h1 = jnp.dot(x.astype(jnp.bfloat16), w1_ref[...],
                 preferred_element_type=jnp.float32)
    h1 = jnp.maximum(h1 + b1_ref[...], 0.0)                 # (HW, Pp) f32

    # ---- build the lane-packed, column-shifted conv2 operand -------------
    h1_ref[pl.ds(8, HW), :] = h1                            # aligned stage
    col = jax.lax.broadcasted_iota(jnp.int32, (HW, 1), 0) % W
    left = jnp.where(col >= 1, h1_ref[pl.ds(7, HW), :], 0.0)        # pixel c-1
    right = jnp.where(col <= W - 2, h1_ref[pl.ds(9, HW), :], 0.0)   # pixel c+1

    # Zero the +-1-image-row halos every step (cheap; stays correct even if the
    # batch axis is split across cores).  Interior rows are fully rewritten.
    halo = jnp.zeros((W, 3 * Pp), jnp.bfloat16)
    pk_ref[pl.ds(0, W), :] = halo
    pk_ref[pl.ds(W + HW, W), :] = halo
    pk_ref[pl.ds(W, HW), pl.ds(0, Pp)] = left.astype(jnp.bfloat16)
    pk_ref[pl.ds(W, HW), pl.ds(Pp, Pp)] = h1.astype(jnp.bfloat16)
    pk_ref[pl.ds(W, HW), pl.ds(2 * Pp, Pp)] = right.astype(jnp.bfloat16)

    # ---- conv2 (3x3, pad=1) as 3 K-packed (K = 3*Pp) matmuls + BN2 + ReLU -
    # Slab for row-offset dy starts at dy*W: static, sublane-aligned, unmasked.
    acc = jnp.dot(pk_ref[pl.ds(0, HW), :], w2_ref[0],
                  preferred_element_type=jnp.float32)
    acc = acc + jnp.dot(pk_ref[pl.ds(W, HW), :], w2_ref[1],
                        preferred_element_type=jnp.float32)
    acc = acc + jnp.dot(pk_ref[pl.ds(2 * W, HW), :], w2_ref[2],
                        preferred_element_type=jnp.float32)
    h2 = jnp.maximum(acc + b2_ref[...], 0.0)                # (HW, Pp) f32

    # ---- conv3 (1x1) + folded BN3 + residual (f32) + ReLU ----------------
    h3 = jnp.dot(h2.astype(jnp.bfloat16), w3_ref[...],
                 preferred_element_type=jnp.float32)
    h3 = h3 + b3_ref[...] + x.astype(jnp.float32)           # identity residual
    o_ref[0] = jnp.maximum(h3, 0.0).astype(o_ref.dtype)


# ---------------------------------------------------------------------------
# One-time parameter preparation (BN fold, pad to lane width, bf16 cast).
# ---------------------------------------------------------------------------
def prepare_params(params):
    Cin, P = params["w1"].shape
    Cout = params["w3"].shape[1]
    Pp = _round_up(P, 128)
    Cp = _round_up(max(Cin, Cout), 128)

    w1 = jnp.pad(params["w1"] * params["s1"][None, :],
                 ((0, Cp - Cin), (0, Pp - P))).astype(jnp.bfloat16)
    w2 = jnp.pad(params["w2"] * params["s2"][None, None, None, :],
                 ((0, 0), (0, 0), (0, Pp - P), (0, Pp - P)))
    # (dy, dx, ci, co) -> (dy, dx*Pp + ci, co): matches pk_ref's lane packing.
    w2 = w2.reshape(3, 3 * Pp, Pp).astype(jnp.bfloat16)
    w3 = jnp.pad(params["w3"] * params["s3"][None, :],
                 ((0, Pp - P), (0, Cp - Cout))).astype(jnp.bfloat16)
    b1 = jnp.pad(params["b1"], (0, Pp - P)).reshape(1, Pp).astype(jnp.float32)
    b2 = jnp.pad(params["b2"], (0, Pp - P)).reshape(1, Pp).astype(jnp.float32)
    b3 = jnp.pad(params["b3"], (0, Cp - Cout)).reshape(1, Cp).astype(jnp.float32)
    return {"w1": w1, "b1": b1, "w2": w2, "b2": b2, "w3": w3, "b3": b3}


# ---------------------------------------------------------------------------
# Wrapper
# ---------------------------------------------------------------------------
@jax.jit
def bottleneck_forward(x, prep):
    B, H, W, C = x.shape          # identity residual => C == inplanes == 4*planes
    HW = H * W
    Cp = prep["w1"].shape[0]
    Pp = prep["w2"].shape[2]
    assert W % 8 == 0, "W must be a multiple of 8"

    # Channel padding only when C is not already lane-aligned (real ResNet
    # stages have C in {256, 512, 1024, 2048} and skip this).  No bf16 cast
    # here: the kernel casts internally and keeps the residual in f32.
    xp = x if C == Cp else jnp.pad(x, ((0, 0), (0, 0), (0, 0), (0, Cp - C)))
    xp = xp.reshape(B, HW, Cp)

    kernel = functools.partial(_bottleneck_kernel, H=H, W=W)
    out = pl.pallas_call(
        kernel,
        out_shape=jax.ShapeDtypeStruct((B, HW, Cp), x.dtype),
        grid_spec=pltpu.PrefetchScalarGridSpec(
            num_scalar_prefetch=0,
            grid=(B,),
            in_specs=[
                pl.BlockSpec((1, HW, Cp), lambda b: (b, 0, 0)),      # x / residual
                pl.BlockSpec((Cp, Pp), lambda b: (0, 0)),            # w1 (BN folded)
                pl.BlockSpec((1, Pp), lambda b: (0, 0)),             # b1
                pl.BlockSpec((3, 3 * Pp, Pp), lambda b: (0, 0, 0)),  # w2 (packed)
                pl.BlockSpec((1, Pp), lambda b: (0, 0)),             # b2
                pl.BlockSpec((Pp, Cp), lambda b: (0, 0)),            # w3 (BN folded)
                pl.BlockSpec((1, Cp), lambda b: (0, 0)),             # b3
            ],
            out_specs=pl.BlockSpec((1, HW, Cp), lambda b: (b, 0, 0)),
            scratch_shapes=[
                pltpu.VMEM((HW + 16, Pp), jnp.float32),              # h1 staging
                pltpu.VMEM((HW + 2 * W, 3 * Pp), jnp.bfloat16),      # packed conv2
            ],
        ),
        compiler_params=pltpu.CompilerParams(
            dimension_semantics=("parallel",),
            vmem_limit_bytes=32 * 1024 * 1024,
        ),
    )(xp, prep["w1"], prep["b1"], prep["w2"], prep["b2"], prep["w3"], prep["b3"])

    out = out.reshape(B, H, W, Cp)
    return out if Cp == C else out[..., :C]


# ---------------------------------------------------------------------------
# Pure-JAX reference (f32, for correctness check)
# ---------------------------------------------------------------------------
def bottleneck_reference(x, params):
    dn = ("NHWC", "HWIO", "NHWC")
    Cin = x.shape[-1]
    P = params["w1"].shape[1]

    def bn(h, s, b):
        return h * s.reshape(1, 1, 1, -1) + b.reshape(1, 1, 1, -1)

    h = jax.lax.conv_general_dilated(
        x, params["w1"].reshape(1, 1, Cin, P), (1, 1), "VALID", dimension_numbers=dn)
    h = jax.nn.relu(bn(h, params["s1"], params["b1"]))
    h = jax.lax.conv_general_dilated(
        h, params["w2"], (1, 1), ((1, 1), (1, 1)), dimension_numbers=dn)
    h = jax.nn.relu(bn(h, params["s2"], params["b2"]))
    h = jax.lax.conv_general_dilated(
        h, params["w3"].reshape(1, 1, P, 4 * P), (1, 1), "VALID", dimension_numbers=dn)
    h = bn(h, params["s3"], params["b3"]) + x
    return jax.nn.relu(h)


# ---------------------------------------------------------------------------
# Deterministic parameter init (shapes from the PyTorch __init__)
# ---------------------------------------------------------------------------
def init_params(key, inplanes, planes):
    eps = 1e-5
    ks = jax.random.split(key, 12)

    def bn_fold(kg, kb, km, kv, c):
        gamma = 1.0 + 0.1 * jax.random.normal(kg, (c,), jnp.float32)
        beta = 0.1 * jax.random.normal(kb, (c,), jnp.float32)
        mean = 0.1 * jax.random.normal(km, (c,), jnp.float32)
        var = jax.random.uniform(kv, (c,), jnp.float32, 0.5, 1.5)
        s = gamma / jnp.sqrt(var + eps)
        b = beta - mean * s
        return s, b

    w1 = 0.1 * jax.random.normal(ks[0], (inplanes, planes), jnp.float32)      # 1x1 (Cin, P)
    w2 = 0.1 * jax.random.normal(ks[1], (3, 3, planes, planes), jnp.float32)  # HWIO
    w3 = 0.1 * jax.random.normal(ks[2], (planes, 4 * planes), jnp.float32)    # 1x1 (P, 4P)
    s1, b1 = bn_fold(ks[3], ks[4], ks[5], ks[6], planes)
    s2, b2 = bn_fold(ks[7], ks[8], ks[9], ks[10], planes)
    s3, b3 = bn_fold(*jax.random.split(ks[11], 4), 4 * planes)
    return {"w1": w1, "w2": w2, "w3": w3,
            "s1": s1, "b1": b1, "s2": s2, "b2": b2, "s3": s3, "b3": b3}


# ---------------------------------------------------------------------------
if __name__ == "__main__":
    key = jax.random.PRNGKey(0)
    kx, kp = jax.random.split(key)

    B, H, W = 2, 16, 16
    planes = 4
    inplanes = planes * 4   # identity residual (downsample=None) needs inplanes == planes*4

    x = jax.random.normal(kx, (B, H, W, inplanes), jnp.float32)
    params = init_params(kp, inplanes, planes)
    prep = prepare_params(params)           # BN fold / pad / bf16 cast, done once

    out = jax.block_until_ready(bottleneck_forward(x, prep))
    ref = jax.block_until_ready(bottleneck_reference(x, params))

    assert out.shape == (B, H, W, 4 * planes), out.shape
    max_err = float(jnp.max(jnp.abs(out - ref)))
    # bf16 MXU matmuls with BN folded into bf16 weights -> loosened tolerance.
    assert jnp.allclose(out, ref, rtol=3e-2, atol=3e-2), max_err
    print("KERNEL_OK")
</pallas_src>

<mosaic_0001>
module attributes {stable_mosaic.version = 11 : i64} {
  func.func @_bottleneck_kernel(%arg0: i32, %arg1: memref<1x256x128xf32, #tpu.memory_space<vmem>>, %arg2: memref<128x128xbf16, #tpu.memory_space<vmem>>, %arg3: memref<1x128xf32, #tpu.memory_space<vmem>>, %arg4: memref<3x384x128xbf16, #tpu.memory_space<vmem>>, %arg5: memref<1x128xf32, #tpu.memory_space<vmem>>, %arg6: memref<128x128xbf16, #tpu.memory_space<vmem>>, %arg7: memref<1x128xf32, #tpu.memory_space<vmem>>, %arg8: memref<1x256x128xf32, #tpu.memory_space<vmem>>, %arg9: memref<272x128xf32, #tpu.memory_space<vmem>>, %arg10: memref<288x384xbf16, #tpu.memory_space<vmem>>) attributes {dimension_semantics = [#tpu.dimension_semantics<parallel>], iteration_bounds = array<i64: 2>, scalar_prefetch = 0 : i64, scratch_operands = 2 : i64, tpu.core_type = #tpu.core_type<tc>, window_params = [{transform_indices = @transform_0, window_bounds = array<i64: 1, 256, 128>}, {pipeline_mode = #tpu.pipeline_mode<synchronous>, transform_indices = @transform_1, window_bounds = array<i64: 128, 128>}, {pipeline_mode = #tpu.pipeline_mode<synchronous>, transform_indices = @transform_2, window_bounds = array<i64: 1, 128>}, {pipeline_mode = #tpu.pipeline_mode<synchronous>, transform_indices = @transform_3, window_bounds = array<i64: 3, 384, 128>}, {pipeline_mode = #tpu.pipeline_mode<synchronous>, transform_indices = @transform_4, window_bounds = array<i64: 1, 128>}, {pipeline_mode = #tpu.pipeline_mode<synchronous>, transform_indices = @transform_5, window_bounds = array<i64: 128, 128>}, {pipeline_mode = #tpu.pipeline_mode<synchronous>, transform_indices = @transform_6, window_bounds = array<i64: 1, 128>}, {transform_indices = @transform_7, window_bounds = array<i64: 1, 256, 128>}]} {
    %c0 = arith.constant 0 : index
    %c0_0 = arith.constant 0 : index
    %c0_1 = arith.constant 0 : index
    %0 = vector.load %arg1[%c0, %c0_0, %c0_1] : memref<1x256x128xf32, #tpu.memory_space<vmem>>, vector<1x256x128xf32>
    %1 = vector.shape_cast %0 : vector<1x256x128xf32> to vector<256x128xf32>
    %2 = arith.truncf %1 : vector<256x128xf32> to vector<256x128xbf16>
    %c0_2 = arith.constant 0 : index
    %c0_3 = arith.constant 0 : index
    %3 = vector.load %arg2[%c0_2, %c0_3] : memref<128x128xbf16, #tpu.memory_space<vmem>>, vector<128x128xbf16>
    %cst = arith.constant dense<0.000000e+00> : vector<256x128xf32>
    %4 = tpu.matmul %2, %3, %cst {dimension_numbers = #tpu.dot_dimension_numbers<[1], [0], [0], [1], [0, 0, 1, 1], [], []>} : vector<256x128xbf16>, vector<128x128xbf16>, vector<256x128xf32> -> vector<256x128xf32>
    %c0_4 = arith.constant 0 : index
    %c0_5 = arith.constant 0 : index
    %5 = vector.load %arg3[%c0_4, %c0_5] : memref<1x128xf32, #tpu.memory_space<vmem>>, vector<1x128xf32>
    %6 = vector.broadcast %5 : vector<1x128xf32> to vector<256x128xf32>
    %7 = arith.addf %4, %6 : vector<256x128xf32>
    %cst_6 = arith.constant 0.000000e+00 : f32
    %8 = vector.broadcast %cst_6 : f32 to vector<256x128xf32>
    %9 = arith.maximumf %7, %8 : vector<256x128xf32>
    %c8 = arith.constant 8 : index
    %c0_7 = arith.constant 0 : index
    %10 = vector.load %arg9[%c8, %c0_7] : memref<272x128xf32, #tpu.memory_space<vmem>>, vector<256x128xf32>
    tpu.vector_store %arg9[%c8, %c0_7], %9 {strides = array<i32>} : memref<272x128xf32, #tpu.memory_space<vmem>>, vector<256x128xf32>,
    %11 = tpu.iota {dimensions = array<i32: 0>} : vector<256x1xi32>
    %c16_i32 = arith.constant 16 : i32
    %c0_i32 = arith.constant 0 : i32
    %12 = arith.cmpi eq, %c16_i32, %c0_i32 : i32
    %c1_i32 = arith.constant 1 : i32
    %13 = arith.select %12, %c1_i32, %c16_i32 : i32
    %14 = vector.broadcast %13 : i32 to vector<256x1xi32>
    %15 = arith.remsi %11, %14 : vector<256x1xi32>
    %c0_i32_8 = arith.constant 0 : i32
    %16 = vector.broadcast %c0_i32_8 : i32 to vector<256x1xi32>
    %17 = arith.cmpi ne, %15, %16 : vector<256x1xi32>
    %c0_i32_9 = arith.constant 0 : i32
    %18 = vector.broadcast %c0_i32_9 : i32 to vector<256x1xi32>
    %19 = arith.cmpi slt, %15, %18 : vector<256x1xi32>
    %c0_i32_10 = arith.constant 0 : i32
    %20 = arith.cmpi slt, %13, %c0_i32_10 : i32
    %21 = vector.broadcast %20 : i1 to vector<256x1xi1>
    %22 = vector.broadcast %21 : vector<256x1xi1> to vector<256x1xi1>
    %23 = arith.xori %19, %22 : vector<256x1xi1>
    %24 = arith.andi %23, %17 : vector<256x1xi1>
    %25 = vector.broadcast %13 : i32 to vector<256x1xi32>
    %26 = arith.addi %15, %25 : vector<256x1xi32>
    %27 = arith.select %24, %26, %15 : vector<256x1xi1>, vector<256x1xi32>
    %c1_i32_11 = arith.constant 1 : i32
    %28 = vector.broadcast %c1_i32_11 : i32 to vector<256x1xi32>
    %29 = arith.cmpi sge, %27, %28 : vector<256x1xi32>
    %c7 = arith.constant 7 : index
    %c0_12 = arith.constant 0 : index
    %30 = vector.load %arg9[%c7, %c0_12] : memref<272x128xf32, #tpu.memory_space<vmem>>, vector<256x128xf32>
    %cst_13 = arith.constant 0.000000e+00 : f32
    %31 = vector.shape_cast %29 : vector<256x1xi1> to vector<256x1xi1>
    %32 = vector.broadcast %31 : vector<256x1xi1> to vector<256x128xi1>
    %33 = vector.broadcast %cst_13 : f32 to vector<256x128xf32>
    %34 = arith.select %32, %30, %33 : vector<256x128xi1>, vector<256x128xf32>
    %c14_i32 = arith.constant 14 : i32
    %35 = vector.broadcast %c14_i32 : i32 to vector<256x1xi32>
    %36 = arith.cmpi sle, %27, %35 : vector<256x1xi32>
    %c9 = arith.constant 9 : index
    %c0_14 = arith.constant 0 : index
    %37 = vector.load %arg9[%c9, %c0_14] : memref<272x128xf32, #tpu.memory_space<vmem>>, vector<256x128xf32>
    %cst_15 = arith.constant 0.000000e+00 : f32
    %38 = vector.shape_cast %36 : vector<256x1xi1> to vector<256x1xi1>
    %39 = vector.broadcast %38 : vector<256x1xi1> to vector<256x128xi1>
    %40 = vector.broadcast %cst_15 : f32 to vector<256x128xf32>
    %41 = arith.select %39, %37, %40 : vector<256x128xi1>, vector<256x128xf32>
    %cst_16 = arith.constant 0.000000e+00 : bf16
    %42 = vector.broadcast %cst_16 : bf16 to vector<16x384xbf16>
    %c0_17 = arith.constant 0 : index
    %c0_18 = arith.constant 0 : index
    %43 = vector.load %arg10[%c0_17, %c0_18] : memref<288x384xbf16, #tpu.memory_space<vmem>>, vector<16x384xbf16>
    tpu.vector_store %arg10[%c0_17, %c0_18], %42 {strides = array<i32>} : memref<288x384xbf16, #tpu.memory_space<vmem>>, vector<16x384xbf16>,
    %c272 = arith.constant 272 : index
    %c0_19 = arith.constant 0 : index
    %44 = vector.load %arg10[%c272, %c0_19] : memref<288x384xbf16, #tpu.memory_space<vmem>>, vector<16x384xbf16>
    tpu.vector_store %arg10[%c272, %c0_19], %42 {strides = array<i32>} : memref<288x384xbf16, #tpu.memory_space<vmem>>, vector<16x384xbf16>,
    %45 = arith.truncf %34 : vector<256x128xf32> to vector<256x128xbf16>
    %c16 = arith.constant 16 : index
    %c0_20 = arith.constant 0 : index
    %46 = vector.load %arg10[%c16, %c0_20] : memref<288x384xbf16, #tpu.memory_space<vmem>>, vector<256x128xbf16>
    tpu.vector_store %arg10[%c16, %c0_20], %45 {strides = array<i32>} : memref<288x384xbf16, #tpu.memory_space<vmem>>, vector<256x128xbf16>,
    %47 = arith.truncf %9 : vector<256x128xf32> to vector<256x128xbf16>
    %c16_21 = arith.constant 16 : index
    %c128 = arith.constant 128 : index
    %48 = vector.load %arg10[%c16_21, %c128] : memref<288x384xbf16, #tpu.memory_space<vmem>>, vector<256x128xbf16>
    tpu.vector_store %arg10[%c16_21, %c128], %47 {strides = array<i32>} : memref<288x384xbf16, #tpu.memory_space<vmem>>, vector<256x128xbf16>,
    %49 = arith.truncf %41 : vector<256x128xf32> to vector<256x128xbf16>
    %c16_22 = arith.constant 16 : index
    %c256 = arith.constant 256 : index
    %50 = vector.load %arg10[%c16_22, %c256] : memref<288x384xbf16, #tpu.memory_space<vmem>>, vector<256x128xbf16>
    tpu.vector_store %arg10[%c16_22, %c256], %49 {strides = array<i32>} : memref<288x384xbf16, #tpu.memory_space<vmem>>, vector<256x128xbf16>,
    %c0_23 = arith.constant 0 : index
    %c0_24 = arith.constant 0 : index
    %51 = vector.load %arg10[%c0_23, %c0_24] : memref<288x384xbf16, #tpu.memory_space<vmem>>, vector<256x384xbf16>
    %c0_25 = arith.constant 0 : index
    %c0_26 = arith.constant 0 : index
    %c0_27 = arith.constant 0 : index
    %52 = vector.load %arg4[%c0_25, %c0_26, %c0_27] : memref<3x384x128xbf16, #tpu.memory_space<vmem>>, vector<1x384x128xbf16>
    %53 = vector.shape_cast %52 : vector<1x384x128xbf16> to vector<384x128xbf16>
    %cst_28 = arith.constant dense<0.000000e+00> : vector<256x128xf32>
    %54 = tpu.matmul %51, %53, %cst_28 {dimension_numbers = #tpu.dot_dimension_numbers<[1], [0], [0], [1], [0, 0, 1, 1], [], []>} : vector<256x384xbf16>, vector<384x128xbf16>, vector<256x128xf32> -> vector<256x128xf32>
    %c16_29 = arith.constant 16 : index
    %c0_30 = arith.constant 0 : index
    %55 = vector.load %arg10[%c16_29, %c0_30] : memref<288x384xbf16, #tpu.memory_space<vmem>>, vector<256x384xbf16>
    %c1 = arith.constant 1 : index
    %c0_31 = arith.constant 0 : index
    %c0_32 = arith.constant 0 : index
    %56 = vector.load %arg4[%c1, %c0_31, %c0_32] : memref<3x384x128xbf16, #tpu.memory_space<vmem>>, vector<1x384x128xbf16>
    %57 = vector.shape_cast %56 : vector<1x384x128xbf16> to vector<384x128xbf16>
    %cst_33 = arith.constant dense<0.000000e+00> : vector<256x128xf32>
    %58 = tpu.matmul %55, %57, %cst_33 {dimension_numbers = #tpu.dot_dimension_numbers<[1], [0], [0], [1], [0, 0, 1, 1], [], []>} : vector<256x384xbf16>, vector<384x128xbf16>, vector<256x128xf32> -> vector<256x128xf32>
    %59 = arith.addf %54, %58 : vector<256x128xf32>
    %c32 = arith.constant 32 : index
    %c0_34 = arith.constant 0 : index
    %60 = vector.load %arg10[%c32, %c0_34] : memref<288x384xbf16, #tpu.memory_space<vmem>>, vector<256x384xbf16>
    %c2 = arith.constant 2 : index
    %c0_35 = arith.constant 0 : index
    %c0_36 = arith.constant 0 : index
    %61 = vector.load %arg4[%c2, %c0_35, %c0_36] : memref<3x384x128xbf16, #tpu.memory_space<vmem>>, vector<1x384x128xbf16>
    %62 = vector.shape_cast %61 : vector<1x384x128xbf16> to vector<384x128xbf16>
    %cst_37 = arith.constant dense<0.000000e+00> : vector<256x128xf32>
    %63 = tpu.matmul %60, %62, %cst_37 {dimension_numbers = #tpu.dot_dimension_numbers<[1], [0], [0], [1], [0, 0, 1, 1], [], []>} : vector<256x384xbf16>, vector<384x128xbf16>, vector<256x128xf32> -> vector<256x128xf32>
    %64 = arith.addf %59, %63 : vector<256x128xf32>
    %c0_38 = arith.constant 0 : index
    %c0_39 = arith.constant 0 : index
    %65 = vector.load %arg5[%c0_38, %c0_39] : memref<1x128xf32, #tpu.memory_space<vmem>>, vector<1x128xf32>
    %66 = vector.broadcast %65 : vector<1x128xf32> to vector<256x128xf32>
    %67 = arith.addf %64, %66 : vector<256x128xf32>
    %cst_40 = arith.constant 0.000000e+00 : f32
    %68 = vector.broadcast %cst_40 : f32 to vector<256x128xf32>
    %69 = arith.maximumf %67, %68 : vector<256x128xf32>
    %70 = arith.truncf %69 : vector<256x128xf32> to vector<256x128xbf16>
    %c0_41 = arith.constant 0 : index
    %c0_42 = arith.constant 0 : index
    %71 = vector.load %arg6[%c0_41, %c0_42] : memref<128x128xbf16, #tpu.memory_space<vmem>>, vector<128x128xbf16>
    %cst_43 = arith.constant dense<0.000000e+00> : vector<256x128xf32>
    %72 = tpu.matmul %70, %71, %cst_43 {dimension_numbers = #tpu.dot_dimension_numbers<[1], [0], [0], [1], [0, 0, 1, 1], [], []>} : vector<256x128xbf16>, vector<128x128xbf16>, vector<256x128xf32> -> vector<256x128xf32>
    %c0_44 = arith.constant 0 : index
    %c0_45 = arith.constant 0 : index
    %73 = vector.load %arg7[%c0_44, %c0_45] : memref<1x128xf32, #tpu.memory_space<vmem>>, vector<1x128xf32>
    %74 = vector.broadcast %73 : vector<1x128xf32> to vector<256x128xf32>
    %75 = arith.addf %72, %74 : vector<256x128xf32>
    %76 = arith.addf %75, %1 : vector<256x128xf32>
    %cst_46 = arith.constant 0.000000e+00 : f32
    %77 = vector.broadcast %cst_46 : f32 to vector<256x128xf32>
    %78 = arith.maximumf %76, %77 : vector<256x128xf32>
    %c0_47 = arith.constant 0 : index
    %c0_48 = arith.constant 0 : index
    %c0_49 = arith.constant 0 : index
    %79 = vector.load %arg8[%c0_47, %c0_48, %c0_49] : memref<1x256x128xf32, #tpu.memory_space<vmem>>, vector<1x256x128xf32>
    %80 = vector.shape_cast %79 : vector<1x256x128xf32> to vector<256x128xf32>
    %81 = vector.shape_cast %78 : vector<256x128xf32> to vector<1x256x128xf32>
    tpu.vector_store %arg8[%c0_47, %c0_48, %c0_49], %81 {strides = array<i32>} : memref<1x256x128xf32, #tpu.memory_space<vmem>>, vector<1x256x128xf32>,
    return
  }
  func.func @transform_0(%arg0: i32) -> (i32, i32, i32) {
    %c0_i32 = arith.constant 0 : i32
    %c0_i32_0 = arith.constant 0 : i32
    %c0_i32_1 = arith.constant 0 : i32
    return %arg0, %c0_i32, %c0_i32_0 : i32, i32, i32
  }
  func.func @transform_1(%arg0: i32) -> (i32, i32) {
    %c0_i32 = arith.constant 0 : i32
    %c0_i32_0 = arith.constant 0 : i32
    %c0_i32_1 = arith.constant 0 : i32
    return %c0_i32, %c0_i32_0 : i32, i32
  }
  func.func @transform_2(%arg0: i32) -> (i32, i32) {
    %c0_i32 = arith.constant 0 : i32
    %c0_i32_0 = arith.constant 0 : i32
    %c0_i32_1 = arith.constant 0 : i32
    return %c0_i32, %c0_i32_0 : i32, i32
  }
  func.func @transform_3(%arg0: i32) -> (i32, i32, i32) {
    %c0_i32 = arith.constant 0 : i32
    %c0_i32_0 = arith.constant 0 : i32
    %c0_i32_1 = arith.constant 0 : i32
    %c0_i32_2 = arith.constant 0 : i32
    return %c0_i32, %c0_i32_0, %c0_i32_1 : i32, i32, i32
  }
  func.func @transform_4(%arg0: i32) -> (i32, i32) {
    %c0_i32 = arith.constant 0 : i32
    %c0_i32_0 = arith.constant 0 : i32
    %c0_i32_1 = arith.constant 0 : i32
    return %c0_i32, %c0_i32_0 : i32, i32
  }
  func.func @transform_5(%arg0: i32) -> (i32, i32) {
    %c0_i32 = arith.constant 0 : i32
    %c0_i32_0 = arith.constant 0 : i32
    %c0_i32_1 = arith.constant 0 : i32
    return %c0_i32, %c0_i32_0 : i32, i32
  }
  func.func @transform_6(%arg0: i32) -> (i32, i32) {
    %c0_i32 = arith.constant 0 : i32
    %c0_i32_0 = arith.constant 0 : i32
    %c0_i32_1 = arith.constant 0 : i32
    return %c0_i32, %c0_i32_0 : i32, i32
  }
  func.func @transform_7(%arg0: i32) -> (i32, i32, i32) {
    %c0_i32 = arith.constant 0 : i32
    %c0_i32_0 = arith.constant 0 : i32
    %c0_i32_1 = arith.constant 0 : i32
    return %arg0, %c0_i32, %c0_i32_0 : i32, i32, i32
  }
}

</mosaic_0001>

<llo_original>
// kernel: bottleneck_forward.1
$region0: #{bottleneck_forward.1}
  #allocation0 [shape = 'u32[]', space=smem, size = 0x4, offset = 0x4, fixed_abs, tag = 'smem constant byte address 0x4 - core index']
  #allocation1 [shape = 'u32[144,128]{1,0:T(1,128)}', space=vmem, size = 0x12000, scoped, tag = 'internal scratch']
  #allocation2 [shape = 'f32[272,128]{1,0:T(8,128)}', space=vmem, size = 0x22000, scoped, tag = 'scratch operand']
  #allocation3 [shape = 'bf16[288,384]{1,0:T(8,128)(2,1)}', space=vmem, size = 0x36000, scoped, tag = 'scratch operand']
  %s0 = inlined_call_operand.vmem [shape: f32[2,256,128], index: 0, kind: input, shape index: {}]
  %s1 = inlined_call_operand.vmem [shape: bf16[128,128], index: 1, kind: input, shape index: {}]
  %s2 = inlined_call_operand.vmem [shape: f32[1,128], index: 2, kind: input, shape index: {}]
  %s3 = inlined_call_operand.vmem [shape: bf16[3,384,128], index: 3, kind: input, shape index: {}]
  %s4 = inlined_call_operand.vmem [shape: f32[1,128], index: 4, kind: input, shape index: {}]
  %s5 = inlined_call_operand.vmem [shape: bf16[128,128], index: 5, kind: input, shape index: {}]
  %s6 = inlined_call_operand.vmem [shape: f32[1,128], index: 6, kind: input, shape index: {}]
  %s7 = inlined_call_operand.hbm [shape: f32[2,256,128], index: 7, kind: output, shape index: {}]
  %s8 = sld [smem:[#allocation0]]
  $region61: #{bottleneck_forward.1} parent=0
    _
  %s10 = ssub.s32 1, %s8
  %s11 = scalar_select 0, %s10, %s8
  $region1: #{bottleneck_forward.1} parent=0
    #allocation4 [shape = 'u8[262144]{0}', space=vmem, size = 0x40000, scoped, tag = 'output window, operand 0']
    #allocation5 [shape = 's32[2]{0}', space=sflag, size = 0x8, scoped, tag = 'scoped memory for bottleneck_forward.1']
    %12 = vsyncpa [#allocation5], 0
    %s13 = scalar_lea.sflag [#allocation5], 1
    %14 = vsyncpa %s13, 0
    loop: start=0, step=1, limit=4
    $region2: #{bottleneck_forward.1} parent=1 // loop_pre_header
      _
    $region3: #{bottleneck_forward.1} parent=1 // loop_header
      %s16 = sphi 0, %s20
      %p17 = scmp.ge.s32.totalorder %s16, 4
      %s26 = sphi 0, %s28
      %s29 = sphi 0, %s26
      %s30 = sphi 0, %s29
      %s46 = sphi 0, %s30
      %s50 = sphi 0, %s50
      %s52 = sphi 0, %s50
      %s53 = sphi 0, %s52
      %s67 = sphi 0, %s53
      %s71 = sphi 0, %s71
      %s73 = sphi 0, %s71
      %s74 = sphi 0, %s73
      %s88 = sphi 0, %s74
      %s92 = sphi 0, %s92
      %s94 = sphi 0, %s92
      %s95 = sphi 0, %s94
      %s109 = sphi 0, %s95
      %s113 = sphi 0, %s113
      %s115 = sphi 0, %s113
      %s116 = sphi 0, %s115
      %s130 = sphi 0, %s116
      %s134 = sphi 0, %s134
      %s136 = sphi 0, %s134
      %s137 = sphi 0, %s136
      %s151 = sphi 0, %s137
      %s155 = sphi 0, %s155
      %s157 = sphi 0, %s155
      %s158 = sphi 0, %s157
      %s172 = sphi 0, %s158
      %s178 = sphi 0, %s180
      %s181 = sphi 0, %s178
      %s182 = sphi 0, %s181
      %s198 = sphi 0, %s182
    $region4: #{bottleneck_forward.1} parent=1 // loop_header_branch
      %19 = sbr.rel (%p17) target = $region8
    $region5: #{bottleneck_forward.1} parent=1 // loop_body
      %s21 = ssub.s32 %s16, 1
      %s22 = ssub.s32 %s16, 2
      %s23 = sadd.s32 %s16, 1
      %s24 = ssub.s32 %s16, %s23
      %p25 = scmp.eq.s32.totalorder %s24, 0
      %s27 = sadd.s32 %s26, 1
      %s28 = scalar_select %p25, %s26, %s27
      %p31 = pneg %p25
      %p32 = scmp.eq.s32.totalorder %s16, 1
      %p33 = por %p31, %p32
      %p34 = scmp.ne.s32.totalorder %s26, %s29
      %p35 = scmp.eq.s32.totalorder %s16, 0
      %p36 = por %p34, %p35
      %p37 = scmp.ne.s32.totalorder %s26, %s29
      %p38 = scmp.eq.s32.totalorder %s21, 1
      %p39 = por %p37, %p38
      %p40 = scmp.ne.s32.totalorder %s29, %s30
      %p41 = scmp.eq.s32.totalorder %s21, 0
      %p42 = por %p40, %p41
      %p43 = scmp.ne.s32.totalorder %s29, %s30
      %p44 = scmp.eq.s32.totalorder %s22, 1
      %p45 = por %p43, %p44
      %p47 = scmp.ne.s32.totalorder %s30, %s46
      %p48 = scmp.eq.s32.totalorder %s22, 0
      %p49 = por %p47, %p48
      %s51 = sadd.s32 %s50, 1
      %p54 = scmp.eq.s32.totalorder %s16, 1
      %p55 = scmp.ne.s32.totalorder %s50, %s52
      %p56 = scmp.eq.s32.totalorder %s16, 0
      %p57 = por %p55, %p56
      %p58 = scmp.ne.s32.totalorder %s50, %s52
      %p59 = scmp.eq.s32.totalorder %s21, 1
      %p60 = por %p58, %p59
      %p61 = scmp.ne.s32.totalorder %s52, %s53
      %p62 = scmp.eq.s32.totalorder %s21, 0
      %p63 = por %p61, %p62
      %p64 = scmp.ne.s32.totalorder %s52, %s53
      %p65 = scmp.eq.s32.totalorder %s22, 1
      %p66 = por %p64, %p65
      %p68 = scmp.ne.s32.totalorder %s53, %s67
      %p69 = scmp.eq.s32.totalorder %s22, 0
      %p70 = por %p68, %p69
      %s72 = sadd.s32 %s71, 1
      %p75 = scmp.eq.s32.totalorder %s16, 1
      %p76 = scmp.ne.s32.totalorder %s71, %s73
      %p77 = scmp.eq.s32.totalorder %s16, 0
      %p78 = por %p76, %p77
      %p79 = scmp.ne.s32.totalorder %s71, %s73
      %p80 = scmp.eq.s32.totalorder %s21, 1
      %p81 = por %p79, %p80
      %p82 = scmp.ne.s32.totalorder %s73, %s74
      %p83 = scmp.eq.s32.totalorder %s21, 0
      %p84 = por %p82, %p83
      %p85 = scmp.ne.s32.totalorder %s73, %s74
      %p86 = scmp.eq.s32.totalorder %s22, 1
      %p87 = por %p85, %p86
      %p89 = scmp.ne.s32.totalorder %s74, %s88
      %p90 = scmp.eq.s32.totalorder %s22, 0
      %p91 = por %p89, %p90
      %s93 = sadd.s32 %s92, 1
      %p96 = scmp.eq.s32.totalorder %s16, 1
      %p97 = scmp.ne.s32.totalorder %s92, %s94
      %p98 = scmp.eq.s32.totalorder %s16, 0
      %p99 = por %p97, %p98
      %p100 = scmp.ne.s32.totalorder %s92, %s94
      %p101 = scmp.eq.s32.totalorder %s21, 1
      %p102 = por %p100, %p101
      %p103 = scmp.ne.s32.totalorder %s94, %s95
      %p104 = scmp.eq.s32.totalorder %s21, 0
      %p105 = por %p103, %p104
      %p106 = scmp.ne.s32.totalorder %s94, %s95
      %p107 = scmp.eq.s32.totalorder %s22, 1
      %p108 = por %p106, %p107
      %p110 = scmp.ne.s32.totalorder %s95, %s109
      %p111 = scmp.eq.s32.totalorder %s22, 0
      %p112 = por %p110, %p111
      %s114 = sadd.s32 %s113, 1
      %p117 = scmp.eq.s32.totalorder %s16, 1
      %p118 = scmp.ne.s32.totalorder %s113, %s115
      %p119 = scmp.eq.s32.totalorder %s16, 0
      %p120 = por %p118, %p119
      %p121 = scmp.ne.s32.totalorder %s113, %s115
      %p122 = scmp.eq.s32.totalorder %s21, 1
      %p123 = por %p121, %p122
      %p124 = scmp.ne.s32.totalorder %s115, %s116
      %p125 = scmp.eq.s32.totalorder %s21, 0
      %p126 = por %p124, %p125
      %p127 = scmp.ne.s32.totalorder %s115, %s116
      %p128 = scmp.eq.s32.totalorder %s22, 1
      %p129 = por %p127, %p128
      %p131 = scmp.ne.s32.totalorder %s116, %s130
      %p132 = scmp.eq.s32.totalorder %s22, 0
      %p133 = por %p131, %p132
      %s135 = sadd.s32 %s134, 1
      %p138 = scmp.eq.s32.totalorder %s16, 1
      %p139 = scmp.ne.s32.totalorder %s134, %s136
      %p140 = scmp.eq.s32.totalorder %s16, 0
      %p141 = por %p139, %p140
      %p142 = scmp.ne.s32.totalorder %s134, %s136
      %p143 = scmp.eq.s32.totalorder %s21, 1
      %p144 = por %p142, %p143
      %p145 = scmp.ne.s32.totalorder %s136, %s137
      %p146 = scmp.eq.s32.totalorder %s21, 0
      %p147 = por %p145, %p146
      %p148 = scmp.ne.s32.totalorder %s136, %s137
      %p149 = scmp.eq.s32.totalorder %s22, 1
      %p150 = por %p148, %p149
      %p152 = scmp.ne.s32.totalorder %s137, %s151
      %p153 = scmp.eq.s32.totalorder %s22, 0
      %p154 = por %p152, %p153
      %s156 = sadd.s32 %s155, 1
      %p159 = scmp.eq.s32.totalorder %s16, 1
      %p160 = scmp.ne.s32.totalorder %s155, %s157
      %p161 = scmp.eq.s32.totalorder %s16, 0
      %p162 = por %p160, %p161
      %p163 = scmp.ne.s32.totalorder %s155, %s157
      %p164 = scmp.eq.s32.totalorder %s21, 1
      %p165 = por %p163, %p164
      %p166 = scmp.ne.s32.totalorder %s157, %s158
      %p167 = scmp.eq.s32.totalorder %s21, 0
      %p168 = por %p166, %p167
      %p169 = scmp.ne.s32.totalorder %s157, %s158
      %p170 = scmp.eq.s32.totalorder %s22, 1
      %p171 = por %p169, %p170
      %p173 = scmp.ne.s32.totalorder %s158, %s172
      %p174 = scmp.eq.s32.totalorder %s22, 0
      %p175 = por %p173, %p174
      %s176 = ssub.s32 %s16, %s23
      %p177 = scmp.eq.s32.totalorder %s176, 0
      %s179 = sadd.s32 %s178, 1
      %s180 = scalar_select %p177, %s178, %s179
      %p183 = pneg %p177
      %p184 = scmp.eq.s32.totalorder %s16, 1
      %p185 = por %p183, %p184
      %p186 = scmp.ne.s32.totalorder %s178, %s181
      %p187 = scmp.eq.s32.totalorder %s16, 0
      %p188 = por %p186, %p187
      %p189 = scmp.ne.s32.totalorder %s178, %s181
      %p190 = scmp.eq.s32.totalorder %s21, 1
      %p191 = por %p189, %p190
      %p192 = scmp.ne.s32.totalorder %s181, %s182
      %p193 = scmp.eq.s32.totalorder %s21, 0
      %p194 = por %p192, %p193
      %p195 = scmp.ne.s32.totalorder %s181, %s182
      %p196 = scmp.eq.s32.totalorder %s22, 1
      %p197 = por %p195, %p196
      %p199 = scmp.ne.s32.totalorder %s182, %s198
      %p200 = scmp.eq.s32.totalorder %s22, 0
      %p201 = por %p199, %p200
      %p202 = scmp.le.s32.totalorder 1, %s16
      %p203 = scmp.lt.s32.totalorder %s16, 3
      %p204 = pnand %p202, %p203
      %p205 = pneg %p204
      // Predicated region
      $region9: #{bottleneck_forward.1} parent=5 // pred_check
        _
      $region10: #{bottleneck_forward.1} parent=5 // pred_check_branch
        %207 = sbr.rel (%p204) target = $region12
      $region11: #{bottleneck_forward.1} parent=5 // pred_region
        %s208 = ssub.s32 %s16, 1
        // Predicated region
        $region13: #{bottleneck_forward.1} parent=11 // pred_check
          %p209 = pneg %p63
        $region14: #{bottleneck_forward.1} parent=11 // pred_check_branch
          %211 = sbr.rel (%p209) target = $region16
        $region15: #{bottleneck_forward.1} parent=11 // pred_region
          _
        $region16: #{bottleneck_forward.1} parent=11 // pred_fallthru
          _
        // Predicated region
        $region17: #{bottleneck_forward.1} parent=11 // pred_check
          %p212 = pneg %p84
        $region18: #{bottleneck_forward.1} parent=11 // pred_check_branch
          %214 = sbr.rel (%p212) target = $region20
        $region19: #{bottleneck_forward.1} parent=11 // pred_region
          _
        $region20: #{bottleneck_forward.1} parent=11 // pred_fallthru
          _
        // Predicated region
        $region21: #{bottleneck_forward.1} parent=11 // pred_check
          %p215 = pneg %p105
        $region22: #{bottleneck_forward.1} parent=11 // pred_check_branch
          %217 = sbr.rel (%p215) target = $region24
        $region23: #{bottleneck_forward.1} parent=11 // pred_region
          _
        $region24: #{bottleneck_forward.1} parent=11 // pred_fallthru
          _
        // Predicated region
        $region25: #{bottleneck_forward.1} parent=11 // pred_check
          %p218 = pneg %p126
        $region26: #{bottleneck_forward.1} parent=11 // pred_check_branch
          %220 = sbr.rel (%p218) target = $region28
        $region27: #{bottleneck_forward.1} parent=11 // pred_region
          _
        $region28: #{bottleneck_forward.1} parent=11 // pred_fallthru
          _
        // Predicated region
        $region29: #{bottleneck_forward.1} parent=11 // pred_check
          %p221 = pneg %p147
        $region30: #{bottleneck_forward.1} parent=11 // pred_check_branch
          %223 = sbr.rel (%p221) target = $region32
        $region31: #{bottleneck_forward.1} parent=11 // pred_region
          _
        $region32: #{bottleneck_forward.1} parent=11 // pred_fallthru
          _
        // Predicated region
        $region33: #{bottleneck_forward.1} parent=11 // pred_check
          %p224 = pneg %p168
        $region34: #{bottleneck_forward.1} parent=11 // pred_check_branch
          %226 = sbr.rel (%p224) target = $region36
        $region35: #{bottleneck_forward.1} parent=11 // pred_region
          _
        $region36: #{bottleneck_forward.1} parent=11 // pred_fallthru
          _
      $region12: #{bottleneck_forward.1} parent=5 // pred_fallthru
        _
      %p227 = scmp.lt.s32.totalorder %s16, 2
      // Predicated region
      $region37: #{bottleneck_forward.1} parent=5 // pred_check
        %p228 = pneg %p227
      $region38: #{bottleneck_forward.1} parent=5 // pred_check_branch
        %230 = sbr.rel (%p228) target = $region40
      $region39: #{bottleneck_forward.1} parent=5 // pred_region
        // Predicated region
        $region41: #{bottleneck_forward.1} parent=39 // pred_check
          %p231 = pneg %p36
        $region42: #{bottleneck_forward.1} parent=39 // pred_check_branch
          %233 = sbr.rel (%p231) target = $region44
        $region43: #{bottleneck_forward.1} parent=39 // pred_region
          %p234 = scmp.lt.s32.totalorder %s16, 1
          %s235 = scalar_select %p234, %s16, 1
          %s236 = smul.addr %s235, 32
          %s237 = smul.addr %s236, 8
          %s238 = scalar_lea.vmem %s0, %s237
        $region44: #{bottleneck_forward.1} parent=39 // pred_fallthru
          _
      $region40: #{bottleneck_forward.1} parent=5 // pred_fallthru
        _
      %p239 = scmp.le.s32.totalorder 1, %s16
      %p240 = scmp.lt.s32.totalorder %s16, 3
      %p241 = pnand %p239, %p240
      %p242 = pneg %p241
      // Predicated region
      $region45: #{bottleneck_forward.1} parent=5 // pred_check
        _
      $region46: #{bottleneck_forward.1} parent=5 // pred_check_branch
        %244 = sbr.rel (%p241) target = $region48
      $region47: #{bottleneck_forward.1} parent=5 // pred_region
        %s245 = ssub.s32 %s16, 1
        %p246 = scmp.lt.s32.totalorder %s21, 1
        %s247 = scalar_select %p246, %s21, 1
        %s248 = smul.addr %s247, 32
        %s249 = smul.addr %s248, 8
        %s250 = scalar_lea.vmem %s0, %s249
        %p251 = pneg %p42
        %p252 = pneg %p39
        %p253 = pneg %p63
        %p254 = pneg %p60
        %p255 = pneg %p84
        %p256 = pneg %p81
        %p257 = pneg %p105
        %p258 = pneg %p102
        %p259 = pneg %p126
        %p260 = pneg %p123
        %p261 = pneg %p147
        %p262 = pneg %p144
        %p263 = pneg %p168
        %p264 = pneg %p165
        %p265 = pneg %p194
        %p266 = pneg %p191
        %s267 = sand.u32 %s181, 1
        %s268 = scalar_lea.sflag [#allocation5], %s267
        %s269 = sand.u32 %s181, 1
        %s270 = smul.addr %s269, 256
        %s271 = scalar_lea.vmem [#allocation4], %s270
        %p272 = scmp.lt.s32.totalorder %s21, 1
        %s273 = scalar_select %p272, %s21, 1
        %s274 = smul.addr %s273, 32
        %s275 = smul.addr %s274, 8
        %s276 = scalar_lea.vmem %s0, %s275
        %v278 = vld [vmem:[%s276] sm:$0xff]
        %v279 = vld [vmem:[%s276 + $0x8] sm:$0xff]
        %v280 = vld [vmem:[%s276 + $0x10] sm:$0xff]
        %v281 = vld [vmem:[%s276 + $0x18] sm:$0xff]
        %v282 = vld [vmem:[%s276 + $0x20] sm:$0xff]
        %v283 = vld [vmem:[%s276 + $0x28] sm:$0xff]
        %v284 = vld [vmem:[%s276 + $0x30] sm:$0xff]
        %v285 = vld [vmem:[%s276 + $0x38] sm:$0xff]
        %v286 = vld [vmem:[%s276 + $0x40] sm:$0xff]
        %v287 = vld [vmem:[%s276 + $0x48] sm:$0xff]
        %v288 = vld [vmem:[%s276 + $0x50] sm:$0xff]
        %v289 = vld [vmem:[%s276 + $0x58] sm:$0xff]
        %v290 = vld [vmem:[%s276 + $0x60] sm:$0xff]
        %v291 = vld [vmem:[%s276 + $0x68] sm:$0xff]
        %v292 = vld [vmem:[%s276 + $0x70] sm:$0xff]
        %v293 = vld [vmem:[%s276 + $0x78] sm:$0xff]
        %v294 = vld [vmem:[%s276 + $0x80] sm:$0xff]
        %v295 = vld [vmem:[%s276 + $0x88] sm:$0xff]
        %v296 = vld [vmem:[%s276 + $0x90] sm:$0xff]
        %v297 = vld [vmem:[%s276 + $0x98] sm:$0xff]
        %v298 = vld [vmem:[%s276 + $0xa0] sm:$0xff]
        %v299 = vld [vmem:[%s276 + $0xa8] sm:$0xff]
        %v300 = vld [vmem:[%s276 + $0xb0] sm:$0xff]
        %v301 = vld [vmem:[%s276 + $0xb8] sm:$0xff]
        %v302 = vld [vmem:[%s276 + $0xc0] sm:$0xff]
        %v303 = vld [vmem:[%s276 + $0xc8] sm:$0xff]
        %v304 = vld [vmem:[%s276 + $0xd0] sm:$0xff]
        %v305 = vld [vmem:[%s276 + $0xd8] sm:$0xff]
        %v306 = vld [vmem:[%s276 + $0xe0] sm:$0xff]
        %v307 = vld [vmem:[%s276 + $0xe8] sm:$0xff]
        %v308 = vld [vmem:[%s276 + $0xf0] sm:$0xff]
        %v309 = vld [vmem:[%s276 + $0xf8] sm:$0xff]
        %v310 = vpack.c.bf16 %v279, %v278
        %v311 = vpack.c.bf16 %v281, %v280
        %v312 = vpack.c.bf16 %v283, %v282
        %v313 = vpack.c.bf16 %v285, %v284
        %v314 = vpack.c.bf16 %v287, %v286
        %v315 = vpack.c.bf16 %v289, %v288
        %v316 = vpack.c.bf16 %v291, %v290
        %v317 = vpack.c.bf16 %v293, %v292
        %v318 = vpack.c.bf16 %v295, %v294
        %v319 = vpack.c.bf16 %v297, %v296
        %v320 = vpack.c.bf16 %v299, %v298
        %v321 = vpack.c.bf16 %v301, %v300
        %v322 = vpack.c.bf16 %v303, %v302
        %v323 = vpack.c.bf16 %v305, %v304
        %v324 = vpack.c.bf16 %v307, %v306
        %v325 = vpack.c.bf16 %v309, %v308
        %v326 = vld [vmem:[%s1] sm:$0xf]
        %v327 = vld [vmem:[%s1 + $0x4] sm:$0xf]
        %v328 = vld [vmem:[%s1 + $0x8] sm:$0xf]
        %v329 = vld [vmem:[%s1 + $0xc] sm:$0xf]
        %v330 = vld [vmem:[%s1 + $0x10] sm:$0xf]
        %v331 = vld [vmem:[%s1 + $0x14] sm:$0xf]
        %v332 = vld [vmem:[%s1 + $0x18] sm:$0xf]
        %v333 = vld [vmem:[%s1 + $0x1c] sm:$0xf]
        %v334 = vld [vmem:[%s1 + $0x20] sm:$0xf]
        %v335 = vld [vmem:[%s1 + $0x24] sm:$0xf]
        %v336 = vld [vmem:[%s1 + $0x28] sm:$0xf]
        %v337 = vld [vmem:[%s1 + $0x2c] sm:$0xf]
        %v338 = vld [vmem:[%s1 + $0x30] sm:$0xf]
        %v339 = vld [vmem:[%s1 + $0x34] sm:$0xf]
        %v340 = vld [vmem:[%s1 + $0x38] sm:$0xf]
        %v341 = vld [vmem:[%s1 + $0x3c] sm:$0xf]
        %v342 = vld [vmem:[%s2] sm:$0x1]
        %v344 = vlaneseq
        %v345 = vshrl.u32 %v344, 7
        %v346 = vsub.s32 0, %v345
        %v347 = vrot.slane %v342, %v346
        %v365 = vunpack.c.l.b16 %v326
        %v366 = vunpack.c.l.b16 %v327
        %v367 = vunpack.c.l.b16 %v328
        %v368 = vunpack.c.l.b16 %v329
        %v369 = vunpack.c.l.b16 %v330
        %v370 = vunpack.c.l.b16 %v331
        %v371 = vunpack.c.l.b16 %v332
        %v372 = vunpack.c.l.b16 %v333
        %v373 = vunpack.c.l.b16 %v334
        %v374 = vunpack.c.l.b16 %v335
        %v375 = vunpack.c.l.b16 %v336
        %v376 = vunpack.c.l.b16 %v337
        %v377 = vunpack.c.l.b16 %v338
        %v378 = vunpack.c.l.b16 %v339
        %v379 = vunpack.c.l.b16 %v340
        %v380 = vunpack.c.l.b16 %v341
        %v381 = vpack.c.b16 %v366, %v365
        %v382 = vpack.c.b16 %v368, %v367
        %v383 = vpack.c.b16 %v370, %v369
        %v384 = vpack.c.b16 %v372, %v371
        %v385 = vpack.c.b16 %v374, %v373
        %v386 = vpack.c.b16 %v376, %v375
        %v387 = vpack.c.b16 %v378, %v377
        %v388 = vpack.c.b16 %v380, %v379
        %397 = vmatprep.subr.bf16.mxu0 0
        %398 = vmatpush1.bf16.msra.mxu0 %v388
        %399 = vmatprep.subr.bf16.mxu0 0
        %400 = vmatpush1.bf16.msra.mxu0 %v387
        %401 = vmatprep.subr.bf16.mxu0 0
        %402 = vmatpush1.bf16.msra.mxu0 %v386
        %403 = vmatprep.subr.bf16.mxu0 0
        %404 = vmatpush1.bf16.msra.mxu0 %v385
        %405 = vmatprep.subr.bf16.mxu0 0
        %406 = vmatpush1.bf16.msra.mxu0 %v384
        %407 = vmatprep.subr.bf16.mxu0 0
        %408 = vmatpush1.bf16.msra.mxu0 %v383
        %409 = vmatprep.subr.bf16.mxu0 0
        %410 = vmatpush1.bf16.msra.mxu0 %v382
        %411 = vmatprep.subr.bf16.mxu0 0
        %412 = vmatpush1.bf16.msra.mxu0 %v381
        %413 = vmatprep.subr.bf16.mxu0 0
        %414 = vmatpush2.bf16.msra.mxu0 0
        %415 = vmatprep.subr.bf16.mxu0 0
        %416 = vmatpush2.bf16.msra.mxu0 0
        %417 = vmatprep.subr.bf16.mxu0 0
        %418 = vmatpush2.bf16.msra.mxu0 0
        %419 = vmatprep.subr.bf16.mxu0 0
        %420 = vmatpush2.bf16.msra.mxu0 0
        %421 = vmatprep.subr.bf16.mxu0 0
        %422 = vmatpush2.bf16.msra.mxu0 0
        %423 = vmatprep.subr.bf16.mxu0 0
        %424 = vmatpush2.bf16.msra.mxu0 0
        %425 = vmatprep.subr.bf16.mxu0 0
        %426 = vmatpush2.bf16.msra.mxu0 0
        %427 = vmatprep.subr.bf16.mxu0 0
        %428 = vmatpush2.bf16.msra.mxu0 0
        %429 = vmatprep.mubr.bf16.mxu0 0
        %430 = vmatmul.mubr.bf16.gmra.mxu0 %v310
        %v431 = vpop.f32.mrf.mxu0
        %v432 = vadd.f32 %v347, %v431
        %v433 = vpop.f32.mrf.mxu0
        %v434 = vpop.f32.mrf.mxu0
        %v435 = vadd.f32 %v347, %v434
        %v436 = vpop.f32.mrf.mxu0
        %437 = vmatprep.mubr.bf16.mxu0 0
        %438 = vmatmul.mubr.bf16.gmra.mxu0 %v311
        %v439 = vpop.f32.mrf.mxu0
        %v440 = vadd.f32 %v347, %v439
        %v441 = vpop.f32.mrf.mxu0
        %v442 = vpop.f32.mrf.mxu0
        %v443 = vadd.f32 %v347, %v442
        %v444 = vpop.f32.mrf.mxu0
        %445 = vmatprep.mubr.bf16.mxu0 0
        %446 = vmatmul.mubr.bf16.gmra.mxu0 %v312
        %v447 = vpop.f32.mrf.mxu0
        %v448 = vadd.f32 %v347, %v447
        %v449 = vpop.f32.mrf.mxu0
        %v450 = vpop.f32.mrf.mxu0
        %v451 = vadd.f32 %v347, %v450
        %v452 = vpop.f32.mrf.mxu0
        %453 = vmatprep.mubr.bf16.mxu0 0
        %454 = vmatmul.mubr.bf16.gmra.mxu0 %v313
        %v455 = vpop.f32.mrf.mxu0
        %v456 = vadd.f32 %v347, %v455
        %v457 = vpop.f32.mrf.mxu0
        %v458 = vpop.f32.mrf.mxu0
        %v459 = vadd.f32 %v347, %v458
        %v460 = vpop.f32.mrf.mxu0
        %461 = vmatprep.mubr.bf16.mxu0 0
        %462 = vmatmul.mubr.bf16.gmra.mxu0 %v314
        %v463 = vpop.f32.mrf.mxu0
        %v464 = vadd.f32 %v347, %v463
        %v465 = vpop.f32.mrf.mxu0
        %v466 = vpop.f32.mrf.mxu0
        %v467 = vadd.f32 %v347, %v466
        %v468 = vpop.f32.mrf.mxu0
        %469 = vmatprep.mubr.bf16.mxu0 0
        %470 = vmatmul.mubr.bf16.gmra.mxu0 %v315
        %v471 = vpop.f32.mrf.mxu0
        %v472 = vadd.f32 %v347, %v471
        %v473 = vpop.f32.mrf.mxu0
        %v474 = vpop.f32.mrf.mxu0
        %v475 = vadd.f32 %v347, %v474
        %v476 = vpop.f32.mrf.mxu0
        %477 = vmatprep.mubr.bf16.mxu0 0
        %478 = vmatmul.mubr.bf16.gmra.mxu0 %v316
        %v479 = vpop.f32.mrf.mxu0
        %v480 = vadd.f32 %v347, %v479
        %v481 = vpop.f32.mrf.mxu0
        %v482 = vpop.f32.mrf.mxu0
        %v483 = vadd.f32 %v347, %v482
        %v484 = vpop.f32.mrf.mxu0
        %485 = vmatprep.mubr.bf16.mxu0 0
        %486 = vmatmul.mubr.bf16.gmra.mxu0 %v317
        %v487 = vpop.f32.mrf.mxu0
        %v488 = vadd.f32 %v347, %v487
        %v489 = vpop.f32.mrf.mxu0
        %v490 = vpop.f32.mrf.mxu0
        %v491 = vadd.f32 %v347, %v490
        %v492 = vpop.f32.mrf.mxu0
        %493 = vmatprep.mubr.bf16.mxu0 0
        %494 = vmatmul.mubr.bf16.gmra.mxu0 %v318
        %v495 = vpop.f32.mrf.mxu0
        %v496 = vadd.f32 %v347, %v495
        %v497 = vpop.f32.mrf.mxu0
        %v498 = vpop.f32.mrf.mxu0
        %v499 = vadd.f32 %v347, %v498
        %v500 = vpop.f32.mrf.mxu0
        %501 = vmatprep.mubr.bf16.mxu0 0
        %502 = vmatmul.mubr.bf16.gmra.mxu0 %v319
        %v503 = vpop.f32.mrf.mxu0
        %v504 = vadd.f32 %v347, %v503
        %v505 = vpop.f32.mrf.mxu0
        %v506 = vpop.f32.mrf.mxu0
        %v507 = vadd.f32 %v347, %v506
        %v508 = vpop.f32.mrf.mxu0
        %509 = vmatprep.mubr.bf16.mxu0 0
        %510 = vmatmul.mubr.bf16.gmra.mxu0 %v320
        %v511 = vpop.f32.mrf.mxu0
        %v512 = vadd.f32 %v347, %v511
        %v513 = vpop.f32.mrf.mxu0
        %v514 = vpop.f32.mrf.mxu0
        %v515 = vadd.f32 %v347, %v514
        %v516 = vpop.f32.mrf.mxu0
        %517 = vmatprep.mubr.bf16.mxu0 0
        %518 = vmatmul.mubr.bf16.gmra.mxu0 %v321
        %v519 = vpop.f32.mrf.mxu0
        %v520 = vadd.f32 %v347, %v519
        %v521 = vpop.f32.mrf.mxu0
        %v522 = vpop.f32.mrf.mxu0
        %v523 = vadd.f32 %v347, %v522
        %v524 = vpop.f32.mrf.mxu0
        %525 = vmatprep.mubr.bf16.mxu0 0
        %526 = vmatmul.mubr.bf16.gmra.mxu0 %v322
        %v527 = vpop.f32.mrf.mxu0
        %v528 = vadd.f32 %v347, %v527
        %v529 = vpop.f32.mrf.mxu0
        %v530 = vpop.f32.mrf.mxu0
        %v531 = vadd.f32 %v347, %v530
        %v532 = vpop.f32.mrf.mxu0
        %533 = vmatprep.mubr.bf16.mxu0 0
        %534 = vmatmul.mubr.bf16.gmra.mxu0 %v323
        %v535 = vpop.f32.mrf.mxu0
        %v536 = vadd.f32 %v347, %v535
        %v537 = vpop.f32.mrf.mxu0
        %v538 = vpop.f32.mrf.mxu0
        %v539 = vadd.f32 %v347, %v538
        %v540 = vpop.f32.mrf.mxu0
        %541 = vmatprep.mubr.bf16.mxu0 0
        %542 = vmatmul.mubr.bf16.gmra.mxu0 %v324
        %v543 = vpop.f32.mrf.mxu0
        %v544 = vadd.f32 %v347, %v543
        %v545 = vpop.f32.mrf.mxu0
        %v546 = vpop.f32.mrf.mxu0
        %v547 = vadd.f32 %v347, %v546
        %v548 = vpop.f32.mrf.mxu0
        %549 = vmatprep.mubr.bf16.mxu0 0
        %550 = vmatmul.mubr.bf16.gmra.mxu0 %v325
        %v551 = vpop.f32.mrf.mxu0
        %v552 = vadd.f32 %v347, %v551
        %v553 = vpop.f32.mrf.mxu0
        %v554 = vpop.f32.mrf.mxu0
        %v555 = vadd.f32 %v347, %v554
        %v556 = vpop.f32.mrf.mxu0
        %557 = vdwg.mxu0
        %v558 = vmax.f32 %v432, 0.0
        %v559 = vmax.f32 %v435, 0.0
        %v560 = vmax.f32 %v440, 0.0
        %v561 = vmax.f32 %v443, 0.0
        %v562 = vmax.f32 %v448, 0.0
        %v563 = vmax.f32 %v451, 0.0
        %v564 = vmax.f32 %v456, 0.0
        %v565 = vmax.f32 %v459, 0.0
        %v566 = vmax.f32 %v464, 0.0
        %v567 = vmax.f32 %v467, 0.0
        %v568 = vmax.f32 %v472, 0.0
        %v569 = vmax.f32 %v475, 0.0
        %v570 = vmax.f32 %v480, 0.0
        %v571 = vmax.f32 %v483, 0.0
        %v572 = vmax.f32 %v488, 0.0
        %v573 = vmax.f32 %v491, 0.0
        %v574 = vmax.f32 %v496, 0.0
        %v575 = vmax.f32 %v499, 0.0
        %v576 = vmax.f32 %v504, 0.0
        %v577 = vmax.f32 %v507, 0.0
        %v578 = vmax.f32 %v512, 0.0
        %v579 = vmax.f32 %v515, 0.0
        %v580 = vmax.f32 %v520, 0.0
        %v581 = vmax.f32 %v523, 0.0
        %v582 = vmax.f32 %v528, 0.0
        %v583 = vmax.f32 %v531, 0.0
        %v584 = vmax.f32 %v536, 0.0
        %v585 = vmax.f32 %v539, 0.0
        %v586 = vmax.f32 %v544, 0.0
        %v587 = vmax.f32 %v547, 0.0
        %v588 = vmax.f32 %v552, 0.0
        %v589 = vmax.f32 %v555, 0.0
        %590 = vst [vmem:[#allocation2 + $0x8] sm:$0xff] %v558
        %591 = vst [vmem:[#allocation2 + $0x10] sm:$0xff] %v559
        %592 = vst [vmem:[#allocation2 + $0x18] sm:$0xff] %v560
        %593 = vst [vmem:[#allocation2 + $0x20] sm:$0xff] %v561
        %594 = vst [vmem:[#allocation2 + $0x28] sm:$0xff] %v562
        %595 = vst [vmem:[#allocation2 + $0x30] sm:$0xff] %v563
        %596 = vst [vmem:[#allocation2 + $0x38] sm:$0xff] %v564
        %597 = vst [vmem:[#allocation2 + $0x40] sm:$0xff] %v565
        %598 = vst [vmem:[#allocation2 + $0x48] sm:$0xff] %v566
        %599 = vst [vmem:[#allocation2 + $0x50] sm:$0xff] %v567
        %600 = vst [vmem:[#allocation2 + $0x58] sm:$0xff] %v568
        %601 = vst [vmem:[#allocation2 + $0x60] sm:$0xff] %v569
        %602 = vst [vmem:[#allocation2 + $0x68] sm:$0xff] %v570
        %603 = vst [vmem:[#allocation2 + $0x70] sm:$0xff] %v571
        %604 = vst [vmem:[#allocation2 + $0x78] sm:$0xff] %v572
        %605 = vst [vmem:[#allocation2 + $0x80] sm:$0xff] %v573
        %606 = vst [vmem:[#allocation2 + $0x88] sm:$0xff] %v574
        %607 = vst [vmem:[#allocation2 + $0x90] sm:$0xff] %v575
        %608 = vst [vmem:[#allocation2 + $0x98] sm:$0xff] %v576
        %609 = vst [vmem:[#allocation2 + $0xa0] sm:$0xff] %v577
        %610 = vst [vmem:[#allocation2 + $0xa8] sm:$0xff] %v578
        %611 = vst [vmem:[#allocation2 + $0xb0] sm:$0xff] %v579
        %612 = vst [vmem:[#allocation2 + $0xb8] sm:$0xff] %v580
        %613 = vst [vmem:[#allocation2 + $0xc0] sm:$0xff] %v581
        %614 = vst [vmem:[#allocation2 + $0xc8] sm:$0xff] %v582
        %615 = vst [vmem:[#allocation2 + $0xd0] sm:$0xff] %v583
        %616 = vst [vmem:[#allocation2 + $0xd8] sm:$0xff] %v584
        %617 = vst [vmem:[#allocation2 + $0xe0] sm:$0xff] %v585
        %618 = vst [vmem:[#allocation2 + $0xe8] sm:$0xff] %v586
        %619 = vst [vmem:[#allocation2 + $0xf0] sm:$0xff] %v587
        %620 = vst [vmem:[#allocation2 + $0xf8] sm:$0xff] %v588
        %621 = vst [vmem:[#allocation2 + $0x100] sm:$0xff] %v589
        %v622 = vlaneseq
        %v623 = vshrl.u32 %v622, 7
        %v624 = vadd.s32 %v623, 8
        %v625 = vadd.s32 %v623, 16
        %v626 = vadd.s32 %v623, 24
        %v627 = vadd.s32 %v623, 32
        %v628 = vadd.s32 %v623, 40
        %v629 = vadd.s32 %v623, 48
        %v630 = vadd.s32 %v623, 56
        %v631 = vadd.s32 %v623, 64
        %v632 = vadd.s32 %v623, 72
        %v633 = vadd.s32 %v623, 80
        %v634 = vadd.s32 %v623, 88
        %v635 = vadd.s32 %v623, 96
        %v636 = vadd.s32 %v623, 104
        %v637 = vadd.s32 %v623, 112
        %v638 = vadd.s32 %v623, 120
        %v639 = vadd.s32 %v623, 128
        %v640 = vadd.s32 %v623, 136
        %v641 = vadd.s32 %v623, 144
        %v642 = vadd.s32 %v623, 152
        %v643 = vadd.s32 %v623, 160
        %v644 = vadd.s32 %v623, 168
        %v645 = vadd.s32 %v623, 176
        %v646 = vadd.s32 %v623, 184
        %v647 = vadd.s32 %v623, 192
        %v648 = vadd.s32 %v623, 200
        %v649 = vadd.s32 %v623, 208
        %v650 = vadd.s32 %v623, 216
        %v651 = vadd.s32 %v623, 224
        %v652 = vadd.s32 %v623, 232
        %v653 = vadd.s32 %v623, 240
        %v654 = vadd.s32 %v623, 248
        %vm655 = vcmp.lt.s32.totalorder %v623, 0
        %v656 = vsub.s32 0, %v623
        %v657 = vsel %vm655, %v656, %v623
        %v658 = vshrl.u32 %v657, 4
        %v659 = vand.u32 %v657, 15
        %v660 = vsub.s32 0, %v659
        %v661 = vsel %vm655, %v660, %v659
        %vm662 = vcmp.lt.s32.totalorder %v624, 0
        %v663 = vsub.s32 0, %v624
        %v664 = vsel %vm662, %v663, %v624
        %v665 = vshrl.u32 %v664, 4
        %v666 = vand.u32 %v664, 15
        %v667 = vsub.s32 0, %v666
        %v668 = vsel %vm662, %v667, %v666
        %vm669 = vcmp.lt.s32.totalorder %v625, 0
        %v670 = vsub.s32 0, %v625
        %v671 = vsel %vm669, %v670, %v625
        %v672 = vshrl.u32 %v671, 4
        %v673 = vand.u32 %v671, 15
        %v674 = vsub.s32 0, %v673
        %v675 = vsel %vm669, %v674, %v673
        %vm676 = vcmp.lt.s32.totalorder %v626, 0
        %v677 = vsub.s32 0, %v626
        %v678 = vsel %vm676, %v677, %v626
        %v679 = vshrl.u32 %v678, 4
        %v680 = vand.u32 %v678, 15
        %v681 = vsub.s32 0, %v680
        %v682 = vsel %vm676, %v681, %v680
        %vm683 = vcmp.lt.s32.totalorder %v627, 0
        %v684 = vsub.s32 0, %v627
        %v685 = vsel %vm683, %v684, %v627
        %v686 = vshrl.u32 %v685, 4
        %v687 = vand.u32 %v685, 15
        %v688 = vsub.s32 0, %v687
        %v689 = vsel %vm683, %v688, %v687
        %vm690 = vcmp.lt.s32.totalorder %v628, 0
        %v691 = vsub.s32 0, %v628
        %v692 = vsel %vm690, %v691, %v628
        %v693 = vshrl.u32 %v692, 4
        %v694 = vand.u32 %v692, 15
        %v695 = vsub.s32 0, %v694
        %v696 = vsel %vm690, %v695, %v694
        %vm697 = vcmp.lt.s32.totalorder %v629, 0
        %v698 = vsub.s32 0, %v629
        %v699 = vsel %vm697, %v698, %v629
        %v700 = vshrl.u32 %v699, 4
        %v701 = vand.u32 %v699, 15
        %v702 = vsub.s32 0, %v701
        %v703 = vsel %vm697, %v702, %v701
        %vm704 = vcmp.lt.s32.totalorder %v630, 0
        %v705 = vsub.s32 0, %v630
        %v706 = vsel %vm704, %v705, %v630
        %v707 = vshrl.u32 %v706, 4
        %v708 = vand.u32 %v706, 15
        %v709 = vsub.s32 0, %v708
        %v710 = vsel %vm704, %v709, %v708
        %vm711 = vcmp.lt.s32.totalorder %v631, 0
        %v712 = vsub.s32 0, %v631
        %v713 = vsel %vm711, %v712, %v631
        %v714 = vshrl.u32 %v713, 4
        %v715 = vand.u32 %v713, 15
        %v716 = vsub.s32 0, %v715
        %v717 = vsel %vm711, %v716, %v715
        %vm718 = vcmp.lt.s32.totalorder %v632, 0
        %v719 = vsub.s32 0, %v632
        %v720 = vsel %vm718, %v719, %v632
        %v721 = vshrl.u32 %v720, 4
        %v722 = vand.u32 %v720, 15
        %v723 = vsub.s32 0, %v722
        %v724 = vsel %vm718, %v723, %v722
        %vm725 = vcmp.lt.s32.totalorder %v633, 0
        %v726 = vsub.s32 0, %v633
        %v727 = vsel %vm725, %v726, %v633
        %v728 = vshrl.u32 %v727, 4
        %v729 = vand.u32 %v727, 15
        %v730 = vsub.s32 0, %v729
        %v731 = vsel %vm725, %v730, %v729
        %vm732 = vcmp.lt.s32.totalorder %v634, 0
        %v733 = vsub.s32 0, %v634
        %v734 = vsel %vm732, %v733, %v634
        %v735 = vshrl.u32 %v734, 4
        %v736 = vand.u32 %v734, 15
        %v737 = vsub.s32 0, %v736
        %v738 = vsel %vm732, %v737, %v736
        %vm739 = vcmp.lt.s32.totalorder %v635, 0
        %v740 = vsub.s32 0, %v635
        %v741 = vsel %vm739, %v740, %v635
        %v742 = vshrl.u32 %v741, 4
        %v743 = vand.u32 %v741, 15
        %v744 = vsub.s32 0, %v743
        %v745 = vsel %vm739, %v744, %v743
        %vm746 = vcmp.lt.s32.totalorder %v636, 0
        %v747 = vsub.s32 0, %v636
        %v748 = vsel %vm746, %v747, %v636
        %v749 = vshrl.u32 %v748, 4
        %v750 = vand.u32 %v748, 15
        %v751 = vsub.s32 0, %v750
        %v752 = vsel %vm746, %v751, %v750
        %vm753 = vcmp.lt.s32.totalorder %v637, 0
        %v754 = vsub.s32 0, %v637
        %v755 = vsel %vm753, %v754, %v637
        %v756 = vshrl.u32 %v755, 4
        %v757 = vand.u32 %v755, 15
        %v758 = vsub.s32 0, %v757
        %v759 = vsel %vm753, %v758, %v757
        %vm760 = vcmp.lt.s32.totalorder %v638, 0
        %v761 = vsub.s32 0, %v638
        %v762 = vsel %vm760, %v761, %v638
        %v763 = vshrl.u32 %v762, 4
        %v764 = vand.u32 %v762, 15
        %v765 = vsub.s32 0, %v764
        %v766 = vsel %vm760, %v765, %v764
        %vm767 = vcmp.lt.s32.totalorder %v639, 0
        %v768 = vsub.s32 0, %v639
        %v769 = vsel %vm767, %v768, %v639
        %v770 = vshrl.u32 %v769, 4
        %v771 = vand.u32 %v769, 15
        %v772 = vsub.s32 0, %v771
        %v773 = vsel %vm767, %v772, %v771
        %vm774 = vcmp.lt.s32.totalorder %v640, 0
        %v775 = vsub.s32 0, %v640
        %v776 = vsel %vm774, %v775, %v640
        %v777 = vshrl.u32 %v776, 4
        %v778 = vand.u32 %v776, 15
        %v779 = vsub.s32 0, %v778
        %v780 = vsel %vm774, %v779, %v778
        %vm781 = vcmp.lt.s32.totalorder %v641, 0
        %v782 = vsub.s32 0, %v641
        %v783 = vsel %vm781, %v782, %v641
        %v784 = vshrl.u32 %v783, 4
        %v785 = vand.u32 %v783, 15
        %v786 = vsub.s32 0, %v785
        %v787 = vsel %vm781, %v786, %v785
        %vm788 = vcmp.lt.s32.totalorder %v642, 0
        %v789 = vsub.s32 0, %v642
        %v790 = vsel %vm788, %v789, %v642
        %v791 = vshrl.u32 %v790, 4
        %v792 = vand.u32 %v790, 15
        %v793 = vsub.s32 0, %v792
        %v794 = vsel %vm788, %v793, %v792
        %vm795 = vcmp.lt.s32.totalorder %v643, 0
        %v796 = vsub.s32 0, %v643
        %v797 = vsel %vm795, %v796, %v643
        %v798 = vshrl.u32 %v797, 4
        %v799 = vand.u32 %v797, 15
        %v800 = vsub.s32 0, %v799
        %v801 = vsel %vm795, %v800, %v799
        %vm802 = vcmp.lt.s32.totalorder %v644, 0
        %v803 = vsub.s32 0, %v644
        %v804 = vsel %vm802, %v803, %v644
        %v805 = vshrl.u32 %v804, 4
        %v806 = vand.u32 %v804, 15
        %v807 = vsub.s32 0, %v806
        %v808 = vsel %vm802, %v807, %v806
        %vm809 = vcmp.lt.s32.totalorder %v645, 0
        %v810 = vsub.s32 0, %v645
        %v811 = vsel %vm809, %v810, %v645
        %v812 = vshrl.u32 %v811, 4
        %v813 = vand.u32 %v811, 15
        %v814 = vsub.s32 0, %v813
        %v815 = vsel %vm809, %v814, %v813
        %vm816 = vcmp.lt.s32.totalorder %v646, 0
        %v817 = vsub.s32 0, %v646
        %v818 = vsel %vm816, %v817, %v646
        %v819 = vshrl.u32 %v818, 4
        %v820 = vand.u32 %v818, 15
        %v821 = vsub.s32 0, %v820
        %v822 = vsel %vm816, %v821, %v820
        %vm823 = vcmp.lt.s32.totalorder %v647, 0
        %v824 = vsub.s32 0, %v647
        %v825 = vsel %vm823, %v824, %v647
        %v826 = vshrl.u32 %v825, 4
        %v827 = vand.u32 %v825, 15
        %v828 = vsub.s32 0, %v827
        %v829 = vsel %vm823, %v828, %v827
        %vm830 = vcmp.lt.s32.totalorder %v648, 0
        %v831 = vsub.s32 0, %v648
        %v832 = vsel %vm830, %v831, %v648
        %v833 = vshrl.u32 %v832, 4
        %v834 = vand.u32 %v832, 15
        %v835 = vsub.s32 0, %v834
        %v836 = vsel %vm830, %v835, %v834
        %vm837 = vcmp.lt.s32.totalorder %v649, 0
        %v838 = vsub.s32 0, %v649
        %v839 = vsel %vm837, %v838, %v649
        %v840 = vshrl.u32 %v839, 4
        %v841 = vand.u32 %v839, 15
        %v842 = vsub.s32 0, %v841
        %v843 = vsel %vm837, %v842, %v841
        %vm844 = vcmp.lt.s32.totalorder %v650, 0
        %v845 = vsub.s32 0, %v650
        %v846 = vsel %vm844, %v845, %v650
        %v847 = vshrl.u32 %v846, 4
        %v848 = vand.u32 %v846, 15
        %v849 = vsub.s32 0, %v848
        %v850 = vsel %vm844, %v849, %v848
        %vm851 = vcmp.lt.s32.totalorder %v651, 0
        %v852 = vsub.s32 0, %v651
        %v853 = vsel %vm851, %v852, %v651
        %v854 = vshrl.u32 %v853, 4
        %v855 = vand.u32 %v853, 15
        %v856 = vsub.s32 0, %v855
        %v857 = vsel %vm851, %v856, %v855
        %vm858 = vcmp.lt.s32.totalorder %v652, 0
        %v859 = vsub.s32 0, %v652
        %v860 = vsel %vm858, %v859, %v652
        %v861 = vshrl.u32 %v860, 4
        %v862 = vand.u32 %v860, 15
        %v863 = vsub.s32 0, %v862
        %v864 = vsel %vm858, %v863, %v862
        %vm865 = vcmp.lt.s32.totalorder %v653, 0
        %v866 = vsub.s32 0, %v653
        %v867 = vsel %vm865, %v866, %v653
        %v868 = vshrl.u32 %v867, 4
        %v869 = vand.u32 %v867, 15
        %v870 = vsub.s32 0, %v869
        %v871 = vsel %vm865, %v870, %v869
        %vm872 = vcmp.lt.s32.totalorder %v654, 0
        %v873 = vsub.s32 0, %v654
        %v874 = vsel %vm872, %v873, %v654
        %v875 = vshrl.u32 %v874, 4
        %v876 = vand.u32 %v874, 15
        %v877 = vsub.s32 0, %v876
        %v878 = vsel %vm872, %v877, %v876
        %vm879 = vcmp.ne.s32.totalorder %v661, 0
        %vm880 = vcmp.ne.s32.totalorder %v668, 0
        %vm881 = vcmp.ne.s32.totalorder %v675, 0
        %vm882 = vcmp.ne.s32.totalorder %v682, 0
        %vm883 = vcmp.ne.s32.totalorder %v689, 0
        %vm884 = vcmp.ne.s32.totalorder %v696, 0
        %vm885 = vcmp.ne.s32.totalorder %v703, 0
        %vm886 = vcmp.ne.s32.totalorder %v710, 0
        %vm887 = vcmp.ne.s32.totalorder %v717, 0
        %vm888 = vcmp.ne.s32.totalorder %v724, 0
        %vm889 = vcmp.ne.s32.totalorder %v731, 0
        %vm890 = vcmp.ne.s32.totalorder %v738, 0
        %vm891 = vcmp.ne.s32.totalorder %v745, 0
        %vm892 = vcmp.ne.s32.totalorder %v752, 0
        %vm893 = vcmp.ne.s32.totalorder %v759, 0
        %vm894 = vcmp.ne.s32.totalorder %v766, 0
        %vm895 = vcmp.ne.s32.totalorder %v773, 0
        %vm896 = vcmp.ne.s32.totalorder %v780, 0
        %vm897 = vcmp.ne.s32.totalorder %v787, 0
        %vm898 = vcmp.ne.s32.totalorder %v794, 0
        %vm899 = vcmp.ne.s32.totalorder %v801, 0
        %vm900 = vcmp.ne.s32.totalorder %v808, 0
        %vm901 = vcmp.ne.s32.totalorder %v815, 0
        %vm902 = vcmp.ne.s32.totalorder %v822, 0
        %vm903 = vcmp.ne.s32.totalorder %v829, 0
        %vm904 = vcmp.ne.s32.totalorder %v836, 0
        %vm905 = vcmp.ne.s32.totalorder %v843, 0
        %vm906 = vcmp.ne.s32.totalorder %v850, 0
        %vm907 = vcmp.ne.s32.totalorder %v857, 0
        %vm908 = vcmp.ne.s32.totalorder %v864, 0
        %vm909 = vcmp.ne.s32.totalorder %v871, 0
        %vm910 = vcmp.ne.s32.totalorder %v878, 0
        %vm911 = vcmp.lt.s32.totalorder %v661, 0
        %vm912 = vcmp.lt.s32.totalorder %v668, 0
        %vm913 = vcmp.lt.s32.totalorder %v675, 0
        %vm914 = vcmp.lt.s32.totalorder %v682, 0
        %vm915 = vcmp.lt.s32.totalorder %v689, 0
        %vm916 = vcmp.lt.s32.totalorder %v696, 0
        %vm917 = vcmp.lt.s32.totalorder %v703, 0
        %vm918 = vcmp.lt.s32.totalorder %v710, 0
        %vm919 = vcmp.lt.s32.totalorder %v717, 0
        %vm920 = vcmp.lt.s32.totalorder %v724, 0
        %vm921 = vcmp.lt.s32.totalorder %v731, 0
        %vm922 = vcmp.lt.s32.totalorder %v738, 0
        %vm923 = vcmp.lt.s32.totalorder %v745, 0
        %vm924 = vcmp.lt.s32.totalorder %v752, 0
        %vm925 = vcmp.lt.s32.totalorder %v759, 0
        %vm926 = vcmp.lt.s32.totalorder %v766, 0
        %vm927 = vcmp.lt.s32.totalorder %v773, 0
        %vm928 = vcmp.lt.s32.totalorder %v780, 0
        %vm929 = vcmp.lt.s32.totalorder %v787, 0
        %vm930 = vcmp.lt.s32.totalorder %v794, 0
        %vm931 = vcmp.lt.s32.totalorder %v801, 0
        %vm932 = vcmp.lt.s32.totalorder %v808, 0
        %vm933 = vcmp.lt.s32.totalorder %v815, 0
        %vm934 = vcmp.lt.s32.totalorder %v822, 0
        %vm935 = vcmp.lt.s32.totalorder %v829, 0
        %vm936 = vcmp.lt.s32.totalorder %v836, 0
        %vm937 = vcmp.lt.s32.totalorder %v843, 0
        %vm938 = vcmp.lt.s32.totalorder %v850, 0
        %vm939 = vcmp.lt.s32.totalorder %v857, 0
        %vm940 = vcmp.lt.s32.totalorder %v864, 0
        %vm941 = vcmp.lt.s32.totalorder %v871, 0
        %vm942 = vcmp.lt.s32.totalorder %v878, 0
        %vm943 = vmand %vm911, %vm879
        %vm944 = vmand %vm912, %vm880
        %vm945 = vmand %vm913, %vm881
        %vm946 = vmand %vm914, %vm882
        %vm947 = vmand %vm915, %vm883
        %vm948 = vmand %vm916, %vm884
        %vm949 = vmand %vm917, %vm885
        %vm950 = vmand %vm918, %vm886
        %vm951 = vmand %vm919, %vm887
        %vm952 = vmand %vm920, %vm888
        %vm953 = vmand %vm921, %vm889
        %vm954 = vmand %vm922, %vm890
        %vm955 = vmand %vm923, %vm891
        %vm956 = vmand %vm924, %vm892
        %vm957 = vmand %vm925, %vm893
        %vm958 = vmand %vm926, %vm894
        %vm959 = vmand %vm927, %vm895
        %vm960 = vmand %vm928, %vm896
        %vm961 = vmand %vm929, %vm897
        %vm962 = vmand %vm930, %vm898
        %vm963 = vmand %vm931, %vm899
        %vm964 = vmand %vm932, %vm900
        %vm965 = vmand %vm933, %vm901
        %vm966 = vmand %vm934, %vm902
        %vm967 = vmand %vm935, %vm903
        %vm968 = vmand %vm936, %vm904
        %vm969 = vmand %vm937, %vm905
        %vm970 = vmand %vm938, %vm906
        %vm971 = vmand %vm939, %vm907
        %vm972 = vmand %vm940, %vm908
        %vm973 = vmand %vm941, %vm909
        %vm974 = vmand %vm942, %vm910
        %v975 = vadd.s32 %v661, 16
        %v976 = vadd.s32 %v668, 16
        %v977 = vadd.s32 %v675, 16
        %v978 = vadd.s32 %v682, 16
        %v979 = vadd.s32 %v689, 16
        %v980 = vadd.s32 %v696, 16
        %v981 = vadd.s32 %v703, 16
        %v982 = vadd.s32 %v710, 16
        %v983 = vadd.s32 %v717, 16
        %v984 = vadd.s32 %v724, 16
        %v985 = vadd.s32 %v731, 16
        %v986 = vadd.s32 %v738, 16
        %v987 = vadd.s32 %v745, 16
        %v988 = vadd.s32 %v752, 16
        %v989 = vadd.s32 %v759, 16
        %v990 = vadd.s32 %v766, 16
        %v991 = vadd.s32 %v773, 16
        %v992 = vadd.s32 %v780, 16
        %v993 = vadd.s32 %v787, 16
        %v994 = vadd.s32 %v794, 16
        %v995 = vadd.s32 %v801, 16
        %v996 = vadd.s32 %v808, 16
        %v997 = vadd.s32 %v815, 16
        %v998 = vadd.s32 %v822, 16
        %v999 = vadd.s32 %v829, 16
        %v1000 = vadd.s32 %v836, 16
        %v1001 = vadd.s32 %v843, 16
        %v1002 = vadd.s32 %v850, 16
        %v1003 = vadd.s32 %v857, 16
        %v1004 = vadd.s32 %v864, 16
        %v1005 = vadd.s32 %v871, 16
        %v1006 = vadd.s32 %v878, 16
        %v1007 = vsel %vm943, %v975, %v661
        %v1008 = vsel %vm944, %v976, %v668
        %v1009 = vsel %vm945, %v977, %v675
        %v1010 = vsel %vm946, %v978, %v682
        %v1011 = vsel %vm947, %v979, %v689
        %v1012 = vsel %vm948, %v980, %v696
        %v1013 = vsel %vm949, %v981, %v703
        %v1014 = vsel %vm950, %v982, %v710
        %v1015 = vsel %vm951, %v983, %v717
        %v1016 = vsel %vm952, %v984, %v724
        %v1017 = vsel %vm953, %v985, %v731
        %v1018 = vsel %vm954, %v986, %v738
        %v1019 = vsel %vm955, %v987, %v745
        %v1020 = vsel %vm956, %v988, %v752
        %v1021 = vsel %vm957, %v989, %v759
        %v1022 = vsel %vm958, %v990, %v766
        %v1023 = vsel %vm959, %v991, %v773
        %v1024 = vsel %vm960, %v992, %v780
        %v1025 = vsel %vm961, %v993, %v787
        %v1026 = vsel %vm962, %v994, %v794
        %v1027 = vsel %vm963, %v995, %v801
        %v1028 = vsel %vm964, %v996, %v808
        %v1029 = vsel %vm965, %v997, %v815
        %v1030 = vsel %vm966, %v998, %v822
        %v1031 = vsel %vm967, %v999, %v829
        %v1032 = vsel %vm968, %v1000, %v836
        %v1033 = vsel %vm969, %v1001, %v843
        %v1034 = vsel %vm970, %v1002, %v850
        %v1035 = vsel %vm971, %v1003, %v857
        %v1036 = vsel %vm972, %v1004, %v864
        %v1037 = vsel %vm973, %v1005, %v871
        %v1038 = vsel %vm974, %v1006, %v878
        %vm1039 = vcmp.ge.s32.totalorder %v1007, 1
        %vm1040 = vcmp.ge.s32.totalorder %v1008, 1
        %vm1041 = vcmp.ge.s32.totalorder %v1009, 1
        %vm1042 = vcmp.ge.s32.totalorder %v1010, 1
        %vm1043 = vcmp.ge.s32.totalorder %v1011, 1
        %vm1044 = vcmp.ge.s32.totalorder %v1012, 1
        %vm1045 = vcmp.ge.s32.totalorder %v1013, 1
        %vm1046 = vcmp.ge.s32.totalorder %v1014, 1
        %vm1047 = vcmp.ge.s32.totalorder %v1015, 1
        %vm1048 = vcmp.ge.s32.totalorder %v1016, 1
        %vm1049 = vcmp.ge.s32.totalorder %v1017, 1
        %vm1050 = vcmp.ge.s32.totalorder %v1018, 1
        %vm1051 = vcmp.ge.s32.totalorder %v1019, 1
        %vm1052 = vcmp.ge.s32.totalorder %v1020, 1
        %vm1053 = vcmp.ge.s32.totalorder %v1021, 1
        %vm1054 = vcmp.ge.s32.totalorder %v1022, 1
        %vm1055 = vcmp.ge.s32.totalorder %v1023, 1
        %vm1056 = vcmp.ge.s32.totalorder %v1024, 1
        %vm1057 = vcmp.ge.s32.totalorder %v1025, 1
        %vm1058 = vcmp.ge.s32.totalorder %v1026, 1
        %vm1059 = vcmp.ge.s32.totalorder %v1027, 1
        %vm1060 = vcmp.ge.s32.totalorder %v1028, 1
        %vm1061 = vcmp.ge.s32.totalorder %v1029, 1
        %vm1062 = vcmp.ge.s32.totalorder %v1030, 1
        %vm1063 = vcmp.ge.s32.totalorder %v1031, 1
        %vm1064 = vcmp.ge.s32.totalorder %v1032, 1
        %vm1065 = vcmp.ge.s32.totalorder %v1033, 1
        %vm1066 = vcmp.ge.s32.totalorder %v1034, 1
        %vm1067 = vcmp.ge.s32.totalorder %v1035, 1
        %vm1068 = vcmp.ge.s32.totalorder %v1036, 1
        %vm1069 = vcmp.ge.s32.totalorder %v1037, 1
        %vm1070 = vcmp.ge.s32.totalorder %v1038, 1
        %v1071 = vld [vmem:[#allocation2 + $0x7] sm:$0xff]
        %v1072 = vld [vmem:[#allocation2 + $0xf] sm:$0xff]
        %v1073 = vld [vmem:[#allocation2 + $0x17] sm:$0xff]
        %v1074 = vld [vmem:[#allocation2 + $0x1f] sm:$0xff]
        %v1075 = vld [vmem:[#allocation2 + $0x27] sm:$0xff]
        %v1076 = vld [vmem:[#allocation2 + $0x2f] sm:$0xff]
        %v1077 = vld [vmem:[#allocation2 + $0x37] sm:$0xff]
        %v1078 = vld [vmem:[#allocation2 + $0x3f] sm:$0xff]
        %v1079 = vld [vmem:[#allocation2 + $0x47] sm:$0xff]
        %v1080 = vld [vmem:[#allocation2 + $0x4f] sm:$0xff]
        %v1081 = vld [vmem:[#allocation2 + $0x57] sm:$0xff]
        %v1082 = vld [vmem:[#allocation2 + $0x5f] sm:$0xff]
        %v1083 = vld [vmem:[#allocation2 + $0x67] sm:$0xff]
        %v1084 = vld [vmem:[#allocation2 + $0x6f] sm:$0xff]
        %v1085 = vld [vmem:[#allocation2 + $0x77] sm:$0xff]
        %v1086 = vld [vmem:[#allocation2 + $0x7f] sm:$0xff]
        %v1087 = vld [vmem:[#allocation2 + $0x87] sm:$0xff]
        %v1088 = vld [vmem:[#allocation2 + $0x8f] sm:$0xff]
        %v1089 = vld [vmem:[#allocation2 + $0x97] sm:$0xff]
        %v1090 = vld [vmem:[#allocation2 + $0x9f] sm:$0xff]
        %v1091 = vld [vmem:[#allocation2 + $0xa7] sm:$0xff]
        %v1092 = vld [vmem:[#allocation2 + $0xaf] sm:$0xff]
        %v1093 = vld [vmem:[#allocation2 + $0xb7] sm:$0xff]
        %v1094 = vld [vmem:[#allocation2 + $0xbf] sm:$0xff]
        %v1095 = vld [vmem:[#allocation2 + $0xc7] sm:$0xff]
        %v1096 = vld [vmem:[#allocation2 + $0xcf] sm:$0xff]
        %v1097 = vld [vmem:[#allocation2 + $0xd7] sm:$0xff]
        %v1098 = vld [vmem:[#allocation2 + $0xdf] sm:$0xff]
        %v1099 = vld [vmem:[#allocation2 + $0xe7] sm:$0xff]
        %v1100 = vld [vmem:[#allocation2 + $0xef] sm:$0xff]
        %v1101 = vld [vmem:[#allocation2 + $0xf7] sm:$0xff]
        %v1102 = vld [vmem:[#allocation2 + $0xff] sm:$0xff]
        %v1103 = vsel %vm1039, 1, 0
        %v1104 = vsel %vm1040, 1, 0
        %v1105 = vsel %vm1041, 1, 0
        %v1106 = vsel %vm1042, 1, 0
        %v1107 = vsel %vm1043, 1, 0
        %v1108 = vsel %vm1044, 1, 0
        %v1109 = vsel %vm1045, 1, 0
        %v1110 = vsel %vm1046, 1, 0
        %v1111 = vsel %vm1047, 1, 0
        %v1112 = vsel %vm1048, 1, 0
        %v1113 = vsel %vm1049, 1, 0
        %v1114 = vsel %vm1050, 1, 0
        %v1115 = vsel %vm1051, 1, 0
        %v1116 = vsel %vm1052, 1, 0
        %v1117 = vsel %vm1053, 1, 0
        %v1118 = vsel %vm1054, 1, 0
        %v1119 = vsel %vm1055, 1, 0
        %v1120 = vsel %vm1056, 1, 0
        %v1121 = vsel %vm1057, 1, 0
        %v1122 = vsel %vm1058, 1, 0
        %v1123 = vsel %vm1059, 1, 0
        %v1124 = vsel %vm1060, 1, 0
        %v1125 = vsel %vm1061, 1, 0
        %v1126 = vsel %vm1062, 1, 0
        %v1127 = vsel %vm1063, 1, 0
        %v1128 = vsel %vm1064, 1, 0
        %v1129 = vsel %vm1065, 1, 0
        %v1130 = vsel %vm1066, 1, 0
        %v1131 = vsel %vm1067, 1, 0
        %v1132 = vsel %vm1068, 1, 0
        %v1133 = vsel %vm1069, 1, 0
        %v1134 = vsel %vm1070, 1, 0
        %vm1135 = vcmp.eq.s32.totalorder %v1103, 1
        %vm1136 = vcmp.eq.s32.totalorder %v1104, 1
        %vm1137 = vcmp.eq.s32.totalorder %v1105, 1
        %vm1138 = vcmp.eq.s32.totalorder %v1106, 1
        %vm1139 = vcmp.eq.s32.totalorder %v1107, 1
        %vm1140 = vcmp.eq.s32.totalorder %v1108, 1
        %vm1141 = vcmp.eq.s32.totalorder %v1109, 1
        %vm1142 = vcmp.eq.s32.totalorder %v1110, 1
        %vm1143 = vcmp.eq.s32.totalorder %v1111, 1
        %vm1144 = vcmp.eq.s32.totalorder %v1112, 1
        %vm1145 = vcmp.eq.s32.totalorder %v1113, 1
        %vm1146 = vcmp.eq.s32.totalorder %v1114, 1
        %vm1147 = vcmp.eq.s32.totalorder %v1115, 1
        %vm1148 = vcmp.eq.s32.totalorder %v1116, 1
        %vm1149 = vcmp.eq.s32.totalorder %v1117, 1
        %vm1150 = vcmp.eq.s32.totalorder %v1118, 1
        %vm1151 = vcmp.eq.s32.totalorder %v1119, 1
        %vm1152 = vcmp.eq.s32.totalorder %v1120, 1
        %vm1153 = vcmp.eq.s32.totalorder %v1121, 1
        %vm1154 = vcmp.eq.s32.totalorder %v1122, 1
        %vm1155 = vcmp.eq.s32.totalorder %v1123, 1
        %vm1156 = vcmp.eq.s32.totalorder %v1124, 1
        %vm1157 = vcmp.eq.s32.totalorder %v1125, 1
        %vm1158 = vcmp.eq.s32.totalorder %v1126, 1
        %vm1159 = vcmp.eq.s32.totalorder %v1127, 1
        %vm1160 = vcmp.eq.s32.totalorder %v1128, 1
        %vm1161 = vcmp.eq.s32.totalorder %v1129, 1
        %vm1162 = vcmp.eq.s32.totalorder %v1130, 1
        %vm1163 = vcmp.eq.s32.totalorder %v1131, 1
        %vm1164 = vcmp.eq.s32.totalorder %v1132, 1
        %vm1165 = vcmp.eq.s32.totalorder %v1133, 1
        %vm1166 = vcmp.eq.s32.totalorder %v1134, 1
        %v1167 = vsel %vm1135, %v1071, 0.0
        %v1168 = vsel %vm1136, %v1072, 0.0
        %v1169 = vsel %vm1137, %v1073, 0.0
        %v1170 = vsel %vm1138, %v1074, 0.0
        %v1171 = vsel %vm1139, %v1075, 0.0
        %v1172 = vsel %vm1140, %v1076, 0.0
        %v1173 = vsel %vm1141, %v1077, 0.0
        %v1174 = vsel %vm1142, %v1078, 0.0
        %v1175 = vsel %vm1143, %v1079, 0.0
        %v1176 = vsel %vm1144, %v1080, 0.0
        %v1177 = vsel %vm1145, %v1081, 0.0
        %v1178 = vsel %vm1146, %v1082, 0.0
        %v1179 = vsel %vm1147, %v1083, 0.0
        %v1180 = vsel %vm1148, %v1084, 0.0
        %v1181 = vsel %vm1149, %v1085, 0.0
        %v1182 = vsel %vm1150, %v1086, 0.0
        %v1183 = vsel %vm1151, %v1087, 0.0
        %v1184 = vsel %vm1152, %v1088, 0.0
        %v1185 = vsel %vm1153, %v1089, 0.0
        %v1186 = vsel %vm1154, %v1090, 0.0
        %v1187 = vsel %vm1155, %v1091, 0.0
        %v1188 = vsel %vm1156, %v1092, 0.0
        %v1189 = vsel %vm1157, %v1093, 0.0
        %v1190 = vsel %vm1158, %v1094, 0.0
        %v1191 = vsel %vm1159, %v1095, 0.0
        %v1192 = vsel %vm1160, %v1096, 0.0
        %v1193 = vsel %vm1161, %v1097, 0.0
        %v1194 = vsel %vm1162, %v1098, 0.0
        %v1195 = vsel %vm1163, %v1099, 0.0
        %v1196 = vsel %vm1164, %v1100, 0.0
        %v1197 = vsel %vm1165, %v1101, 0.0
        %v1198 = vsel %vm1166, %v1102, 0.0
        %vm1199 = vcmp.le.s32.totalorder %v1007, 14
        %vm1200 = vcmp.le.s32.totalorder %v1008, 14
        %vm1201 = vcmp.le.s32.totalorder %v1009, 14
        %vm1202 = vcmp.le.s32.totalorder %v1010, 14
        %vm1203 = vcmp.le.s32.totalorder %v1011, 14
        %vm1204 = vcmp.le.s32.totalorder %v1012, 14
        %vm1205 = vcmp.le.s32.totalorder %v1013, 14
        %vm1206 = vcmp.le.s32.totalorder %v1014, 14
        %vm1207 = vcmp.le.s32.totalorder %v1015, 14
        %vm1208 = vcmp.le.s32.totalorder %v1016, 14
        %vm1209 = vcmp.le.s32.totalorder %v1017, 14
        %vm1210 = vcmp.le.s32.totalorder %v1018, 14
        %vm1211 = vcmp.le.s32.totalorder %v1019, 14
        %vm1212 = vcmp.le.s32.totalorder %v1020, 14
        %vm1213 = vcmp.le.s32.totalorder %v1021, 14
        %vm1214 = vcmp.le.s32.totalorder %v1022, 14
        %vm1215 = vcmp.le.s32.totalorder %v1023, 14
        %vm1216 = vcmp.le.s32.totalorder %v1024, 14
        %vm1217 = vcmp.le.s32.totalorder %v1025, 14
        %vm1218 = vcmp.le.s32.totalorder %v1026, 14
        %vm1219 = vcmp.le.s32.totalorder %v1027, 14
        %vm1220 = vcmp.le.s32.totalorder %v1028, 14
        %vm1221 = vcmp.le.s32.totalorder %v1029, 14
        %vm1222 = vcmp.le.s32.totalorder %v1030, 14
        %vm1223 = vcmp.le.s32.totalorder %v1031, 14
        %vm1224 = vcmp.le.s32.totalorder %v1032, 14
        %vm1225 = vcmp.le.s32.totalorder %v1033, 14
        %vm1226 = vcmp.le.s32.totalorder %v1034, 14
        %vm1227 = vcmp.le.s32.totalorder %v1035, 14
        %vm1228 = vcmp.le.s32.totalorder %v1036, 14
        %vm1229 = vcmp.le.s32.totalorder %v1037, 14
        %vm1230 = vcmp.le.s32.totalorder %v1038, 14
        %v1231 = vld [vmem:[#allocation2 + $0x9] sm:$0xff]
        %v1232 = vld [vmem:[#allocation2 + $0x11] sm:$0xff]
        %v1233 = vld [vmem:[#allocation2 + $0x19] sm:$0xff]
        %v1234 = vld [vmem:[#allocation2 + $0x21] sm:$0xff]
        %v1235 = vld [vmem:[#allocation2 + $0x29] sm:$0xff]
        %v1236 = vld [vmem:[#allocation2 + $0x31] sm:$0xff]
        %v1237 = vld [vmem:[#allocation2 + $0x39] sm:$0xff]
        %v1238 = vld [vmem:[#allocation2 + $0x41] sm:$0xff]
        %v1239 = vld [vmem:[#allocation2 + $0x49] sm:$0xff]
        %v1240 = vld [vmem:[#allocation2 + $0x51] sm:$0xff]
        %v1241 = vld [vmem:[#allocation2 + $0x59] sm:$0xff]
        %v1242 = vld [vmem:[#allocation2 + $0x61] sm:$0xff]
        %v1243 = vld [vmem:[#allocation2 + $0x69] sm:$0xff]
        %v1244 = vld [vmem:[#allocation2 + $0x71] sm:$0xff]
        %v1245 = vld [vmem:[#allocation2 + $0x79] sm:$0xff]
        %v1246 = vld [vmem:[#allocation2 + $0x81] sm:$0xff]
        %v1247 = vld [vmem:[#allocation2 + $0x89] sm:$0xff]
        %v1248 = vld [vmem:[#allocation2 + $0x91] sm:$0xff]
        %v1249 = vld [vmem:[#allocation2 + $0x99] sm:$0xff]
        %v1250 = vld [vmem:[#allocation2 + $0xa1] sm:$0xff]
        %v1251 = vld [vmem:[#allocation2 + $0xa9] sm:$0xff]
        %v1252 = vld [vmem:[#allocation2 + $0xb1] sm:$0xff]
        %v1253 = vld [vmem:[#allocation2 + $0xb9] sm:$0xff]
        %v1254 = vld [vmem:[#allocation2 + $0xc1] sm:$0xff]
        %v1255 = vld [vmem:[#allocation2 + $0xc9] sm:$0xff]
        %v1256 = vld [vmem:[#allocation2 + $0xd1] sm:$0xff]
        %v1257 = vld [vmem:[#allocation2 + $0xd9] sm:$0xff]
        %v1258 = vld [vmem:[#allocation2 + $0xe1] sm:$0xff]
        %v1259 = vld [vmem:[#allocation2 + $0xe9] sm:$0xff]
        %v1260 = vld [vmem:[#allocation2 + $0xf1] sm:$0xff]
        %v1261 = vld [vmem:[#allocation2 + $0xf9] sm:$0xff]
        %v1262 = vld [vmem:[#allocation2 + $0x101] sm:$0xff]
        %v1263 = vsel %vm1199, 1, 0
        %v1264 = vsel %vm1200, 1, 0
        %v1265 = vsel %vm1201, 1, 0
        %v1266 = vsel %vm1202, 1, 0
        %v1267 = vsel %vm1203, 1, 0
        %v1268 = vsel %vm1204, 1, 0
        %v1269 = vsel %vm1205, 1, 0
        %v1270 = vsel %vm1206, 1, 0
        %v1271 = vsel %vm1207, 1, 0
        %v1272 = vsel %vm1208, 1, 0
        %v1273 = vsel %vm1209, 1, 0
        %v1274 = vsel %vm1210, 1, 0
        %v1275 = vsel %vm1211, 1, 0
        %v1276 = vsel %vm1212, 1, 0
        %v1277 = vsel %vm1213, 1, 0
        %v1278 = vsel %vm1214, 1, 0
        %v1279 = vsel %vm1215, 1, 0
        %v1280 = vsel %vm1216, 1, 0
        %v1281 = vsel %vm1217, 1, 0
        %v1282 = vsel %vm1218, 1, 0
        %v1283 = vsel %vm1219, 1, 0
        %v1284 = vsel %vm1220, 1, 0
        %v1285 = vsel %vm1221, 1, 0
        %v1286 = vsel %vm1222, 1, 0
        %v1287 = vsel %vm1223, 1, 0
        %v1288 = vsel %vm1224, 1, 0
        %v1289 = vsel %vm1225, 1, 0
        %v1290 = vsel %vm1226, 1, 0
        %v1291 = vsel %vm1227, 1, 0
        %v1292 = vsel %vm1228, 1, 0
        %v1293 = vsel %vm1229, 1, 0
        %v1294 = vsel %vm1230, 1, 0
        %vm1295 = vcmp.eq.s32.totalorder %v1263, 1
        %vm1296 = vcmp.eq.s32.totalorder %v1264, 1
        %vm1297 = vcmp.eq.s32.totalorder %v1265, 1
        %vm1298 = vcmp.eq.s32.totalorder %v1266, 1
        %vm1299 = vcmp.eq.s32.totalorder %v1267, 1
        %vm1300 = vcmp.eq.s32.totalorder %v1268, 1
        %vm1301 = vcmp.eq.s32.totalorder %v1269, 1
        %vm1302 = vcmp.eq.s32.totalorder %v1270, 1
        %vm1303 = vcmp.eq.s32.totalorder %v1271, 1
        %vm1304 = vcmp.eq.s32.totalorder %v1272, 1
        %vm1305 = vcmp.eq.s32.totalorder %v1273, 1
        %vm1306 = vcmp.eq.s32.totalorder %v1274, 1
        %vm1307 = vcmp.eq.s32.totalorder %v1275, 1
        %vm1308 = vcmp.eq.s32.totalorder %v1276, 1
        %vm1309 = vcmp.eq.s32.totalorder %v1277, 1
        %vm1310 = vcmp.eq.s32.totalorder %v1278, 1
        %vm1311 = vcmp.eq.s32.totalorder %v1279, 1
        %vm1312 = vcmp.eq.s32.totalorder %v1280, 1
        %vm1313 = vcmp.eq.s32.totalorder %v1281, 1
        %vm1314 = vcmp.eq.s32.totalorder %v1282, 1
        %vm1315 = vcmp.eq.s32.totalorder %v1283, 1
        %vm1316 = vcmp.eq.s32.totalorder %v1284, 1
        %vm1317 = vcmp.eq.s32.totalorder %v1285, 1
        %vm1318 = vcmp.eq.s32.totalorder %v1286, 1
        %vm1319 = vcmp.eq.s32.totalorder %v1287, 1
        %vm1320 = vcmp.eq.s32.totalorder %v1288, 1
        %vm1321 = vcmp.eq.s32.totalorder %v1289, 1
        %vm1322 = vcmp.eq.s32.totalorder %v1290, 1
        %vm1323 = vcmp.eq.s32.totalorder %v1291, 1
        %vm1324 = vcmp.eq.s32.totalorder %v1292, 1
        %vm1325 = vcmp.eq.s32.totalorder %v1293, 1
        %vm1326 = vcmp.eq.s32.totalorder %v1294, 1
        %v1327 = vsel %vm1295, %v1231, 0.0
        %v1328 = vsel %vm1296, %v1232, 0.0
        %v1329 = vsel %vm1297, %v1233, 0.0
        %v1330 = vsel %vm1298, %v1234, 0.0
        %v1331 = vsel %vm1299, %v1235, 0.0
        %v1332 = vsel %vm1300, %v1236, 0.0
        %v1333 = vsel %vm1301, %v1237, 0.0
        %v1334 = vsel %vm1302, %v1238, 0.0
        %v1335 = vsel %vm1303, %v1239, 0.0
        %v1336 = vsel %vm1304, %v1240, 0.0
        %v1337 = vsel %vm1305, %v1241, 0.0
        %v1338 = vsel %vm1306, %v1242, 0.0
        %v1339 = vsel %vm1307, %v1243, 0.0
        %v1340 = vsel %vm1308, %v1244, 0.0
        %v1341 = vsel %vm1309, %v1245, 0.0
        %v1342 = vsel %vm1310, %v1246, 0.0
        %v1343 = vsel %vm1311, %v1247, 0.0
        %v1344 = vsel %vm1312, %v1248, 0.0
        %v1345 = vsel %vm1313, %v1249, 0.0
        %v1346 = vsel %vm1314, %v1250, 0.0
        %v1347 = vsel %vm1315, %v1251, 0.0
        %v1348 = vsel %vm1316, %v1252, 0.0
        %v1349 = vsel %vm1317, %v1253, 0.0
        %v1350 = vsel %vm1318, %v1254, 0.0
        %v1351 = vsel %vm1319, %v1255, 0.0
        %v1352 = vsel %vm1320, %v1256, 0.0
        %v1353 = vsel %vm1321, %v1257, 0.0
        %v1354 = vsel %vm1322, %v1258, 0.0
        %v1355 = vsel %vm1323, %v1259, 0.0
        %v1356 = vsel %vm1324, %v1260, 0.0
        %v1357 = vsel %vm1325, %v1261, 0.0
        %v1358 = vsel %vm1326, %v1262, 0.0
        %1359 = vst [vmem:[#allocation3] sm:$0xff] 0
        %1360 = vst [vmem:[#allocation3 + $0x8] sm:$0xf] 0
        %1361 = vst [vmem:[#allocation3 + $0xc] sm:$0xff] 0
        %1362 = vst [vmem:[#allocation3 + $0x14] sm:$0xf] 0
        %1363 = vst [vmem:[#allocation3 + $0x198] sm:$0xff] 0
        %1364 = vst [vmem:[#allocation3 + $0x1a0] sm:$0xf] 0
        %1365 = vst [vmem:[#allocation3 + $0x1a4] sm:$0xff] 0
        %1366 = vst [vmem:[#allocation3 + $0x1ac] sm:$0xf] 0
        %v1367 = vpack.c.bf16 %v1168, %v1167
        %v1368 = vpack.c.bf16 %v1170, %v1169
        %v1369 = vpack.c.bf16 %v1172, %v1171
        %v1370 = vpack.c.bf16 %v1174, %v1173
        %v1371 = vpack.c.bf16 %v1176, %v1175
        %v1372 = vpack.c.bf16 %v1178, %v1177
        %v1373 = vpack.c.bf16 %v1180, %v1179
        %v1374 = vpack.c.bf16 %v1182, %v1181
        %v1375 = vpack.c.bf16 %v1184, %v1183
        %v1376 = vpack.c.bf16 %v1186, %v1185
        %v1377 = vpack.c.bf16 %v1188, %v1187
        %v1378 = vpack.c.bf16 %v1190, %v1189
        %v1379 = vpack.c.bf16 %v1192, %v1191
        %v1380 = vpack.c.bf16 %v1194, %v1193
        %v1381 = vpack.c.bf16 %v1196, %v1195
        %v1382 = vpack.c.bf16 %v1198, %v1197
        %v1399 = vunpack.c.l.b16 %v1367
        %v1400 = vunpack.c.h.b16 %v1367
        %v1401 = vunpack.c.l.b16 %v1368
        %v1402 = vunpack.c.h.b16 %v1368
        %v1403 = vunpack.c.l.b16 %v1369
        %v1404 = vunpack.c.h.b16 %v1369
        %v1405 = vunpack.c.l.b16 %v1370
        %v1406 = vunpack.c.h.b16 %v1370
        %v1407 = vunpack.c.l.b16 %v1371
        %v1408 = vunpack.c.h.b16 %v1371
        %v1409 = vunpack.c.l.b16 %v1372
        %v1410 = vunpack.c.h.b16 %v1372
        %v1411 = vunpack.c.l.b16 %v1373
        %v1412 = vunpack.c.h.b16 %v1373
        %v1413 = vunpack.c.l.b16 %v1374
        %v1414 = vunpack.c.h.b16 %v1374
        %v1415 = vunpack.c.l.b16 %v1375
        %v1416 = vunpack.c.h.b16 %v1375
        %v1417 = vunpack.c.l.b16 %v1376
        %v1418 = vunpack.c.h.b16 %v1376
        %v1419 = vunpack.c.l.b16 %v1377
        %v1420 = vunpack.c.h.b16 %v1377
        %v1421 = vunpack.c.l.b16 %v1378
        %v1422 = vunpack.c.h.b16 %v1378
        %v1423 = vunpack.c.l.b16 %v1379
        %v1424 = vunpack.c.h.b16 %v1379
        %v1425 = vunpack.c.l.b16 %v1380
        %v1426 = vunpack.c.h.b16 %v1380
        %v1427 = vunpack.c.l.b16 %v1381
        %v1428 = vunpack.c.h.b16 %v1381
        %v1429 = vunpack.c.l.b16 %v1382
        %v1430 = vunpack.c.h.b16 %v1382
        %v1431 = vpack.c.b16 %v1399, %v1399
        %v1432 = vpack.c.b16 %v1400, %v1400
        %v1433 = vpack.c.b16 %v1401, %v1401
        %v1434 = vpack.c.b16 %v1402, %v1402
        %v1435 = vpack.c.b16 %v1403, %v1403
        %v1436 = vpack.c.b16 %v1404, %v1404
        %v1437 = vpack.c.b16 %v1405, %v1405
        %v1438 = vpack.c.b16 %v1406, %v1406
        %v1439 = vpack.c.b16 %v1407, %v1407
        %v1440 = vpack.c.b16 %v1408, %v1408
        %v1441 = vpack.c.b16 %v1409, %v1409
        %v1442 = vpack.c.b16 %v1410, %v1410
        %v1443 = vpack.c.b16 %v1411, %v1411
        %v1444 = vpack.c.b16 %v1412, %v1412
        %v1445 = vpack.c.b16 %v1413, %v1413
        %v1446 = vpack.c.b16 %v1414, %v1414
        %v1447 = vpack.c.b16 %v1415, %v1415
        %v1448 = vpack.c.b16 %v1416, %v1416
        %v1449 = vpack.c.b16 %v1417, %v1417
        %v1450 = vpack.c.b16 %v1418, %v1418
        %v1451 = vpack.c.b16 %v1419, %v1419
        %v1452 = vpack.c.b16 %v1420, %v1420
        %v1453 = vpack.c.b16 %v1421, %v1421
        %v1454 = vpack.c.b16 %v1422, %v1422
        %v1455 = vpack.c.b16 %v1423, %v1423
        %v1456 = vpack.c.b16 %v1424, %v1424
        %v1457 = vpack.c.b16 %v1425, %v1425
        %v1458 = vpack.c.b16 %v1426, %v1426
        %v1459 = vpack.c.b16 %v1427, %v1427
        %v1460 = vpack.c.b16 %v1428, %v1428
        %v1461 = vpack.c.b16 %v1429, %v1429
        %v1462 = vpack.c.b16 %v1430, %v1430
        %1495 = vst [vmem:[#allocation3 + $0x18] sm:$0xf] %v1431
        %1496 = vst [vmem:[#allocation3 + $0x24] sm:$0xf] %v1432
        %1497 = vst [vmem:[#allocation3 + $0x30] sm:$0xf] %v1433
        %1498 = vst [vmem:[#allocation3 + $0x3c] sm:$0xf] %v1434
        %1499 = vst [vmem:[#allocation3 + $0x48] sm:$0xf] %v1435
        %1500 = vst [vmem:[#allocation3 + $0x54] sm:$0xf] %v1436
        %1501 = vst [vmem:[#allocation3 + $0x60] sm:$0xf] %v1437
        %1502 = vst [vmem:[#allocation3 + $0x6c] sm:$0xf] %v1438
        %1503 = vst [vmem:[#allocation3 + $0x78] sm:$0xf] %v1439
        %1504 = vst [vmem:[#allocation3 + $0x84] sm:$0xf] %v1440
        %1505 = vst [vmem:[#allocation3 + $0x90] sm:$0xf] %v1441
        %1506 = vst [vmem:[#allocation3 + $0x9c] sm:$0xf] %v1442
        %1507 = vst [vmem:[#allocation3 + $0xa8] sm:$0xf] %v1443
        %1508 = vst [vmem:[#allocation3 + $0xb4] sm:$0xf] %v1444
        %1509 = vst [vmem:[#allocation3 + $0xc0] sm:$0xf] %v1445
        %1510 = vst [vmem:[#allocation3 + $0xcc] sm:$0xf] %v1446
        %1511 = vst [vmem:[#allocation3 + $0xd8] sm:$0xf] %v1447
        %1512 = vst [vmem:[#allocation3 + $0xe4] sm:$0xf] %v1448
        %1513 = vst [vmem:[#allocation3 + $0xf0] sm:$0xf] %v1449
        %1514 = vst [vmem:[#allocation3 + $0xfc] sm:$0xf] %v1450
        %1515 = vst [vmem:[#allocation3 + $0x108] sm:$0xf] %v1451
        %1516 = vst [vmem:[#allocation3 + $0x114] sm:$0xf] %v1452
        %1517 = vst [vmem:[#allocation3 + $0x120] sm:$0xf] %v1453
        %1518 = vst [vmem:[#allocation3 + $0x12c] sm:$0xf] %v1454
        %1519 = vst [vmem:[#allocation3 + $0x138] sm:$0xf] %v1455
        %1520 = vst [vmem:[#allocation3 + $0x144] sm:$0xf] %v1456
        %1521 = vst [vmem:[#allocation3 + $0x150] sm:$0xf] %v1457
        %1522 = vst [vmem:[#allocation3 + $0x15c] sm:$0xf] %v1458
        %1523 = vst [vmem:[#allocation3 + $0x168] sm:$0xf] %v1459
        %1524 = vst [vmem:[#allocation3 + $0x174] sm:$0xf] %v1460
        %1525 = vst [vmem:[#allocation3 + $0x180] sm:$0xf] %v1461
        %1526 = vst [vmem:[#allocation3 + $0x18c] sm:$0xf] %v1462
        %v1527 = vpack.c.bf16 %v559, %v558
        %v1528 = vpack.c.bf16 %v561, %v560
        %v1529 = vpack.c.bf16 %v563, %v562
        %v1530 = vpack.c.bf16 %v565, %v564
        %v1531 = vpack.c.bf16 %v567, %v566
        %v1532 = vpack.c.bf16 %v569, %v568
        %v1533 = vpack.c.bf16 %v571, %v570
        %v1534 = vpack.c.bf16 %v573, %v572
        %v1535 = vpack.c.bf16 %v575, %v574
        %v1536 = vpack.c.bf16 %v577, %v576
        %v1537 = vpack.c.bf16 %v579, %v578
        %v1538 = vpack.c.bf16 %v581, %v580
        %v1539 = vpack.c.bf16 %v583, %v582
        %v1540 = vpack.c.bf16 %v585, %v584
        %v1541 = vpack.c.bf16 %v587, %v586
        %v1542 = vpack.c.bf16 %v589, %v588
        %v1559 = vunpack.c.l.b16 %v1527
        %v1560 = vunpack.c.h.b16 %v1527
        %v1561 = vunpack.c.l.b16 %v1528
        %v1562 = vunpack.c.h.b16 %v1528
        %v1563 = vunpack.c.l.b16 %v1529
        %v1564 = vunpack.c.h.b16 %v1529
        %v1565 = vunpack.c.l.b16 %v1530
        %v1566 = vunpack.c.h.b16 %v1530
        %v1567 = vunpack.c.l.b16 %v1531
        %v1568 = vunpack.c.h.b16 %v1531
        %v1569 = vunpack.c.l.b16 %v1532
        %v1570 = vunpack.c.h.b16 %v1532
        %v1571 = vunpack.c.l.b16 %v1533
        %v1572 = vunpack.c.h.b16 %v1533
        %v1573 = vunpack.c.l.b16 %v1534
        %v1574 = vunpack.c.h.b16 %v1534
        %v1575 = vunpack.c.l.b16 %v1535
        %v1576 = vunpack.c.h.b16 %v1535
        %v1577 = vunpack.c.l.b16 %v1536
        %v1578 = vunpack.c.h.b16 %v1536
        %v1579 = vunpack.c.l.b16 %v1537
        %v1580 = vunpack.c.h.b16 %v1537
        %v1581 = vunpack.c.l.b16 %v1538
        %v1582 = vunpack.c.h.b16 %v1538
        %v1583 = vunpack.c.l.b16 %v1539
        %v1584 = vunpack.c.h.b16 %v1539
        %v1585 = vunpack.c.l.b16 %v1540
        %v1586 = vunpack.c.h.b16 %v1540
        %v1587 = vunpack.c.l.b16 %v1541
        %v1588 = vunpack.c.h.b16 %v1541
        %v1589 = vunpack.c.l.b16 %v1542
        %v1590 = vunpack.c.h.b16 %v1542
        %v1591 = vpack.c.b16 %v1559, %v1559
        %v1592 = vpack.c.b16 %v1560, %v1560
        %v1593 = vpack.c.b16 %v1561, %v1561
        %v1594 = vpack.c.b16 %v1562, %v1562
        %v1595 = vpack.c.b16 %v1563, %v1563
        %v1596 = vpack.c.b16 %v1564, %v1564
        %v1597 = vpack.c.b16 %v1565, %v1565
        %v1598 = vpack.c.b16 %v1566, %v1566
        %v1599 = vpack.c.b16 %v1567, %v1567
        %v1600 = vpack.c.b16 %v1568, %v1568
        %v1601 = vpack.c.b16 %v1569, %v1569
        %v1602 = vpack.c.b16 %v1570, %v1570
        %v1603 = vpack.c.b16 %v1571, %v1571
        %v1604 = vpack.c.b16 %v1572, %v1572
        %v1605 = vpack.c.b16 %v1573, %v1573
        %v1606 = vpack.c.b16 %v1574, %v1574
        %v1607 = vpack.c.b16 %v1575, %v1575
        %v1608 = vpack.c.b16 %v1576, %v1576
        %v1609 = vpack.c.b16 %v1577, %v1577
        %v1610 = vpack.c.b16 %v1578, %v1578
        %v1611 = vpack.c.b16 %v1579, %v1579
        %v1612 = vpack.c.b16 %v1580, %v1580
        %v1613 = vpack.c.b16 %v1581, %v1581
        %v1614 = vpack.c.b16 %v1582, %v1582
        %v1615 = vpack.c.b16 %v1583, %v1583
        %v1616 = vpack.c.b16 %v1584, %v1584
        %v1617 = vpack.c.b16 %v1585, %v1585
        %v1618 = vpack.c.b16 %v1586, %v1586
        %v1619 = vpack.c.b16 %v1587, %v1587
        %v1620 = vpack.c.b16 %v1588, %v1588
        %v1621 = vpack.c.b16 %v1589, %v1589
        %v1622 = vpack.c.b16 %v1590, %v1590
        %1655 = vst [vmem:[#allocation3 + $0x1c] sm:$0xf] %v1591
        %1656 = vst [vmem:[#allocation3 + $0x28] sm:$0xf] %v1592
        %1657 = vst [vmem:[#allocation3 + $0x34] sm:$0xf] %v1593
        %1658 = vst [vmem:[#allocation3 + $0x40] sm:$0xf] %v1594
        %1659 = vst [vmem:[#allocation3 + $0x4c] sm:$0xf] %v1595
        %1660 = vst [vmem:[#allocation3 + $0x58] sm:$0xf] %v1596
        %1661 = vst [vmem:[#allocation3 + $0x64] sm:$0xf] %v1597
        %1662 = vst [vmem:[#allocation3 + $0x70] sm:$0xf] %v1598
        %1663 = vst [vmem:[#allocation3 + $0x7c] sm:$0xf] %v1599
        %1664 = vst [vmem:[#allocation3 + $0x88] sm:$0xf] %v1600
        %1665 = vst [vmem:[#allocation3 + $0x94] sm:$0xf] %v1601
        %1666 = vst [vmem:[#allocation3 + $0xa0] sm:$0xf] %v1602
        %1667 = vst [vmem:[#allocation3 + $0xac] sm:$0xf] %v1603
        %1668 = vst [vmem:[#allocation3 + $0xb8] sm:$0xf] %v1604
        %1669 = vst [vmem:[#allocation3 + $0xc4] sm:$0xf] %v1605
        %1670 = vst [vmem:[#allocation3 + $0xd0] sm:$0xf] %v1606
        %1671 = vst [vmem:[#allocation3 + $0xdc] sm:$0xf] %v1607
        %1672 = vst [vmem:[#allocation3 + $0xe8] sm:$0xf] %v1608
        %1673 = vst [vmem:[#allocation3 + $0xf4] sm:$0xf] %v1609
        %1674 = vst [vmem:[#allocation3 + $0x100] sm:$0xf] %v1610
        %1675 = vst [vmem:[#allocation3 + $0x10c] sm:$0xf] %v1611
        %1676 = vst [vmem:[#allocation3 + $0x118] sm:$0xf] %v1612
        %1677 = vst [vmem:[#allocation3 + $0x124] sm:$0xf] %v1613
        %1678 = vst [vmem:[#allocation3 + $0x130] sm:$0xf] %v1614
        %1679 = vst [vmem:[#allocation3 + $0x13c] sm:$0xf] %v1615
        %1680 = vst [vmem:[#allocation3 + $0x148] sm:$0xf] %v1616
        %1681 = vst [vmem:[#allocation3 + $0x154] sm:$0xf] %v1617
        %1682 = vst [vmem:[#allocation3 + $0x160] sm:$0xf] %v1618
        %1683 = vst [vmem:[#allocation3 + $0x16c] sm:$0xf] %v1619
        %1684 = vst [vmem:[#allocation3 + $0x178] sm:$0xf] %v1620
        %1685 = vst [vmem:[#allocation3 + $0x184] sm:$0xf] %v1621
        %1686 = vst [vmem:[#allocation3 + $0x190] sm:$0xf] %v1622
        %v1687 = vpack.c.bf16 %v1328, %v1327
        %v1688 = vpack.c.bf16 %v1330, %v1329
        %v1689 = vpack.c.bf16 %v1332, %v1331
        %v1690 = vpack.c.bf16 %v1334, %v1333
        %v1691 = vpack.c.bf16 %v1336, %v1335
        %v1692 = vpack.c.bf16 %v1338, %v1337
        %v1693 = vpack.c.bf16 %v1340, %v1339
        %v1694 = vpack.c.bf16 %v1342, %v1341
        %v1695 = vpack.c.bf16 %v1344, %v1343
        %v1696 = vpack.c.bf16 %v1346, %v1345
        %v1697 = vpack.c.bf16 %v1348, %v1347
        %v1698 = vpack.c.bf16 %v1350, %v1349
        %v1699 = vpack.c.bf16 %v1352, %v1351
        %v1700 = vpack.c.bf16 %v1354, %v1353
        %v1701 = vpack.c.bf16 %v1356, %v1355
        %v1702 = vpack.c.bf16 %v1358, %v1357
        %v1719 = vunpack.c.l.b16 %v1687
        %v1720 = vunpack.c.h.b16 %v1687
        %v1721 = vunpack.c.l.b16 %v1688
        %v1722 = vunpack.c.h.b16 %v1688
        %v1723 = vunpack.c.l.b16 %v1689
        %v1724 = vunpack.c.h.b16 %v1689
        %v1725 = vunpack.c.l.b16 %v1690
        %v1726 = vunpack.c.h.b16 %v1690
        %v1727 = vunpack.c.l.b16 %v1691
        %v1728 = vunpack.c.h.b16 %v1691
        %v1729 = vunpack.c.l.b16 %v1692
        %v1730 = vunpack.c.h.b16 %v1692
        %v1731 = vunpack.c.l.b16 %v1693
        %v1732 = vunpack.c.h.b16 %v1693
        %v1733 = vunpack.c.l.b16 %v1694
        %v1734 = vunpack.c.h.b16 %v1694
        %v1735 = vunpack.c.l.b16 %v1695
        %v1736 = vunpack.c.h.b16 %v1695
        %v1737 = vunpack.c.l.b16 %v1696
        %v1738 = vunpack.c.h.b16 %v1696
        %v1739 = vunpack.c.l.b16 %v1697
        %v1740 = vunpack.c.h.b16 %v1697
        %v1741 = vunpack.c.l.b16 %v1698
        %v1742 = vunpack.c.h.b16 %v1698
        %v1743 = vunpack.c.l.b16 %v1699
        %v1744 = vunpack.c.h.b16 %v1699
        %v1745 = vunpack.c.l.b16 %v1700
        %v1746 = vunpack.c.h.b16 %v1700
        %v1747 = vunpack.c.l.b16 %v1701
        %v1748 = vunpack.c.h.b16 %v1701
        %v1749 = vunpack.c.l.b16 %v1702
        %v1750 = vunpack.c.h.b16 %v1702
        %v1751 = vpack.c.b16 %v1719, %v1719
        %v1752 = vpack.c.b16 %v1720, %v1720
        %v1753 = vpack.c.b16 %v1721, %v1721
        %v1754 = vpack.c.b16 %v1722, %v1722
        %v1755 = vpack.c.b16 %v1723, %v1723
        %v1756 = vpack.c.b16 %v1724, %v1724
        %v1757 = vpack.c.b16 %v1725, %v1725
        %v1758 = vpack.c.b16 %v1726, %v1726
        %v1759 = vpack.c.b16 %v1727, %v1727
        %v1760 = vpack.c.b16 %v1728, %v1728
        %v1761 = vpack.c.b16 %v1729, %v1729
        %v1762 = vpack.c.b16 %v1730, %v1730
        %v1763 = vpack.c.b16 %v1731, %v1731
        %v1764 = vpack.c.b16 %v1732, %v1732
        %v1765 = vpack.c.b16 %v1733, %v1733
        %v1766 = vpack.c.b16 %v1734, %v1734
        %v1767 = vpack.c.b16 %v1735, %v1735
        %v1768 = vpack.c.b16 %v1736, %v1736
        %v1769 = vpack.c.b16 %v1737, %v1737
        %v1770 = vpack.c.b16 %v1738, %v1738
        %v1771 = vpack.c.b16 %v1739, %v1739
        %v1772 = vpack.c.b16 %v1740, %v1740
        %v1773 = vpack.c.b16 %v1741, %v1741
        %v1774 = vpack.c.b16 %v1742, %v1742
        %v1775 = vpack.c.b16 %v1743, %v1743
        %v1776 = vpack.c.b16 %v1744, %v1744
        %v1777 = vpack.c.b16 %v1745, %v1745
        %v1778 = vpack.c.b16 %v1746, %v1746
        %v1779 = vpack.c.b16 %v1747, %v1747
        %v1780 = vpack.c.b16 %v1748, %v1748
        %v1781 = vpack.c.b16 %v1749, %v1749
        %v1782 = vpack.c.b16 %v1750, %v1750
        %1815 = vst [vmem:[#allocation3 + $0x20] sm:$0xf] %v1751
        %1816 = vst [vmem:[#allocation3 + $0x2c] sm:$0xf] %v1752
        %1817 = vst [vmem:[#allocation3 + $0x38] sm:$0xf] %v1753
        %1818 = vst [vmem:[#allocation3 + $0x44] sm:$0xf] %v1754
        %1819 = vst [vmem:[#allocation3 + $0x50] sm:$0xf] %v1755
        %1820 = vst [vmem:[#allocation3 + $0x5c] sm:$0xf] %v1756
        %1821 = vst [vmem:[#allocation3 + $0x68] sm:$0xf] %v1757
        %1822 = vst [vmem:[#allocation3 + $0x74] sm:$0xf] %v1758
        %1823 = vst [vmem:[#allocation3 + $0x80] sm:$0xf] %v1759
        %1824 = vst [vmem:[#allocation3 + $0x8c] sm:$0xf] %v1760
        %1825 = vst [vmem:[#allocation3 + $0x98] sm:$0xf] %v1761
        %1826 = vst [vmem:[#allocation3 + $0xa4] sm:$0xf] %v1762
        %1827 = vst [vmem:[#allocation3 + $0xb0] sm:$0xf] %v1763
        %1828 = vst [vmem:[#allocation3 + $0xbc] sm:$0xf] %v1764
        %1829 = vst [vmem:[#allocation3 + $0xc8] sm:$0xf] %v1765
        %1830 = vst [vmem:[#allocation3 + $0xd4] sm:$0xf] %v1766
        %1831 = vst [vmem:[#allocation3 + $0xe0] sm:$0xf] %v1767
        %1832 = vst [vmem:[#allocation3 + $0xec] sm:$0xf] %v1768
        %1833 = vst [vmem:[#allocation3 + $0xf8] sm:$0xf] %v1769
        %1834 = vst [vmem:[#allocation3 + $0x104] sm:$0xf] %v1770
        %1835 = vst [vmem:[#allocation3 + $0x110] sm:$0xf] %v1771
        %1836 = vst [vmem:[#allocation3 + $0x11c] sm:$0xf] %v1772
        %1837 = vst [vmem:[#allocation3 + $0x128] sm:$0xf] %v1773
        %1838 = vst [vmem:[#allocation3 + $0x134] sm:$0xf] %v1774
        %1839 = vst [vmem:[#allocation3 + $0x140] sm:$0xf] %v1775
        %1840 = vst [vmem:[#allocation3 + $0x14c] sm:$0xf] %v1776
        %1841 = vst [vmem:[#allocation3 + $0x158] sm:$0xf] %v1777
        %1842 = vst [vmem:[#allocation3 + $0x164] sm:$0xf] %v1778
        %1843 = vst [vmem:[#allocation3 + $0x170] sm:$0xf] %v1779
        %1844 = vst [vmem:[#allocation3 + $0x17c] sm:$0xf] %v1780
        %1845 = vst [vmem:[#allocation3 + $0x188] sm:$0xf] %v1781
        %1846 = vst [vmem:[#allocation3 + $0x194] sm:$0xf] %v1782
        %v1847 = vld [vmem:[#allocation3] sm:$0xff]
        %v1848 = vld [vmem:[#allocation3 + $0x8] sm:$0xf]
        %v1849 = vld [vmem:[#allocation3 + $0xc] sm:$0xff]
        %v1850 = vld [vmem:[#allocation3 + $0x14] sm:$0xf]
        %v1851 = vld [vmem:[#allocation3 + $0x18] sm:$0xff]
        %v1852 = vld [vmem:[#allocation3 + $0x20] sm:$0xf]
        %v1853 = vld [vmem:[#allocation3 + $0x24] sm:$0xff]
        %v1854 = vld [vmem:[#allocation3 + $0x2c] sm:$0xf]
        %v1855 = vld [vmem:[#allocation3 + $0x30] sm:$0xff]
        %v1856 = vld [vmem:[#allocation3 + $0x38] sm:$0xf]
        %v1857 = vld [vmem:[#allocation3 + $0x3c] sm:$0xff]
        %v1858 = vld [vmem:[#allocation3 + $0x44] sm:$0xf]
        %v1859 = vld [vmem:[#allocation3 + $0x48] sm:$0xff]
        %v1860 = vld [vmem:[#allocation3 + $0x50] sm:$0xf]
        %v1861 = vld [vmem:[#allocation3 + $0x54] sm:$0xff]
        %v1862 = vld [vmem:[#allocation3 + $0x5c] sm:$0xf]
        %v1863 = vld [vmem:[#allocation3 + $0x60] sm:$0xff]
        %v1864 = vld [vmem:[#allocation3 + $0x68] sm:$0xf]
        %v1865 = vld [vmem:[#allocation3 + $0x6c] sm:$0xff]
        %v1866 = vld [vmem:[#allocation3 + $0x74] sm:$0xf]
        %v1867 = vld [vmem:[#allocation3 + $0x78] sm:$0xff]
        %v1868 = vld [vmem:[#allocation3 + $0x80] sm:$0xf]
        %v1869 = vld [vmem:[#allocation3 + $0x84] sm:$0xff]
        %v1870 = vld [vmem:[#allocation3 + $0x8c] sm:$0xf]
        %v1871 = vld [vmem:[#allocation3 + $0x90] sm:$0xff]
        %v1872 = vld [vmem:[#allocation3 + $0x98] sm:$0xf]
        %v1873 = vld [vmem:[#allocation3 + $0x9c] sm:$0xff]
        %v1874 = vld [vmem:[#allocation3 + $0xa4] sm:$0xf]
        %v1875 = vld [vmem:[#allocation3 + $0xa8] sm:$0xff]
        %v1876 = vld [vmem:[#allocation3 + $0xb0] sm:$0xf]
        %v1877 = vld [vmem:[#allocation3 + $0xb4] sm:$0xff]
        %v1878 = vld [vmem:[#allocation3 + $0xbc] sm:$0xf]
        %v1879 = vld [vmem:[#allocation3 + $0xc0] sm:$0xff]
        %v1880 = vld [vmem:[#allocation3 + $0xc8] sm:$0xf]
        %v1881 = vld [vmem:[#allocation3 + $0xcc] sm:$0xff]
        %v1882 = vld [vmem:[#allocation3 + $0xd4] sm:$0xf]
        %v1883 = vld [vmem:[#allocation3 + $0xd8] sm:$0xff]
        %v1884 = vld [vmem:[#allocation3 + $0xe0] sm:$0xf]
        %v1885 = vld [vmem:[#allocation3 + $0xe4] sm:$0xff]
        %v1886 = vld [vmem:[#allocation3 + $0xec] sm:$0xf]
        %v1887 = vld [vmem:[#allocation3 + $0xf0] sm:$0xff]
        %v1888 = vld [vmem:[#allocation3 + $0xf8] sm:$0xf]
        %v1889 = vld [vmem:[#allocation3 + $0xfc] sm:$0xff]
        %v1890 = vld [vmem:[#allocation3 + $0x104] sm:$0xf]
        %v1891 = vld [vmem:[#allocation3 + $0x108] sm:$0xff]
        %v1892 = vld [vmem:[#allocation3 + $0x110] sm:$0xf]
        %v1893 = vld [vmem:[#allocation3 + $0x114] sm:$0xff]
        %v1894 = vld [vmem:[#allocation3 + $0x11c] sm:$0xf]
        %v1895 = vld [vmem:[#allocation3 + $0x120] sm:$0xff]
        %v1896 = vld [vmem:[#allocation3 + $0x128] sm:$0xf]
        %v1897 = vld [vmem:[#allocation3 + $0x12c] sm:$0xff]
        %v1898 = vld [vmem:[#allocation3 + $0x134] sm:$0xf]
        %v1899 = vld [vmem:[#allocation3 + $0x138] sm:$0xff]
        %v1900 = vld [vmem:[#allocation3 + $0x140] sm:$0xf]
        %v1901 = vld [vmem:[#allocation3 + $0x144] sm:$0xff]
        %v1902 = vld [vmem:[#allocation3 + $0x14c] sm:$0xf]
        %v1903 = vld [vmem:[#allocation3 + $0x150] sm:$0xff]
        %v1904 = vld [vmem:[#allocation3 + $0x158] sm:$0xf]
        %v1905 = vld [vmem:[#allocation3 + $0x15c] sm:$0xff]
        %v1906 = vld [vmem:[#allocation3 + $0x164] sm:$0xf]
        %v1907 = vld [vmem:[#allocation3 + $0x168] sm:$0xff]
        %v1908 = vld [vmem:[#allocation3 + $0x170] sm:$0xf]
        %v1909 = vld [vmem:[#allocation3 + $0x174] sm:$0xff]
        %v1910 = vld [vmem:[#allocation3 + $0x17c] sm:$0xf]
        %v1911 = vld [vmem:[%s3] sm:$0xf]
        %v1912 = vld [vmem:[%s3 + $0x4] sm:$0xf]
        %v1913 = vld [vmem:[%s3 + $0x8] sm:$0xf]
        %v1914 = vld [vmem:[%s3 + $0xc] sm:$0xf]
        %v1915 = vld [vmem:[%s3 + $0x10] sm:$0xf]
        %v1916 = vld [vmem:[%s3 + $0x14] sm:$0xf]
        %v1917 = vld [vmem:[%s3 + $0x18] sm:$0xf]
        %v1918 = vld [vmem:[%s3 + $0x1c] sm:$0xf]
        %v1919 = vld [vmem:[%s3 + $0x20] sm:$0xf]
        %v1920 = vld [vmem:[%s3 + $0x24] sm:$0xf]
        %v1921 = vld [vmem:[%s3 + $0x28] sm:$0xf]
        %v1922 = vld [vmem:[%s3 + $0x2c] sm:$0xf]
        %v1923 = vld [vmem:[%s3 + $0x30] sm:$0xf]
        %v1924 = vld [vmem:[%s3 + $0x34] sm:$0xf]
        %v1925 = vld [vmem:[%s3 + $0x38] sm:$0xf]
        %v1926 = vld [vmem:[%s3 + $0x3c] sm:$0xf]
        %v1927 = vld [vmem:[%s3 + $0x40] sm:$0xf]
        %v1928 = vld [vmem:[%s3 + $0x44] sm:$0xf]
        %v1929 = vld [vmem:[%s3 + $0x48] sm:$0xf]
        %v1930 = vld [vmem:[%s3 + $0x4c] sm:$0xf]
        %v1931 = vld [vmem:[%s3 + $0x50] sm:$0xf]
        %v1932 = vld [vmem:[%s3 + $0x54] sm:$0xf]
        %v1933 = vld [vmem:[%s3 + $0x58] sm:$0xf]
        %v1934 = vld [vmem:[%s3 + $0x5c] sm:$0xf]
        %v1935 = vld [vmem:[%s3 + $0x60] sm:$0xf]
        %v1936 = vld [vmem:[%s3 + $0x64] sm:$0xf]
        %v1937 = vld [vmem:[%s3 + $0x68] sm:$0xf]
        %v1938 = vld [vmem:[%s3 + $0x6c] sm:$0xf]
        %v1939 = vld [vmem:[%s3 + $0x70] sm:$0xf]
        %v1940 = vld [vmem:[%s3 + $0x74] sm:$0xf]
        %v1941 = vld [vmem:[%s3 + $0x78] sm:$0xf]
        %v1942 = vld [vmem:[%s3 + $0x7c] sm:$0xf]
        %v1943 = vld [vmem:[%s3 + $0x80] sm:$0xf]
        %v1944 = vld [vmem:[%s3 + $0x84] sm:$0xf]
        %v1945 = vld [vmem:[%s3 + $0x88] sm:$0xf]
        %v1946 = vld [vmem:[%s3 + $0x8c] sm:$0xf]
        %v1947 = vld [vmem:[%s3 + $0x90] sm:$0xf]
        %v1948 = vld [vmem:[%s3 + $0x94] sm:$0xf]
        %v1949 = vld [vmem:[%s3 + $0x98] sm:$0xf]
        %v1950 = vld [vmem:[%s3 + $0x9c] sm:$0xf]
        %v1951 = vld [vmem:[%s3 + $0xa0] sm:$0xf]
        %v1952 = vld [vmem:[%s3 + $0xa4] sm:$0xf]
        %v1953 = vld [vmem:[%s3 + $0xa8] sm:$0xf]
        %v1954 = vld [vmem:[%s3 + $0xac] sm:$0xf]
        %v1955 = vld [vmem:[%s3 + $0xb0] sm:$0xf]
        %v1956 = vld [vmem:[%s3 + $0xb4] sm:$0xf]
        %v1957 = vld [vmem:[%s3 + $0xb8] sm:$0xf]
        %v1958 = vld [vmem:[%s3 + $0xbc] sm:$0xf]
        %v1959 = vld [vmem:[#allocation3 + $0x180] sm:$0xff]
        %v1960 = vld [vmem:[#allocation3 + $0x188] sm:$0xf]
        %v1961 = vld [vmem:[#allocation3 + $0x18c] sm:$0xff]
        %v1962 = vld [vmem:[#allocation3 + $0x194] sm:$0xf]
        %s1963 = scalar_lea.vmem %s3, 192
        %v1964 = vld [vmem:[%s1963] sm:$0xf]
        %v1965 = vld [vmem:[%s1963 + $0x4] sm:$0xf]
        %v1966 = vld [vmem:[%s1963 + $0x8] sm:$0xf]
        %v1967 = vld [vmem:[%s1963 + $0xc] sm:$0xf]
        %v1968 = vld [vmem:[%s1963 + $0x10] sm:$0xf]
        %v1969 = vld [vmem:[%s1963 + $0x14] sm:$0xf]
        %v1970 = vld [vmem:[%s1963 + $0x18] sm:$0xf]
        %v1971 = vld [vmem:[%s1963 + $0x1c] sm:$0xf]
        %v1972 = vld [vmem:[%s1963 + $0x20] sm:$0xf]
        %v1973 = vld [vmem:[%s1963 + $0x24] sm:$0xf]
        %v1974 = vld [vmem:[%s1963 + $0x28] sm:$0xf]
        %v1975 = vld [vmem:[%s1963 + $0x2c] sm:$0xf]
        %v1976 = vld [vmem:[%s1963 + $0x30] sm:$0xf]
        %v1977 = vld [vmem:[%s1963 + $0x34] sm:$0xf]
        %v1978 = vld [vmem:[%s1963 + $0x38] sm:$0xf]
        %v1979 = vld [vmem:[%s1963 + $0x3c] sm:$0xf]
        %v1980 = vld [vmem:[%s1963 + $0x40] sm:$0xf]
        %v1981 = vld [vmem:[%s1963 + $0x44] sm:$0xf]
        %v1982 = vld [vmem:[%s1963 + $0x48] sm:$0xf]
        %v1983 = vld [vmem:[%s1963 + $0x4c] sm:$0xf]
        %v1984 = vld [vmem:[%s1963 + $0x50] sm:$0xf]
        %v1985 = vld [vmem:[%s1963 + $0x54] sm:$0xf]
        %v1986 = vld [vmem:[%s1963 + $0x58] sm:$0xf]
        %v1987 = vld [vmem:[%s1963 + $0x5c] sm:$0xf]
        %v1988 = vld [vmem:[%s1963 + $0x60] sm:$0xf]
        %v1989 = vld [vmem:[%s1963 + $0x64] sm:$0xf]
        %v1990 = vld [vmem:[%s1963 + $0x68] sm:$0xf]
        %v1991 = vld [vmem:[%s1963 + $0x6c] sm:$0xf]
        %v1992 = vld [vmem:[%s1963 + $0x70] sm:$0xf]
        %v1993 = vld [vmem:[%s1963 + $0x74] sm:$0xf]
        %v1994 = vld [vmem:[%s1963 + $0x78] sm:$0xf]
        %v1995 = vld [vmem:[%s1963 + $0x7c] sm:$0xf]
        %v1996 = vld [vmem:[%s1963 + $0x80] sm:$0xf]
        %v1997 = vld [vmem:[%s1963 + $0x84] sm:$0xf]
        %v1998 = vld [vmem:[%s1963 + $0x88] sm:$0xf]
        %v1999 = vld [vmem:[%s1963 + $0x8c] sm:$0xf]
        %v2000 = vld [vmem:[%s1963 + $0x90] sm:$0xf]
        %v2001 = vld [vmem:[%s1963 + $0x94] sm:$0xf]
        %v2002 = vld [vmem:[%s1963 + $0x98] sm:$0xf]
        %v2003 = vld [vmem:[%s1963 + $0x9c] sm:$0xf]
        %v2004 = vld [vmem:[%s1963 + $0xa0] sm:$0xf]
        %v2005 = vld [vmem:[%s1963 + $0xa4] sm:$0xf]
        %v2006 = vld [vmem:[%s1963 + $0xa8] sm:$0xf]
        %v2007 = vld [vmem:[%s1963 + $0xac] sm:$0xf]
        %v2008 = vld [vmem:[%s1963 + $0xb0] sm:$0xf]
        %v2009 = vld [vmem:[%s1963 + $0xb4] sm:$0xf]
        %v2010 = vld [vmem:[%s1963 + $0xb8] sm:$0xf]
        %v2011 = vld [vmem:[%s1963 + $0xbc] sm:$0xf]
        %v2076 = vunpack.c.l.b16 %v1851
        %v2077 = vunpack.c.h.b16 %v1851
        %v2078 = vunpack.c.l.b16 %v1852
        %v2079 = vunpack.c.l.b16 %v1853
        %v2080 = vunpack.c.h.b16 %v1853
        %v2081 = vunpack.c.l.b16 %v1854
        %v2082 = vunpack.c.l.b16 %v1855
        %v2083 = vunpack.c.h.b16 %v1855
        %v2084 = vunpack.c.l.b16 %v1856
        %v2085 = vunpack.c.l.b16 %v1857
        %v2086 = vunpack.c.h.b16 %v1857
        %v2087 = vunpack.c.l.b16 %v1858
        %v2088 = vunpack.c.l.b16 %v1859
        %v2089 = vunpack.c.h.b16 %v1859
        %v2090 = vunpack.c.l.b16 %v1860
        %v2091 = vunpack.c.l.b16 %v1861
        %v2092 = vunpack.c.h.b16 %v1861
        %v2093 = vunpack.c.l.b16 %v1862
        %v2094 = vunpack.c.l.b16 %v1863
        %v2095 = vunpack.c.h.b16 %v1863
        %v2096 = vunpack.c.l.b16 %v1864
        %v2097 = vunpack.c.l.b16 %v1865
        %v2098 = vunpack.c.h.b16 %v1865
        %v2099 = vunpack.c.l.b16 %v1866
        %v2100 = vunpack.c.l.b16 %v1867
        %v2101 = vunpack.c.h.b16 %v1867
        %v2102 = vunpack.c.l.b16 %v1868
        %v2103 = vunpack.c.l.b16 %v1869
        %v2104 = vunpack.c.h.b16 %v1869
        %v2105 = vunpack.c.l.b16 %v1870
        %v2106 = vunpack.c.l.b16 %v1871
        %v2107 = vunpack.c.h.b16 %v1871
        %v2108 = vunpack.c.l.b16 %v1872
        %v2109 = vunpack.c.l.b16 %v1873
        %v2110 = vunpack.c.h.b16 %v1873
        %v2111 = vunpack.c.l.b16 %v1874
        %v2112 = vunpack.c.l.b16 %v1875
        %v2113 = vunpack.c.h.b16 %v1875
        %v2114 = vunpack.c.l.b16 %v1876
        %v2115 = vunpack.c.l.b16 %v1877
        %v2116 = vunpack.c.h.b16 %v1877
        %v2117 = vunpack.c.l.b16 %v1878
        %v2118 = vunpack.c.l.b16 %v1879
        %v2119 = vunpack.c.h.b16 %v1879
        %v2120 = vunpack.c.l.b16 %v1880
        %v2121 = vunpack.c.l.b16 %v1881
        %v2122 = vunpack.c.h.b16 %v1881
        %v2123 = vunpack.c.l.b16 %v1882
        %v2124 = vunpack.c.l.b16 %v1883
        %v2125 = vunpack.c.h.b16 %v1883
        %v2126 = vunpack.c.l.b16 %v1884
        %v2127 = vunpack.c.l.b16 %v1885
        %v2128 = vunpack.c.h.b16 %v1885
        %v2129 = vunpack.c.l.b16 %v1886
        %v2130 = vunpack.c.l.b16 %v1887
        %v2131 = vunpack.c.h.b16 %v1887
        %v2132 = vunpack.c.l.b16 %v1888
        %v2133 = vunpack.c.l.b16 %v1889
        %v2134 = vunpack.c.h.b16 %v1889
        %v2135 = vunpack.c.l.b16 %v1890
        %v2136 = vunpack.c.l.b16 %v1891
        %v2137 = vunpack.c.h.b16 %v1891
        %v2138 = vunpack.c.l.b16 %v1892
        %v2139 = vunpack.c.l.b16 %v1893
        %v2140 = vunpack.c.h.b16 %v1893
        %v2141 = vunpack.c.l.b16 %v1894
        %v2142 = vunpack.c.l.b16 %v1895
        %v2143 = vunpack.c.h.b16 %v1895
        %v2144 = vunpack.c.l.b16 %v1896
        %v2145 = vunpack.c.l.b16 %v1897
        %v2146 = vunpack.c.h.b16 %v1897
        %v2147 = vunpack.c.l.b16 %v1898
        %v2148 = vunpack.c.l.b16 %v1899
        %v2149 = vunpack.c.h.b16 %v1899
        %v2150 = vunpack.c.l.b16 %v1900
        %v2151 = vunpack.c.l.b16 %v1901
        %v2152 = vunpack.c.h.b16 %v1901
        %v2153 = vunpack.c.l.b16 %v1902
        %v2154 = vunpack.c.l.b16 %v1903
        %v2155 = vunpack.c.h.b16 %v1903
        %v2156 = vunpack.c.l.b16 %v1904
        %v2157 = vunpack.c.l.b16 %v1905
        %v2158 = vunpack.c.h.b16 %v1905
        %v2159 = vunpack.c.l.b16 %v1906
        %v2160 = vunpack.c.l.b16 %v1907
        %v2161 = vunpack.c.h.b16 %v1907
        %v2162 = vunpack.c.l.b16 %v1908
        %v2163 = vunpack.c.l.b16 %v1909
        %v2164 = vunpack.c.h.b16 %v1909
        %v2165 = vunpack.c.l.b16 %v1910
        %v2166 = vunpack.c.l.b16 %v1959
        %v2167 = vunpack.c.h.b16 %v1959
        %v2168 = vunpack.c.l.b16 %v1960
        %v2169 = vunpack.c.l.b16 %v1961
        %v2170 = vunpack.c.h.b16 %v1961
        %v2171 = vunpack.c.l.b16 %v1962
        %v2172 = vpack.c.b16 %v2079, %v2076
        %v2173 = vpack.c.b16 %v2080, %v2077
        %v2174 = vpack.c.b16 %v2081, %v2078
        %v2175 = vpack.c.b16 %v2085, %v2082
        %v2176 = vpack.c.b16 %v2086, %v2083
        %v2177 = vpack.c.b16 %v2087, %v2084
        %v2178 = vpack.c.b16 %v2091, %v2088
        %v2179 = vpack.c.b16 %v2092, %v2089
        %v2180 = vpack.c.b16 %v2093, %v2090
        %v2181 = vpack.c.b16 %v2097, %v2094
        %v2182 = vpack.c.b16 %v2098, %v2095
        %v2183 = vpack.c.b16 %v2099, %v2096
        %v2184 = vpack.c.b16 %v2103, %v2100
        %v2185 = vpack.c.b16 %v2104, %v2101
        %v2186 = vpack.c.b16 %v2105, %v2102
        %v2187 = vpack.c.b16 %v2109, %v2106
        %v2188 = vpack.c.b16 %v2110, %v2107
        %v2189 = vpack.c.b16 %v2111, %v2108
        %v2190 = vpack.c.b16 %v2115, %v2112
        %v2191 = vpack.c.b16 %v2116, %v2113
        %v2192 = vpack.c.b16 %v2117, %v2114
        %v2193 = vpack.c.b16 %v2121, %v2118
        %v2194 = vpack.c.b16 %v2122, %v2119
        %v2195 = vpack.c.b16 %v2123, %v2120
        %v2196 = vpack.c.b16 %v2127, %v2124
        %v2197 = vpack.c.b16 %v2128, %v2125
        %v2198 = vpack.c.b16 %v2129, %v2126
        %v2199 = vpack.c.b16 %v2133, %v2130
        %v2200 = vpack.c.b16 %v2134, %v2131
        %v2201 = vpack.c.b16 %v2135, %v2132
        %v2202 = vpack.c.b16 %v2139, %v2136
        %v2203 = vpack.c.b16 %v2140, %v2137
        %v2204 = vpack.c.b16 %v2141, %v2138
        %v2205 = vpack.c.b16 %v2145, %v2142
        %v2206 = vpack.c.b16 %v2146, %v2143
        %v2207 = vpack.c.b16 %v2147, %v2144
        %v2208 = vpack.c.b16 %v2151, %v2148
        %v2209 = vpack.c.b16 %v2152, %v2149
        %v2210 = vpack.c.b16 %v2153, %v2150
        %v2211 = vpack.c.b16 %v2157, %v2154
        %v2212 = vpack.c.b16 %v2158, %v2155
        %v2213 = vpack.c.b16 %v2159, %v2156
        %v2214 = vpack.c.b16 %v2163, %v2160
        %v2215 = vpack.c.b16 %v2164, %v2161
        %v2216 = vpack.c.b16 %v2165, %v2162
        %v2217 = vpack.c.b16 %v2169, %v2166
        %v2218 = vpack.c.b16 %v2170, %v2167
        %v2219 = vpack.c.b16 %v2171, %v2168
        %v2316 = vunpack.c.l.b16 %v1964
        %v2317 = vunpack.c.l.b16 %v1965
        %v2318 = vunpack.c.l.b16 %v1966
        %v2319 = vunpack.c.l.b16 %v1967
        %v2320 = vunpack.c.l.b16 %v1968
        %v2321 = vunpack.c.l.b16 %v1969
        %v2322 = vunpack.c.l.b16 %v1970
        %v2323 = vunpack.c.l.b16 %v1971
        %v2324 = vunpack.c.l.b16 %v1972
        %v2325 = vunpack.c.l.b16 %v1973
        %v2326 = vunpack.c.l.b16 %v1974
        %v2327 = vunpack.c.l.b16 %v1975
        %v2328 = vunpack.c.l.b16 %v1976
        %v2329 = vunpack.c.l.b16 %v1977
        %v2330 = vunpack.c.l.b16 %v1978
        %v2331 = vunpack.c.l.b16 %v1979
        %v2332 = vunpack.c.l.b16 %v1980
        %v2333 = vunpack.c.l.b16 %v1981
        %v2334 = vunpack.c.l.b16 %v1982
        %v2335 = vunpack.c.l.b16 %v1983
        %v2336 = vunpack.c.l.b16 %v1984
        %v2337 = vunpack.c.l.b16 %v1985
        %v2338 = vunpack.c.l.b16 %v1986
        %v2339 = vunpack.c.l.b16 %v1987
        %v2340 = vunpack.c.l.b16 %v1988
        %v2341 = vunpack.c.l.b16 %v1989
        %v2342 = vunpack.c.l.b16 %v1990
        %v2343 = vunpack.c.l.b16 %v1991
        %v2344 = vunpack.c.l.b16 %v1992
        %v2345 = vunpack.c.l.b16 %v1993
        %v2346 = vunpack.c.l.b16 %v1994
        %v2347 = vunpack.c.l.b16 %v1995
        %v2348 = vunpack.c.l.b16 %v1996
        %v2349 = vunpack.c.l.b16 %v1997
        %v2350 = vunpack.c.l.b16 %v1998
        %v2351 = vunpack.c.l.b16 %v1999
        %v2352 = vunpack.c.l.b16 %v2000
        %v2353 = vunpack.c.l.b16 %v2001
        %v2354 = vunpack.c.l.b16 %v2002
        %v2355 = vunpack.c.l.b16 %v2003
        %v2356 = vunpack.c.l.b16 %v2004
        %v2357 = vunpack.c.l.b16 %v2005
        %v2358 = vunpack.c.l.b16 %v2006
        %v2359 = vunpack.c.l.b16 %v2007
        %v2360 = vunpack.c.l.b16 %v2008
        %v2361 = vunpack.c.l.b16 %v2009
        %v2362 = vunpack.c.l.b16 %v2010
        %v2363 = vunpack.c.l.b16 %v2011
        %v2364 = vpack.c.b16 %v2317, %v2316
        %v2365 = vpack.c.b16 %v2319, %v2318
        %v2366 = vpack.c.b16 %v2321, %v2320
        %v2367 = vpack.c.b16 %v2323, %v2322
        %v2368 = vpack.c.b16 %v2325, %v2324
        %v2369 = vpack.c.b16 %v2327, %v2326
        %v2370 = vpack.c.b16 %v2329, %v2328
        %v2371 = vpack.c.b16 %v2331, %v2330
        %v2372 = vpack.c.b16 %v2333, %v2332
        %v2373 = vpack.c.b16 %v2335, %v2334
        %v2374 = vpack.c.b16 %v2337, %v2336
        %v2375 = vpack.c.b16 %v2339, %v2338
        %v2376 = vpack.c.b16 %v2341, %v2340
        %v2377 = vpack.c.b16 %v2343, %v2342
        %v2378 = vpack.c.b16 %v2345, %v2344
        %v2379 = vpack.c.b16 %v2347, %v2346
        %v2380 = vpack.c.b16 %v2349, %v2348
        %v2381 = vpack.c.b16 %v2351, %v2350
        %v2382 = vpack.c.b16 %v2353, %v2352
        %v2383 = vpack.c.b16 %v2355, %v2354
        %v2384 = vpack.c.b16 %v2357, %v2356
        %v2385 = vpack.c.b16 %v2359, %v2358
        %v2386 = vpack.c.b16 %v2361, %v2360
        %v2387 = vpack.c.b16 %v2363, %v2362
        %2412 = vmatprep.subr.bf16.mxu0 0
        %2413 = vmatpush1.bf16.msra.mxu0 %v2371
        %2414 = vmatprep.subr.bf16.mxu0 0
        %2415 = vmatpush1.bf16.msra.mxu0 %v2370
        %2416 = vmatprep.subr.bf16.mxu0 0
        %2417 = vmatpush1.bf16.msra.mxu0 %v2369
        %2418 = vmatprep.subr.bf16.mxu0 0
        %2419 = vmatpush1.bf16.msra.mxu0 %v2368
        %2420 = vmatprep.subr.bf16.mxu0 0
        %2421 = vmatpush1.bf16.msra.mxu0 %v2367
        %2422 = vmatprep.subr.bf16.mxu0 0
        %2423 = vmatpush1.bf16.msra.mxu0 %v2366
        %2424 = vmatprep.subr.bf16.mxu0 0
        %2425 = vmatpush1.bf16.msra.mxu0 %v2365
        %2426 = vmatprep.subr.bf16.mxu0 0
        %2427 = vmatpush1.bf16.msra.mxu0 %v2364
        %2428 = vmatprep.subr.bf16.mxu0 0
        %2429 = vmatpush2.bf16.msra.mxu0 %v2379
        %2430 = vmatprep.subr.bf16.mxu0 0
        %2431 = vmatpush2.bf16.msra.mxu0 %v2378
        %2432 = vmatprep.subr.bf16.mxu0 0
        %2433 = vmatpush2.bf16.msra.mxu0 %v2377
        %2434 = vmatprep.subr.bf16.mxu0 0
        %2435 = vmatpush2.bf16.msra.mxu0 %v2376
        %2436 = vmatprep.subr.bf16.mxu0 0
        %2437 = vmatpush2.bf16.msra.mxu0 %v2375
        %2438 = vmatprep.subr.bf16.mxu0 0
        %2439 = vmatpush2.bf16.msra.mxu0 %v2374
        %2440 = vmatprep.subr.bf16.mxu0 0
        %2441 = vmatpush2.bf16.msra.mxu0 %v2373
        %2442 = vmatprep.subr.bf16.mxu0 0
        %2443 = vmatpush2.bf16.msra.mxu0 %v2372
        %2444 = vmatprep.mubr.bf16.mxu0 %v2173
        %2445 = vmatmul.mubr.bf16.gmra.mxu0 %v2172
        %v2446 = vpop.f32.mrf.mxu0
        %v2447 = vadd.f32 0.0, %v2446
        %v2448 = vpop.f32.mrf.mxu0
        %v2449 = vpop.f32.mrf.mxu0
        %v2450 = vadd.f32 0.0, %v2449
        %v2451 = vpop.f32.mrf.mxu0
        %2452 = vmatprep.mubr.bf16.mxu0 %v2176
        %2453 = vmatmul.mubr.bf16.gmra.mxu0 %v2175
        %v2454 = vpop.f32.mrf.mxu0
        %v2455 = vadd.f32 0.0, %v2454
        %v2456 = vpop.f32.mrf.mxu0
        %v2457 = vpop.f32.mrf.mxu0
        %v2458 = vadd.f32 0.0, %v2457
        %v2459 = vpop.f32.mrf.mxu0
        %2460 = vmatprep.mubr.bf16.mxu0 %v2179
        %2461 = vmatmul.mubr.bf16.gmra.mxu0 %v2178
        %v2462 = vpop.f32.mrf.mxu0
        %v2463 = vadd.f32 0.0, %v2462
        %v2464 = vpop.f32.mrf.mxu0
        %v2465 = vpop.f32.mrf.mxu0
        %v2466 = vadd.f32 0.0, %v2465
        %v2467 = vpop.f32.mrf.mxu0
        %2468 = vmatprep.mubr.bf16.mxu0 %v2182
        %2469 = vmatmul.mubr.bf16.gmra.mxu0 %v2181
        %v2470 = vpop.f32.mrf.mxu0
        %v2471 = vadd.f32 0.0, %v2470
        %v2472 = vpop.f32.mrf.mxu0
        %v2473 = vpop.f32.mrf.mxu0
        %v2474 = vadd.f32 0.0, %v2473
        %v2475 = vpop.f32.mrf.mxu0
        %2476 = vmatprep.mubr.bf16.mxu0 %v2185
        %2477 = vmatmul.mubr.bf16.gmra.mxu0 %v2184
        %v2478 = vpop.f32.mrf.mxu0
        %v2479 = vadd.f32 0.0, %v2478
        %v2480 = vpop.f32.mrf.mxu0
        %v2481 = vpop.f32.mrf.mxu0
        %v2482 = vadd.f32 0.0, %v2481
        %v2483 = vpop.f32.mrf.mxu0
        %2484 = vmatprep.mubr.bf16.mxu0 %v2188
        %2485 = vmatmul.mubr.bf16.gmra.mxu0 %v2187
        %v2486 = vpop.f32.mrf.mxu0
        %v2487 = vadd.f32 0.0, %v2486
        %v2488 = vpop.f32.mrf.mxu0
        %v2489 = vpop.f32.mrf.mxu0
        %v2490 = vadd.f32 0.0, %v2489
        %v2491 = vpop.f32.mrf.mxu0
        %2492 = vmatprep.mubr.bf16.mxu0 %v2191
        %2493 = vmatmul.mubr.bf16.gmra.mxu0 %v2190
        %v2494 = vpop.f32.mrf.mxu0
        %v2495 = vadd.f32 0.0, %v2494
        %v2496 = vpop.f32.mrf.mxu0
        %v2497 = vpop.f32.mrf.mxu0
        %v2498 = vadd.f32 0.0, %v2497
        %v2499 = vpop.f32.mrf.mxu0
        %2500 = vmatprep.mubr.bf16.mxu0 %v2194
        %2501 = vmatmul.mubr.bf16.gmra.mxu0 %v2193
        %v2502 = vpop.f32.mrf.mxu0
        %v2503 = vadd.f32 0.0, %v2502
        %v2504 = vpop.f32.mrf.mxu0
        %v2505 = vpop.f32.mrf.mxu0
        %v2506 = vadd.f32 0.0, %v2505
        %v2507 = vpop.f32.mrf.mxu0
        %2508 = vmatprep.mubr.bf16.mxu0 %v2197
        %2509 = vmatmul.mubr.bf16.gmra.mxu0 %v2196
        %v2510 = vpop.f32.mrf.mxu0
        %v2511 = vadd.f32 0.0, %v2510
        %v2512 = vpop.f32.mrf.mxu0
        %v2513 = vpop.f32.mrf.mxu0
        %v2514 = vadd.f32 0.0, %v2513
        %v2515 = vpop.f32.mrf.mxu0
        %2516 = vmatprep.mubr.bf16.mxu0 %v2200
        %2517 = vmatmul.mubr.bf16.gmra.mxu0 %v2199
        %v2518 = vpop.f32.mrf.mxu0
        %v2519 = vadd.f32 0.0, %v2518
        %v2520 = vpop.f32.mrf.mxu0
        %v2521 = vpop.f32.mrf.mxu0
        %v2522 = vadd.f32 0.0, %v2521
        %v2523 = vpop.f32.mrf.mxu0
        %2524 = vmatprep.mubr.bf16.mxu0 %v2203
        %2525 = vmatmul.mubr.bf16.gmra.mxu0 %v2202
        %v2526 = vpop.f32.mrf.mxu0
        %v2527 = vadd.f32 0.0, %v2526
        %v2528 = vpop.f32.mrf.mxu0
        %v2529 = vpop.f32.mrf.mxu0
        %v2530 = vadd.f32 0.0, %v2529
        %v2531 = vpop.f32.mrf.mxu0
        %2532 = vmatprep.mubr.bf16.mxu0 %v2206
        %2533 = vmatmul.mubr.bf16.gmra.mxu0 %v2205
        %v2534 = vpop.f32.mrf.mxu0
        %v2535 = vadd.f32 0.0, %v2534
        %v2536 = vpop.f32.mrf.mxu0
        %v2537 = vpop.f32.mrf.mxu0
        %v2538 = vadd.f32 0.0, %v2537
        %v2539 = vpop.f32.mrf.mxu0
        %2540 = vmatprep.mubr.bf16.mxu0 %v2209
        %2541 = vmatmul.mubr.bf16.gmra.mxu0 %v2208
        %v2542 = vpop.f32.mrf.mxu0
        %v2543 = vadd.f32 0.0, %v2542
        %v2544 = vpop.f32.mrf.mxu0
        %v2545 = vpop.f32.mrf.mxu0
        %v2546 = vadd.f32 0.0, %v2545
        %v2547 = vpop.f32.mrf.mxu0
        %2548 = vmatprep.mubr.bf16.mxu0 %v2212
        %2549 = vmatmul.mubr.bf16.gmra.mxu0 %v2211
        %v2550 = vpop.f32.mrf.mxu0
        %v2551 = vadd.f32 0.0, %v2550
        %v2552 = vpop.f32.mrf.mxu0
        %v2553 = vpop.f32.mrf.mxu0
        %v2554 = vadd.f32 0.0, %v2553
        %v2555 = vpop.f32.mrf.mxu0
        %2556 = vmatprep.mubr.bf16.mxu0 %v2215
        %2557 = vmatmul.mubr.bf16.gmra.mxu0 %v2214
        %v2558 = vpop.f32.mrf.mxu0
        %v2559 = vadd.f32 0.0, %v2558
        %v2560 = vpop.f32.mrf.mxu0
        %v2561 = vpop.f32.mrf.mxu0
        %v2562 = vadd.f32 0.0, %v2561
        %v2563 = vpop.f32.mrf.mxu0
        %2564 = vmatprep.mubr.bf16.mxu0 %v2218
        %2565 = vmatmul.mubr.bf16.gmra.mxu0 %v2217
        %v2566 = vpop.f32.mrf.mxu0
        %v2567 = vadd.f32 0.0, %v2566
        %v2568 = vpop.f32.mrf.mxu0
        %v2569 = vpop.f32.mrf.mxu0
        %v2570 = vadd.f32 0.0, %v2569
        %v2571 = vpop.f32.mrf.mxu0
        %2572 = vdwg.mxu0
        %2573 = vmatprep.subr.bf16.mxu0 0
        %2574 = vmatpush1.bf16.msra.mxu0 %v2387
        %2575 = vmatprep.subr.bf16.mxu0 0
        %2576 = vmatpush1.bf16.msra.mxu0 %v2386
        %2577 = vmatprep.subr.bf16.mxu0 0
        %2578 = vmatpush1.bf16.msra.mxu0 %v2385
        %2579 = vmatprep.subr.bf16.mxu0 0
        %2580 = vmatpush1.bf16.msra.mxu0 %v2384
        %2581 = vmatprep.subr.bf16.mxu0 0
        %2582 = vmatpush1.bf16.msra.mxu0 %v2383
        %2583 = vmatprep.subr.bf16.mxu0 0
        %2584 = vmatpush1.bf16.msra.mxu0 %v2382
        %2585 = vmatprep.subr.bf16.mxu0 0
        %2586 = vmatpush1.bf16.msra.mxu0 %v2381
        %2587 = vmatprep.subr.bf16.mxu0 0
        %2588 = vmatpush1.bf16.msra.mxu0 %v2380
        %2589 = vmatprep.subr.bf16.mxu0 0
        %2590 = vmatpush2.bf16.msra.mxu0 0
        %2591 = vmatprep.subr.bf16.mxu0 0
        %2592 = vmatpush2.bf16.msra.mxu0 0
        %2593 = vmatprep.subr.bf16.mxu0 0
        %2594 = vmatpush2.bf16.msra.mxu0 0
        %2595 = vmatprep.subr.bf16.mxu0 0
        %2596 = vmatpush2.bf16.msra.mxu0 0
        %2597 = vmatprep.subr.bf16.mxu0 0
        %2598 = vmatpush2.bf16.msra.mxu0 0
        %2599 = vmatprep.subr.bf16.mxu0 0
        %2600 = vmatpush2.bf16.msra.mxu0 0
        %2601 = vmatprep.subr.bf16.mxu0 0
        %2602 = vmatpush2.bf16.msra.mxu0 0
        %2603 = vmatprep.subr.bf16.mxu0 0
        %2604 = vmatpush2.bf16.msra.mxu0 0
        %2605 = vmatprep.mubr.bf16.mxu0 0
        %2606 = vmatmul.mubr.bf16.gmra.mxu0 %v2174
        %v2607 = vpop.f32.mrf.mxu0
        %v2608 = vadd.f32 %v2447, %v2607
        %v2609 = vpop.f32.mrf.mxu0
        %v2610 = vpop.f32.mrf.mxu0
        %v2611 = vadd.f32 %v2450, %v2610
        %v2612 = vpop.f32.mrf.mxu0
        %2613 = vmatprep.mubr.bf16.mxu0 0
        %2614 = vmatmul.mubr.bf16.gmra.mxu0 %v2177
        %v2615 = vpop.f32.mrf.mxu0
        %v2616 = vadd.f32 %v2455, %v2615
        %v2617 = vpop.f32.mrf.mxu0
        %v2618 = vpop.f32.mrf.mxu0
        %v2619 = vadd.f32 %v2458, %v2618
        %v2620 = vpop.f32.mrf.mxu0
        %2621 = vmatprep.mubr.bf16.mxu0 0
        %2622 = vmatmul.mubr.bf16.gmra.mxu0 %v2180
        %v2623 = vpop.f32.mrf.mxu0
        %v2624 = vadd.f32 %v2463, %v2623
        %v2625 = vpop.f32.mrf.mxu0
        %v2626 = vpop.f32.mrf.mxu0
        %v2627 = vadd.f32 %v2466, %v2626
        %v2628 = vpop.f32.mrf.mxu0
        %2629 = vmatprep.mubr.bf16.mxu0 0
        %2630 = vmatmul.mubr.bf16.gmra.mxu0 %v2183
        %v2631 = vpop.f32.mrf.mxu0
        %v2632 = vadd.f32 %v2471, %v2631
        %v2633 = vpop.f32.mrf.mxu0
        %v2634 = vpop.f32.mrf.mxu0
        %v2635 = vadd.f32 %v2474, %v2634
        %v2636 = vpop.f32.mrf.mxu0
        %2637 = vmatprep.mubr.bf16.mxu0 0
        %2638 = vmatmul.mubr.bf16.gmra.mxu0 %v2186
        %v2639 = vpop.f32.mrf.mxu0
        %v2640 = vadd.f32 %v2479, %v2639
        %v2641 = vpop.f32.mrf.mxu0
        %v2642 = vpop.f32.mrf.mxu0
        %v2643 = vadd.f32 %v2482, %v2642
        %v2644 = vpop.f32.mrf.mxu0
        %2645 = vmatprep.mubr.bf16.mxu0 0
        %2646 = vmatmul.mubr.bf16.gmra.mxu0 %v2189
        %v2647 = vpop.f32.mrf.mxu0
        %v2648 = vadd.f32 %v2487, %v2647
        %v2649 = vpop.f32.mrf.mxu0
        %v2650 = vpop.f32.mrf.mxu0
        %v2651 = vadd.f32 %v2490, %v2650
        %v2652 = vpop.f32.mrf.mxu0
        %2653 = vmatprep.mubr.bf16.mxu0 0
        %2654 = vmatmul.mubr.bf16.gmra.mxu0 %v2192
        %v2655 = vpop.f32.mrf.mxu0
        %v2656 = vadd.f32 %v2495, %v2655
        %v2657 = vpop.f32.mrf.mxu0
        %v2658 = vpop.f32.mrf.mxu0
        %v2659 = vadd.f32 %v2498, %v2658
        %v2660 = vpop.f32.mrf.mxu0
        %2661 = vmatprep.mubr.bf16.mxu0 0
        %2662 = vmatmul.mubr.bf16.gmra.mxu0 %v2195
        %v2663 = vpop.f32.mrf.mxu0
        %v2664 = vadd.f32 %v2503, %v2663
        %v2665 = vpop.f32.mrf.mxu0
        %v2666 = vpop.f32.mrf.mxu0
        %v2667 = vadd.f32 %v2506, %v2666
        %v2668 = vpop.f32.mrf.mxu0
        %2669 = vmatprep.mubr.bf16.mxu0 0
        %2670 = vmatmul.mubr.bf16.gmra.mxu0 %v2198
        %v2671 = vpop.f32.mrf.mxu0
        %v2672 = vadd.f32 %v2511, %v2671
        %v2673 = vpop.f32.mrf.mxu0
        %v2674 = vpop.f32.mrf.mxu0
        %v2675 = vadd.f32 %v2514, %v2674
        %v2676 = vpop.f32.mrf.mxu0
        %2677 = vmatprep.mubr.bf16.mxu0 0
        %2678 = vmatmul.mubr.bf16.gmra.mxu0 %v2201
        %v2679 = vpop.f32.mrf.mxu0
        %v2680 = vadd.f32 %v2519, %v2679
        %v2681 = vpop.f32.mrf.mxu0
        %v2682 = vpop.f32.mrf.mxu0
        %v2683 = vadd.f32 %v2522, %v2682
        %v2684 = vpop.f32.mrf.mxu0
        %2685 = vmatprep.mubr.bf16.mxu0 0
        %2686 = vmatmul.mubr.bf16.gmra.mxu0 %v2204
        %v2687 = vpop.f32.mrf.mxu0
        %v2688 = vadd.f32 %v2527, %v2687
        %v2689 = vpop.f32.mrf.mxu0
        %v2690 = vpop.f32.mrf.mxu0
        %v2691 = vadd.f32 %v2530, %v2690
        %v2692 = vpop.f32.mrf.mxu0
        %2693 = vmatprep.mubr.bf16.mxu0 0
        %2694 = vmatmul.mubr.bf16.gmra.mxu0 %v2207
        %v2695 = vpop.f32.mrf.mxu0
        %v2696 = vadd.f32 %v2535, %v2695
        %v2697 = vpop.f32.mrf.mxu0
        %v2698 = vpop.f32.mrf.mxu0
        %v2699 = vadd.f32 %v2538, %v2698
        %v2700 = vpop.f32.mrf.mxu0
        %2701 = vmatprep.mubr.bf16.mxu0 0
        %2702 = vmatmul.mubr.bf16.gmra.mxu0 %v2210
        %v2703 = vpop.f32.mrf.mxu0
        %v2704 = vadd.f32 %v2543, %v2703
        %v2705 = vpop.f32.mrf.mxu0
        %v2706 = vpop.f32.mrf.mxu0
        %v2707 = vadd.f32 %v2546, %v2706
        %v2708 = vpop.f32.mrf.mxu0
        %2709 = vmatprep.mubr.bf16.mxu0 0
        %2710 = vmatmul.mubr.bf16.gmra.mxu0 %v2213
        %v2711 = vpop.f32.mrf.mxu0
        %v2712 = vadd.f32 %v2551, %v2711
        %v2713 = vpop.f32.mrf.mxu0
        %v2714 = vpop.f32.mrf.mxu0
        %v2715 = vadd.f32 %v2554, %v2714
        %v2716 = vpop.f32.mrf.mxu0
        %2717 = vmatprep.mubr.bf16.mxu0 0
        %2718 = vmatmul.mubr.bf16.gmra.mxu0 %v2216
        %v2719 = vpop.f32.mrf.mxu0
        %v2720 = vadd.f32 %v2559, %v2719
        %v2721 = vpop.f32.mrf.mxu0
        %v2722 = vpop.f32.mrf.mxu0
        %v2723 = vadd.f32 %v2562, %v2722
        %v2724 = vpop.f32.mrf.mxu0
        %2725 = vmatprep.mubr.bf16.mxu0 0
        %2726 = vmatmul.mubr.bf16.gmra.mxu0 %v2219
        %v2727 = vpop.f32.mrf.mxu0
        %v2728 = vadd.f32 %v2567, %v2727
        %v2729 = vpop.f32.mrf.mxu0
        %v2730 = vpop.f32.mrf.mxu0
        %v2731 = vadd.f32 %v2570, %v2730
        %v2732 = vpop.f32.mrf.mxu0
        %2733 = vdwg.mxu0
        %v2738 = vunpack.c.l.b16 %v1847
        %v2739 = vunpack.c.h.b16 %v1847
        %v2740 = vunpack.c.l.b16 %v1848
        %v2741 = vunpack.c.l.b16 %v1849
        %v2742 = vunpack.c.h.b16 %v1849
        %v2743 = vunpack.c.l.b16 %v1850
        %v2744 = vpack.c.b16 %v2741, %v2738
        %v2745 = vpack.c.b16 %v2742, %v2739
        %v2746 = vpack.c.b16 %v2743, %v2740
        %v2798 = vunpack.c.l.b16 %v1911
        %v2799 = vunpack.c.l.b16 %v1912
        %v2800 = vunpack.c.l.b16 %v1913
        %v2801 = vunpack.c.l.b16 %v1914
        %v2802 = vunpack.c.l.b16 %v1915
        %v2803 = vunpack.c.l.b16 %v1916
        %v2804 = vunpack.c.l.b16 %v1917
        %v2805 = vunpack.c.l.b16 %v1918
        %v2806 = vunpack.c.l.b16 %v1919
        %v2807 = vunpack.c.l.b16 %v1920
        %v2808 = vunpack.c.l.b16 %v1921
        %v2809 = vunpack.c.l.b16 %v1922
        %v2810 = vunpack.c.l.b16 %v1923
        %v2811 = vunpack.c.l.b16 %v1924
        %v2812 = vunpack.c.l.b16 %v1925
        %v2813 = vunpack.c.l.b16 %v1926
        %v2814 = vunpack.c.l.b16 %v1927
        %v2815 = vunpack.c.l.b16 %v1928
        %v2816 = vunpack.c.l.b16 %v1929
        %v2817 = vunpack.c.l.b16 %v1930
        %v2818 = vunpack.c.l.b16 %v1931
        %v2819 = vunpack.c.l.b16 %v1932
        %v2820 = vunpack.c.l.b16 %v1933
        %v2821 = vunpack.c.l.b16 %v1934
        %v2822 = vunpack.c.l.b16 %v1935
        %v2823 = vunpack.c.l.b16 %v1936
        %v2824 = vunpack.c.l.b16 %v1937
        %v2825 = vunpack.c.l.b16 %v1938
        %v2826 = vunpack.c.l.b16 %v1939
        %v2827 = vunpack.c.l.b16 %v1940
        %v2828 = vunpack.c.l.b16 %v1941
        %v2829 = vunpack.c.l.b16 %v1942
        %v2830 = vunpack.c.l.b16 %v1943
        %v2831 = vunpack.c.l.b16 %v1944
        %v2832 = vunpack.c.l.b16 %v1945
        %v2833 = vunpack.c.l.b16 %v1946
        %v2834 = vunpack.c.l.b16 %v1947
        %v2835 = vunpack.c.l.b16 %v1948
        %v2836 = vunpack.c.l.b16 %v1949
        %v2837 = vunpack.c.l.b16 %v1950
        %v2838 = vunpack.c.l.b16 %v1951
        %v2839 = vunpack.c.l.b16 %v1952
        %v2840 = vunpack.c.l.b16 %v1953
        %v2841 = vunpack.c.l.b16 %v1954
        %v2842 = vunpack.c.l.b16 %v1955
        %v2843 = vunpack.c.l.b16 %v1956
        %v2844 = vunpack.c.l.b16 %v1957
        %v2845 = vunpack.c.l.b16 %v1958
        %v2846 = vpack.c.b16 %v2799, %v2798
        %v2847 = vpack.c.b16 %v2801, %v2800
        %v2848 = vpack.c.b16 %v2803, %v2802
        %v2849 = vpack.c.b16 %v2805, %v2804
        %v2850 = vpack.c.b16 %v2807, %v2806
        %v2851 = vpack.c.b16 %v2809, %v2808
        %v2852 = vpack.c.b16 %v2811, %v2810
        %v2853 = vpack.c.b16 %v2813, %v2812
        %v2854 = vpack.c.b16 %v2815, %v2814
        %v2855 = vpack.c.b16 %v2817, %v2816
        %v2856 = vpack.c.b16 %v2819, %v2818
        %v2857 = vpack.c.b16 %v2821, %v2820
        %v2858 = vpack.c.b16 %v2823, %v2822
        %v2859 = vpack.c.b16 %v2825, %v2824
        %v2860 = vpack.c.b16 %v2827, %v2826
        %v2861 = vpack.c.b16 %v2829, %v2828
        %v2862 = vpack.c.b16 %v2831, %v2830
        %v2863 = vpack.c.b16 %v2833, %v2832
        %v2864 = vpack.c.b16 %v2835, %v2834
        %v2865 = vpack.c.b16 %v2837, %v2836
        %v2866 = vpack.c.b16 %v2839, %v2838
        %v2867 = vpack.c.b16 %v2841, %v2840
        %v2868 = vpack.c.b16 %v2843, %v2842
        %v2869 = vpack.c.b16 %v2845, %v2844
        %2894 = vmatprep.subr.bf16.mxu0 0
        %2895 = vmatpush1.bf16.msra.mxu0 %v2853
        %2896 = vmatprep.subr.bf16.mxu0 0
        %2897 = vmatpush1.bf16.msra.mxu0 %v2852
        %2898 = vmatprep.subr.bf16.mxu0 0
        %2899 = vmatpush1.bf16.msra.mxu0 %v2851
        %2900 = vmatprep.subr.bf16.mxu0 0
        %2901 = vmatpush1.bf16.msra.mxu0 %v2850
        %2902 = vmatprep.subr.bf16.mxu0 0
        %2903 = vmatpush1.bf16.msra.mxu0 %v2849
        %2904 = vmatprep.subr.bf16.mxu0 0
        %2905 = vmatpush1.bf16.msra.mxu0 %v2848
        %2906 = vmatprep.subr.bf16.mxu0 0
        %2907 = vmatpush1.bf16.msra.mxu0 %v2847
        %2908 = vmatprep.subr.bf16.mxu0 0
        %2909 = vmatpush1.bf16.msra.mxu0 %v2846
        %2910 = vmatprep.subr.bf16.mxu0 0
        %2911 = vmatpush2.bf16.msra.mxu0 %v2861
        %2912 = vmatprep.subr.bf16.mxu0 0
        %2913 = vmatpush2.bf16.msra.mxu0 %v2860
        %2914 = vmatprep.subr.bf16.mxu0 0
        %2915 = vmatpush2.bf16.msra.mxu0 %v2859
        %2916 = vmatprep.subr.bf16.mxu0 0
        %2917 = vmatpush2.bf16.msra.mxu0 %v2858
        %2918 = vmatprep.subr.bf16.mxu0 0
        %2919 = vmatpush2.bf16.msra.mxu0 %v2857
        %2920 = vmatprep.subr.bf16.mxu0 0
        %2921 = vmatpush2.bf16.msra.mxu0 %v2856
        %2922 = vmatprep.subr.bf16.mxu0 0
        %2923 = vmatpush2.bf16.msra.mxu0 %v2855
        %2924 = vmatprep.subr.bf16.mxu0 0
        %2925 = vmatpush2.bf16.msra.mxu0 %v2854
        %2926 = vmatprep.mubr.bf16.mxu0 %v2745
        %2927 = vmatmul.mubr.bf16.gmra.mxu0 %v2744
        %v2928 = vpop.f32.mrf.mxu0
        %v2929 = vadd.f32 %v2608, %v2928
        %v2930 = vpop.f32.mrf.mxu0
        %v2931 = vpop.f32.mrf.mxu0
        %v2932 = vadd.f32 %v2611, %v2931
        %v2933 = vpop.f32.mrf.mxu0
        %2934 = vmatprep.mubr.bf16.mxu0 %v2173
        %2935 = vmatmul.mubr.bf16.gmra.mxu0 %v2172
        %v2936 = vpop.f32.mrf.mxu0
        %v2937 = vadd.f32 %v2616, %v2936
        %v2938 = vpop.f32.mrf.mxu0
        %v2939 = vpop.f32.mrf.mxu0
        %v2940 = vadd.f32 %v2619, %v2939
        %v2941 = vpop.f32.mrf.mxu0
        %2942 = vmatprep.mubr.bf16.mxu0 %v2176
        %2943 = vmatmul.mubr.bf16.gmra.mxu0 %v2175
        %v2944 = vpop.f32.mrf.mxu0
        %v2945 = vadd.f32 %v2624, %v2944
        %v2946 = vpop.f32.mrf.mxu0
        %v2947 = vpop.f32.mrf.mxu0
        %v2948 = vadd.f32 %v2627, %v2947
        %v2949 = vpop.f32.mrf.mxu0
        %2950 = vmatprep.mubr.bf16.mxu0 %v2179
        %2951 = vmatmul.mubr.bf16.gmra.mxu0 %v2178
        %v2952 = vpop.f32.mrf.mxu0
        %v2953 = vadd.f32 %v2632, %v2952
        %v2954 = vpop.f32.mrf.mxu0
        %v2955 = vpop.f32.mrf.mxu0
        %v2956 = vadd.f32 %v2635, %v2955
        %v2957 = vpop.f32.mrf.mxu0
        %2958 = vmatprep.mubr.bf16.mxu0 %v2182
        %2959 = vmatmul.mubr.bf16.gmra.mxu0 %v2181
        %v2960 = vpop.f32.mrf.mxu0
        %v2961 = vadd.f32 %v2640, %v2960
        %v2962 = vpop.f32.mrf.mxu0
        %v2963 = vpop.f32.mrf.mxu0
        %v2964 = vadd.f32 %v2643, %v2963
        %v2965 = vpop.f32.mrf.mxu0
        %2966 = vmatprep.mubr.bf16.mxu0 %v2185
        %2967 = vmatmul.mubr.bf16.gmra.mxu0 %v2184
        %v2968 = vpop.f32.mrf.mxu0
        %v2969 = vadd.f32 %v2648, %v2968
        %v2970 = vpop.f32.mrf.mxu0
        %v2971 = vpop.f32.mrf.mxu0
        %v2972 = vadd.f32 %v2651, %v2971
        %v2973 = vpop.f32.mrf.mxu0
        %2974 = vmatprep.mubr.bf16.mxu0 %v2188
        %2975 = vmatmul.mubr.bf16.gmra.mxu0 %v2187
        %v2976 = vpop.f32.mrf.mxu0
        %v2977 = vadd.f32 %v2656, %v2976
        %v2978 = vpop.f32.mrf.mxu0
        %v2979 = vpop.f32.mrf.mxu0
        %v2980 = vadd.f32 %v2659, %v2979
        %v2981 = vpop.f32.mrf.mxu0
        %2982 = vmatprep.mubr.bf16.mxu0 %v2191
        %2983 = vmatmul.mubr.bf16.gmra.mxu0 %v2190
        %v2984 = vpop.f32.mrf.mxu0
        %v2985 = vadd.f32 %v2664, %v2984
        %v2986 = vpop.f32.mrf.mxu0
        %v2987 = vpop.f32.mrf.mxu0
        %v2988 = vadd.f32 %v2667, %v2987
        %v2989 = vpop.f32.mrf.mxu0
        %2990 = vmatprep.mubr.bf16.mxu0 %v2194
        %2991 = vmatmul.mubr.bf16.gmra.mxu0 %v2193
        %v2992 = vpop.f32.mrf.mxu0
        %v2993 = vadd.f32 %v2672, %v2992
        %v2994 = vpop.f32.mrf.mxu0
        %v2995 = vpop.f32.mrf.mxu0
        %v2996 = vadd.f32 %v2675, %v2995
        %v2997 = vpop.f32.mrf.mxu0
        %2998 = vmatprep.mubr.bf16.mxu0 %v2197
        %2999 = vmatmul.mubr.bf16.gmra.mxu0 %v2196
        %v3000 = vpop.f32.mrf.mxu0
        %v3001 = vadd.f32 %v2680, %v3000
        %v3002 = vpop.f32.mrf.mxu0
        %v3003 = vpop.f32.mrf.mxu0
        %v3004 = vadd.f32 %v2683, %v3003
        %v3005 = vpop.f32.mrf.mxu0
        %3006 = vmatprep.mubr.bf16.mxu0 %v2200
        %3007 = vmatmul.mubr.bf16.gmra.mxu0 %v2199
        %v3008 = vpop.f32.mrf.mxu0
        %v3009 = vadd.f32 %v2688, %v3008
        %v3010 = vpop.f32.mrf.mxu0
        %v3011 = vpop.f32.mrf.mxu0
        %v3012 = vadd.f32 %v2691, %v3011
        %v3013 = vpop.f32.mrf.mxu0
        %3014 = vmatprep.mubr.bf16.mxu0 %v2203
        %3015 = vmatmul.mubr.bf16.gmra.mxu0 %v2202
        %v3016 = vpop.f32.mrf.mxu0
        %v3017 = vadd.f32 %v2696, %v3016
        %v3018 = vpop.f32.mrf.mxu0
        %v3019 = vpop.f32.mrf.mxu0
        %v3020 = vadd.f32 %v2699, %v3019
        %v3021 = vpop.f32.mrf.mxu0
        %3022 = vmatprep.mubr.bf16.mxu0 %v2206
        %3023 = vmatmul.mubr.bf16.gmra.mxu0 %v2205
        %v3024 = vpop.f32.mrf.mxu0
        %v3025 = vadd.f32 %v2704, %v3024
        %v3026 = vpop.f32.mrf.mxu0
        %v3027 = vpop.f32.mrf.mxu0
        %v3028 = vadd.f32 %v2707, %v3027
        %v3029 = vpop.f32.mrf.mxu0
        %3030 = vmatprep.mubr.bf16.mxu0 %v2209
        %3031 = vmatmul.mubr.bf16.gmra.mxu0 %v2208
        %v3032 = vpop.f32.mrf.mxu0
        %v3033 = vadd.f32 %v2712, %v3032
        %v3034 = vpop.f32.mrf.mxu0
        %v3035 = vpop.f32.mrf.mxu0
        %v3036 = vadd.f32 %v2715, %v3035
        %v3037 = vpop.f32.mrf.mxu0
        %3038 = vmatprep.mubr.bf16.mxu0 %v2212
        %3039 = vmatmul.mubr.bf16.gmra.mxu0 %v2211
        %v3040 = vpop.f32.mrf.mxu0
        %v3041 = vadd.f32 %v2720, %v3040
        %v3042 = vpop.f32.mrf.mxu0
        %v3043 = vpop.f32.mrf.mxu0
        %v3044 = vadd.f32 %v2723, %v3043
        %v3045 = vpop.f32.mrf.mxu0
        %3046 = vmatprep.mubr.bf16.mxu0 %v2215
        %3047 = vmatmul.mubr.bf16.gmra.mxu0 %v2214
        %v3048 = vpop.f32.mrf.mxu0
        %v3049 = vadd.f32 %v2728, %v3048
        %v3050 = vpop.f32.mrf.mxu0
        %v3051 = vpop.f32.mrf.mxu0
        %v3052 = vadd.f32 %v2731, %v3051
        %v3053 = vpop.f32.mrf.mxu0
        %3054 = vdwg.mxu0
        %3055 = vmatprep.subr.bf16.mxu0 0
        %3056 = vmatpush1.bf16.msra.mxu0 %v2869
        %3057 = vmatprep.subr.bf16.mxu0 0
        %3058 = vmatpush1.bf16.msra.mxu0 %v2868
        %3059 = vmatprep.subr.bf16.mxu0 0
        %3060 = vmatpush1.bf16.msra.mxu0 %v2867
        %3061 = vmatprep.subr.bf16.mxu0 0
        %3062 = vmatpush1.bf16.msra.mxu0 %v2866
        %3063 = vmatprep.subr.bf16.mxu0 0
        %3064 = vmatpush1.bf16.msra.mxu0 %v2865
        %3065 = vmatprep.subr.bf16.mxu0 0
        %3066 = vmatpush1.bf16.msra.mxu0 %v2864
        %3067 = vmatprep.subr.bf16.mxu0 0
        %3068 = vmatpush1.bf16.msra.mxu0 %v2863
        %3069 = vmatprep.subr.bf16.mxu0 0
        %3070 = vmatpush1.bf16.msra.mxu0 %v2862
        %3071 = vmatprep.subr.bf16.mxu0 0
        %3072 = vmatpush2.bf16.msra.mxu0 0
        %3073 = vmatprep.subr.bf16.mxu0 0
        %3074 = vmatpush2.bf16.msra.mxu0 0
        %3075 = vmatprep.subr.bf16.mxu0 0
        %3076 = vmatpush2.bf16.msra.mxu0 0
        %3077 = vmatprep.subr.bf16.mxu0 0
        %3078 = vmatpush2.bf16.msra.mxu0 0
        %3079 = vmatprep.subr.bf16.mxu0 0
        %3080 = vmatpush2.bf16.msra.mxu0 0
        %3081 = vmatprep.subr.bf16.mxu0 0
        %3082 = vmatpush2.bf16.msra.mxu0 0
        %3083 = vmatprep.subr.bf16.mxu0 0
        %3084 = vmatpush2.bf16.msra.mxu0 0
        %3085 = vmatprep.subr.bf16.mxu0 0
        %3086 = vmatpush2.bf16.msra.mxu0 0
        %3087 = vmatprep.mubr.bf16.mxu0 0
        %3088 = vmatmul.mubr.bf16.gmra.mxu0 %v2746
        %v3089 = vpop.f32.mrf.mxu0
        %v3090 = vadd.f32 %v2929, %v3089
        %v3091 = vpop.f32.mrf.mxu0
        %v3092 = vpop.f32.mrf.mxu0
        %v3093 = vadd.f32 %v2932, %v3092
        %v3094 = vpop.f32.mrf.mxu0
        %3095 = vmatprep.mubr.bf16.mxu0 0
        %3096 = vmatmul.mubr.bf16.gmra.mxu0 %v2174
        %v3097 = vpop.f32.mrf.mxu0
        %v3098 = vadd.f32 %v2937, %v3097
        %v3099 = vpop.f32.mrf.mxu0
        %v3100 = vpop.f32.mrf.mxu0
        %v3101 = vadd.f32 %v2940, %v3100
        %v3102 = vpop.f32.mrf.mxu0
        %3103 = vmatprep.mubr.bf16.mxu0 0
        %3104 = vmatmul.mubr.bf16.gmra.mxu0 %v2177
        %v3105 = vpop.f32.mrf.mxu0
        %v3106 = vadd.f32 %v2945, %v3105
        %v3107 = vpop.f32.mrf.mxu0
        %v3108 = vpop.f32.mrf.mxu0
        %v3109 = vadd.f32 %v2948, %v3108
        %v3110 = vpop.f32.mrf.mxu0
        %3111 = vmatprep.mubr.bf16.mxu0 0
        %3112 = vmatmul.mubr.bf16.gmra.mxu0 %v2180
        %v3113 = vpop.f32.mrf.mxu0
        %v3114 = vadd.f32 %v2953, %v3113
        %v3115 = vpop.f32.mrf.mxu0
        %v3116 = vpop.f32.mrf.mxu0
        %v3117 = vadd.f32 %v2956, %v3116
        %v3118 = vpop.f32.mrf.mxu0
        %3119 = vmatprep.mubr.bf16.mxu0 0
        %3120 = vmatmul.mubr.bf16.gmra.mxu0 %v2183
        %v3121 = vpop.f32.mrf.mxu0
        %v3122 = vadd.f32 %v2961, %v3121
        %v3123 = vpop.f32.mrf.mxu0
        %v3124 = vpop.f32.mrf.mxu0
        %v3125 = vadd.f32 %v2964, %v3124
        %v3126 = vpop.f32.mrf.mxu0
        %3127 = vmatprep.mubr.bf16.mxu0 0
        %3128 = vmatmul.mubr.bf16.gmra.mxu0 %v2186
        %v3129 = vpop.f32.mrf.mxu0
        %v3130 = vadd.f32 %v2969, %v3129
        %v3131 = vpop.f32.mrf.mxu0
        %v3132 = vpop.f32.mrf.mxu0
        %v3133 = vadd.f32 %v2972, %v3132
        %v3134 = vpop.f32.mrf.mxu0
        %3135 = vmatprep.mubr.bf16.mxu0 0
        %3136 = vmatmul.mubr.bf16.gmra.mxu0 %v2189
        %v3137 = vpop.f32.mrf.mxu0
        %v3138 = vadd.f32 %v2977, %v3137
        %v3139 = vpop.f32.mrf.mxu0
        %v3140 = vpop.f32.mrf.mxu0
        %v3141 = vadd.f32 %v2980, %v3140
        %v3142 = vpop.f32.mrf.mxu0
        %3143 = vmatprep.mubr.bf16.mxu0 0
        %3144 = vmatmul.mubr.bf16.gmra.mxu0 %v2192
        %v3145 = vpop.f32.mrf.mxu0
        %v3146 = vadd.f32 %v2985, %v3145
        %v3147 = vpop.f32.mrf.mxu0
        %v3148 = vpop.f32.mrf.mxu0
        %v3149 = vadd.f32 %v2988, %v3148
        %v3150 = vpop.f32.mrf.mxu0
        %3151 = vmatprep.mubr.bf16.mxu0 0
        %3152 = vmatmul.mubr.bf16.gmra.mxu0 %v2195
        %v3153 = vpop.f32.mrf.mxu0
        %v3154 = vadd.f32 %v2993, %v3153
        %v3155 = vpop.f32.mrf.mxu0
        %v3156 = vpop.f32.mrf.mxu0
        %v3157 = vadd.f32 %v2996, %v3156
        %v3158 = vpop.f32.mrf.mxu0
        %3159 = vmatprep.mubr.bf16.mxu0 0
        %3160 = vmatmul.mubr.bf16.gmra.mxu0 %v2198
        %v3161 = vpop.f32.mrf.mxu0
        %v3162 = vadd.f32 %v3001, %v3161
        %v3163 = vpop.f32.mrf.mxu0
        %v3164 = vpop.f32.mrf.mxu0
        %v3165 = vadd.f32 %v3004, %v3164
        %v3166 = vpop.f32.mrf.mxu0
        %3167 = vmatprep.mubr.bf16.mxu0 0
        %3168 = vmatmul.mubr.bf16.gmra.mxu0 %v2201
        %v3169 = vpop.f32.mrf.mxu0
        %v3170 = vadd.f32 %v3009, %v3169
        %v3171 = vpop.f32.mrf.mxu0
        %v3172 = vpop.f32.mrf.mxu0
        %v3173 = vadd.f32 %v3012, %v3172
        %v3174 = vpop.f32.mrf.mxu0
        %3175 = vmatprep.mubr.bf16.mxu0 0
        %3176 = vmatmul.mubr.bf16.gmra.mxu0 %v2204
        %v3177 = vpop.f32.mrf.mxu0
        %v3178 = vadd.f32 %v3017, %v3177
        %v3179 = vpop.f32.mrf.mxu0
        %v3180 = vpop.f32.mrf.mxu0
        %v3181 = vadd.f32 %v3020, %v3180
        %v3182 = vpop.f32.mrf.mxu0
        %3183 = vmatprep.mubr.bf16.mxu0 0
        %3184 = vmatmul.mubr.bf16.gmra.mxu0 %v2207
        %v3185 = vpop.f32.mrf.mxu0
        %v3186 = vadd.f32 %v3025, %v3185
        %v3187 = vpop.f32.mrf.mxu0
        %v3188 = vpop.f32.mrf.mxu0
        %v3189 = vadd.f32 %v3028, %v3188
        %v3190 = vpop.f32.mrf.mxu0
        %3191 = vmatprep.mubr.bf16.mxu0 0
        %3192 = vmatmul.mubr.bf16.gmra.mxu0 %v2210
        %v3193 = vpop.f32.mrf.mxu0
        %v3194 = vadd.f32 %v3033, %v3193
        %v3195 = vpop.f32.mrf.mxu0
        %v3196 = vpop.f32.mrf.mxu0
        %v3197 = vadd.f32 %v3036, %v3196
        %v3198 = vpop.f32.mrf.mxu0
        %3199 = vmatprep.mubr.bf16.mxu0 0
        %3200 = vmatmul.mubr.bf16.gmra.mxu0 %v2213
        %v3201 = vpop.f32.mrf.mxu0
        %v3202 = vadd.f32 %v3041, %v3201
        %v3203 = vpop.f32.mrf.mxu0
        %v3204 = vpop.f32.mrf.mxu0
        %v3205 = vadd.f32 %v3044, %v3204
        %v3206 = vpop.f32.mrf.mxu0
        %3207 = vmatprep.mubr.bf16.mxu0 0
        %3208 = vmatmul.mubr.bf16.gmra.mxu0 %v2216
        %v3209 = vpop.f32.mrf.mxu0
        %v3210 = vadd.f32 %v3049, %v3209
        %v3211 = vpop.f32.mrf.mxu0
        %v3212 = vpop.f32.mrf.mxu0
        %v3213 = vadd.f32 %v3052, %v3212
        %v3214 = vpop.f32.mrf.mxu0
        %3215 = vdwg.mxu0
        %v3216 = vld [vmem:[#allocation3 + $0x30] sm:$0xff]
        %v3217 = vld [vmem:[#allocation3 + $0x38] sm:$0xf]
        %v3218 = vld [vmem:[#allocation3 + $0x3c] sm:$0xff]
        %v3219 = vld [vmem:[#allocation3 + $0x44] sm:$0xf]
        %v3220 = vld [vmem:[#allocation3 + $0x48] sm:$0xff]
        %v3221 = vld [vmem:[#allocation3 + $0x50] sm:$0xf]
        %v3222 = vld [vmem:[#allocation3 + $0x54] sm:$0xff]
        %v3223 = vld [vmem:[#allocation3 + $0x5c] sm:$0xf]
        %v3224 = vld [vmem:[#allocation3 + $0x60] sm:$0xff]
        %v3225 = vld [vmem:[#allocation3 + $0x68] sm:$0xf]
        %v3226 = vld [vmem:[#allocation3 + $0x6c] sm:$0xff]
        %v3227 = vld [vmem:[#allocation3 + $0x74] sm:$0xf]
        %v3228 = vld [vmem:[#allocation3 + $0x78] sm:$0xff]
        %v3229 = vld [vmem:[#allocation3 + $0x80] sm:$0xf]
        %v3230 = vld [vmem:[#allocation3 + $0x84] sm:$0xff]
        %v3231 = vld [vmem:[#allocation3 + $0x8c] sm:$0xf]
        %v3232 = vld [vmem:[#allocation3 + $0x90] sm:$0xff]
        %v3233 = vld [vmem:[#allocation3 + $0x98] sm:$0xf]
        %v3234 = vld [vmem:[#allocation3 + $0x9c] sm:$0xff]
        %v3235 = vld [vmem:[#allocation3 + $0xa4] sm:$0xf]
        %v3236 = vld [vmem:[#allocation3 + $0xa8] sm:$0xff]
        %v3237 = vld [vmem:[#allocation3 + $0xb0] sm:$0xf]
        %v3238 = vld [vmem:[#allocation3 + $0xb4] sm:$0xff]
        %v3239 = vld [vmem:[#allocation3 + $0xbc] sm:$0xf]
        %v3240 = vld [vmem:[#allocation3 + $0xc0] sm:$0xff]
        %v3241 = vld [vmem:[#allocation3 + $0xc8] sm:$0xf]
        %v3242 = vld [vmem:[#allocation3 + $0xcc] sm:$0xff]
        %v3243 = vld [vmem:[#allocation3 + $0xd4] sm:$0xf]
        %v3244 = vld [vmem:[#allocation3 + $0xd8] sm:$0xff]
        %v3245 = vld [vmem:[#allocation3 + $0xe0] sm:$0xf]
        %v3246 = vld [vmem:[#allocation3 + $0xe4] sm:$0xff]
        %v3247 = vld [vmem:[#allocation3 + $0xec] sm:$0xf]
        %v3248 = vld [vmem:[#allocation3 + $0xf0] sm:$0xff]
        %v3249 = vld [vmem:[#allocation3 + $0xf8] sm:$0xf]
        %v3250 = vld [vmem:[#allocation3 + $0xfc] sm:$0xff]
        %v3251 = vld [vmem:[#allocation3 + $0x104] sm:$0xf]
        %v3252 = vld [vmem:[#allocation3 + $0x108] sm:$0xff]
        %v3253 = vld [vmem:[#allocation3 + $0x110] sm:$0xf]
        %v3254 = vld [vmem:[#allocation3 + $0x114] sm:$0xff]
        %v3255 = vld [vmem:[#allocation3 + $0x11c] sm:$0xf]
        %v3256 = vld [vmem:[#allocation3 + $0x120] sm:$0xff]
        %v3257 = vld [vmem:[#allocation3 + $0x128] sm:$0xf]
        %v3258 = vld [vmem:[#allocation3 + $0x12c] sm:$0xff]
        %v3259 = vld [vmem:[#allocation3 + $0x134] sm:$0xf]
        %v3260 = vld [vmem:[#allocation3 + $0x138] sm:$0xff]
        %v3261 = vld [vmem:[#allocation3 + $0x140] sm:$0xf]
        %v3262 = vld [vmem:[#allocation3 + $0x144] sm:$0xff]
        %v3263 = vld [vmem:[#allocation3 + $0x14c] sm:$0xf]
        %v3264 = vld [vmem:[#allocation3 + $0x150] sm:$0xff]
        %v3265 = vld [vmem:[#allocation3 + $0x158] sm:$0xf]
        %v3266 = vld [vmem:[#allocation3 + $0x15c] sm:$0xff]
        %v3267 = vld [vmem:[#allocation3 + $0x164] sm:$0xf]
        %v3268 = vld [vmem:[#allocation3 + $0x168] sm:$0xff]
        %v3269 = vld [vmem:[#allocation3 + $0x170] sm:$0xf]
        %v3270 = vld [vmem:[#allocation3 + $0x174] sm:$0xff]
        %v3271 = vld [vmem:[#allocation3 + $0x17c] sm:$0xf]
        %v3272 = vld [vmem:[#allocation3 + $0x180] sm:$0xff]
        %v3273 = vld [vmem:[#allocation3 + $0x188] sm:$0xf]
        %v3274 = vld [vmem:[#allocation3 + $0x18c] sm:$0xff]
        %v3275 = vld [vmem:[#allocation3 + $0x194] sm:$0xf]
        %v3276 = vld [vmem:[#allocation3 + $0x198] sm:$0xff]
        %v3277 = vld [vmem:[#allocation3 + $0x1a0] sm:$0xf]
        %v3278 = vld [vmem:[#allocation3 + $0x1a4] sm:$0xff]
        %v3279 = vld [vmem:[#allocation3 + $0x1ac] sm:$0xf]
        %s3280 = scalar_lea.vmem %s3, 384
        %v3281 = vld [vmem:[%s3280] sm:$0xf]
        %v3282 = vld [vmem:[%s3280 + $0x4] sm:$0xf]
        %v3283 = vld [vmem:[%s3280 + $0x8] sm:$0xf]
        %v3284 = vld [vmem:[%s3280 + $0xc] sm:$0xf]
        %v3285 = vld [vmem:[%s3280 + $0x10] sm:$0xf]
        %v3286 = vld [vmem:[%s3280 + $0x14] sm:$0xf]
        %v3287 = vld [vmem:[%s3280 + $0x18] sm:$0xf]
        %v3288 = vld [vmem:[%s3280 + $0x1c] sm:$0xf]
        %v3289 = vld [vmem:[%s3280 + $0x20] sm:$0xf]
        %v3290 = vld [vmem:[%s3280 + $0x24] sm:$0xf]
        %v3291 = vld [vmem:[%s3280 + $0x28] sm:$0xf]
        %v3292 = vld [vmem:[%s3280 + $0x2c] sm:$0xf]
        %v3293 = vld [vmem:[%s3280 + $0x30] sm:$0xf]
        %v3294 = vld [vmem:[%s3280 + $0x34] sm:$0xf]
        %v3295 = vld [vmem:[%s3280 + $0x38] sm:$0xf]
        %v3296 = vld [vmem:[%s3280 + $0x3c] sm:$0xf]
        %v3297 = vld [vmem:[%s3280 + $0x40] sm:$0xf]
        %v3298 = vld [vmem:[%s3280 + $0x44] sm:$0xf]
        %v3299 = vld [vmem:[%s3280 + $0x48] sm:$0xf]
        %v3300 = vld [vmem:[%s3280 + $0x4c] sm:$0xf]
        %v3301 = vld [vmem:[%s3280 + $0x50] sm:$0xf]
        %v3302 = vld [vmem:[%s3280 + $0x54] sm:$0xf]
        %v3303 = vld [vmem:[%s3280 + $0x58] sm:$0xf]
        %v3304 = vld [vmem:[%s3280 + $0x5c] sm:$0xf]
        %v3305 = vld [vmem:[%s3280 + $0x60] sm:$0xf]
        %v3306 = vld [vmem:[%s3280 + $0x64] sm:$0xf]
        %v3307 = vld [vmem:[%s3280 + $0x68] sm:$0xf]
        %v3308 = vld [vmem:[%s3280 + $0x6c] sm:$0xf]
        %v3309 = vld [vmem:[%s3280 + $0x70] sm:$0xf]
        %v3310 = vld [vmem:[%s3280 + $0x74] sm:$0xf]
        %v3311 = vld [vmem:[%s3280 + $0x78] sm:$0xf]
        %v3312 = vld [vmem:[%s3280 + $0x7c] sm:$0xf]
        %v3313 = vld [vmem:[%s3280 + $0x80] sm:$0xf]
        %v3314 = vld [vmem:[%s3280 + $0x84] sm:$0xf]
        %v3315 = vld [vmem:[%s3280 + $0x88] sm:$0xf]
        %v3316 = vld [vmem:[%s3280 + $0x8c] sm:$0xf]
        %v3317 = vld [vmem:[%s3280 + $0x90] sm:$0xf]
        %v3318 = vld [vmem:[%s3280 + $0x94] sm:$0xf]
        %v3319 = vld [vmem:[%s3280 + $0x98] sm:$0xf]
        %v3320 = vld [vmem:[%s3280 + $0x9c] sm:$0xf]
        %v3321 = vld [vmem:[%s3280 + $0xa0] sm:$0xf]
        %v3322 = vld [vmem:[%s3280 + $0xa4] sm:$0xf]
        %v3323 = vld [vmem:[%s3280 + $0xa8] sm:$0xf]
        %v3324 = vld [vmem:[%s3280 + $0xac] sm:$0xf]
        %v3325 = vld [vmem:[%s3280 + $0xb0] sm:$0xf]
        %v3326 = vld [vmem:[%s3280 + $0xb4] sm:$0xf]
        %v3327 = vld [vmem:[%s3280 + $0xb8] sm:$0xf]
        %v3328 = vld [vmem:[%s3280 + $0xbc] sm:$0xf]
        %v3393 = vunpack.c.l.b16 %v3216
        %v3394 = vunpack.c.h.b16 %v3216
        %v3395 = vunpack.c.l.b16 %v3217
        %v3396 = vunpack.c.l.b16 %v3218
        %v3397 = vunpack.c.h.b16 %v3218
        %v3398 = vunpack.c.l.b16 %v3219
        %v3399 = vunpack.c.l.b16 %v3220
        %v3400 = vunpack.c.h.b16 %v3220
        %v3401 = vunpack.c.l.b16 %v3221
        %v3402 = vunpack.c.l.b16 %v3222
        %v3403 = vunpack.c.h.b16 %v3222
        %v3404 = vunpack.c.l.b16 %v3223
        %v3405 = vunpack.c.l.b16 %v3224
        %v3406 = vunpack.c.h.b16 %v3224
        %v3407 = vunpack.c.l.b16 %v3225
        %v3408 = vunpack.c.l.b16 %v3226
        %v3409 = vunpack.c.h.b16 %v3226
        %v3410 = vunpack.c.l.b16 %v3227
        %v3411 = vunpack.c.l.b16 %v3228
        %v3412 = vunpack.c.h.b16 %v3228
        %v3413 = vunpack.c.l.b16 %v3229
        %v3414 = vunpack.c.l.b16 %v3230
        %v3415 = vunpack.c.h.b16 %v3230
        %v3416 = vunpack.c.l.b16 %v3231
        %v3417 = vunpack.c.l.b16 %v3232
        %v3418 = vunpack.c.h.b16 %v3232
        %v3419 = vunpack.c.l.b16 %v3233
        %v3420 = vunpack.c.l.b16 %v3234
        %v3421 = vunpack.c.h.b16 %v3234
        %v3422 = vunpack.c.l.b16 %v3235
        %v3423 = vunpack.c.l.b16 %v3236
        %v3424 = vunpack.c.h.b16 %v3236
        %v3425 = vunpack.c.l.b16 %v3237
        %v3426 = vunpack.c.l.b16 %v3238
        %v3427 = vunpack.c.h.b16 %v3238
        %v3428 = vunpack.c.l.b16 %v3239
        %v3429 = vunpack.c.l.b16 %v3240
        %v3430 = vunpack.c.h.b16 %v3240
        %v3431 = vunpack.c.l.b16 %v3241
        %v3432 = vunpack.c.l.b16 %v3242
        %v3433 = vunpack.c.h.b16 %v3242
        %v3434 = vunpack.c.l.b16 %v3243
        %v3435 = vunpack.c.l.b16 %v3244
        %v3436 = vunpack.c.h.b16 %v3244
        %v3437 = vunpack.c.l.b16 %v3245
        %v3438 = vunpack.c.l.b16 %v3246
        %v3439 = vunpack.c.h.b16 %v3246
        %v3440 = vunpack.c.l.b16 %v3247
        %v3441 = vunpack.c.l.b16 %v3248
        %v3442 = vunpack.c.h.b16 %v3248
        %v3443 = vunpack.c.l.b16 %v3249
        %v3444 = vunpack.c.l.b16 %v3250
        %v3445 = vunpack.c.h.b16 %v3250
        %v3446 = vunpack.c.l.b16 %v3251
        %v3447 = vunpack.c.l.b16 %v3252
        %v3448 = vunpack.c.h.b16 %v3252
        %v3449 = vunpack.c.l.b16 %v3253
        %v3450 = vunpack.c.l.b16 %v3254
        %v3451 = vunpack.c.h.b16 %v3254
        %v3452 = vunpack.c.l.b16 %v3255
        %v3453 = vunpack.c.l.b16 %v3256
        %v3454 = vunpack.c.h.b16 %v3256
        %v3455 = vunpack.c.l.b16 %v3257
        %v3456 = vunpack.c.l.b16 %v3258
        %v3457 = vunpack.c.h.b16 %v3258
        %v3458 = vunpack.c.l.b16 %v3259
        %v3459 = vunpack.c.l.b16 %v3260
        %v3460 = vunpack.c.h.b16 %v3260
        %v3461 = vunpack.c.l.b16 %v3261
        %v3462 = vunpack.c.l.b16 %v3262
        %v3463 = vunpack.c.h.b16 %v3262
        %v3464 = vunpack.c.l.b16 %v3263
        %v3465 = vunpack.c.l.b16 %v3264
        %v3466 = vunpack.c.h.b16 %v3264
        %v3467 = vunpack.c.l.b16 %v3265
        %v3468 = vunpack.c.l.b16 %v3266
        %v3469 = vunpack.c.h.b16 %v3266
        %v3470 = vunpack.c.l.b16 %v3267
        %v3471 = vunpack.c.l.b16 %v3268
        %v3472 = vunpack.c.h.b16 %v3268
        %v3473 = vunpack.c.l.b16 %v3269
        %v3474 = vunpack.c.l.b16 %v3270
        %v3475 = vunpack.c.h.b16 %v3270
        %v3476 = vunpack.c.l.b16 %v3271
        %v3477 = vunpack.c.l.b16 %v3272
        %v3478 = vunpack.c.h.b16 %v3272
        %v3479 = vunpack.c.l.b16 %v3273
        %v3480 = vunpack.c.l.b16 %v3274
        %v3481 = vunpack.c.h.b16 %v3274
        %v3482 = vunpack.c.l.b16 %v3275
        %v3483 = vunpack.c.l.b16 %v3276
        %v3484 = vunpack.c.h.b16 %v3276
        %v3485 = vunpack.c.l.b16 %v3277
        %v3486 = vunpack.c.l.b16 %v3278
        %v3487 = vunpack.c.h.b16 %v3278
        %v3488 = vunpack.c.l.b16 %v3279
        %v3489 = vpack.c.b16 %v3396, %v3393
        %v3490 = vpack.c.b16 %v3397, %v3394
        %v3491 = vpack.c.b16 %v3398, %v3395
        %v3492 = vpack.c.b16 %v3402, %v3399
        %v3493 = vpack.c.b16 %v3403, %v3400
        %v3494 = vpack.c.b16 %v3404, %v3401
        %v3495 = vpack.c.b16 %v3408, %v3405
        %v3496 = vpack.c.b16 %v3409, %v3406
        %v3497 = vpack.c.b16 %v3410, %v3407
        %v3498 = vpack.c.b16 %v3414, %v3411
        %v3499 = vpack.c.b16 %v3415, %v3412
        %v3500 = vpack.c.b16 %v3416, %v3413
        %v3501 = vpack.c.b16 %v3420, %v3417
        %v3502 = vpack.c.b16 %v3421, %v3418
        %v3503 = vpack.c.b16 %v3422, %v3419
        %v3504 = vpack.c.b16 %v3426, %v3423
        %v3505 = vpack.c.b16 %v3427, %v3424
        %v3506 = vpack.c.b16 %v3428, %v3425
        %v3507 = vpack.c.b16 %v3432, %v3429
        %v3508 = vpack.c.b16 %v3433, %v3430
        %v3509 = vpack.c.b16 %v3434, %v3431
        %v3510 = vpack.c.b16 %v3438, %v3435
        %v3511 = vpack.c.b16 %v3439, %v3436
        %v3512 = vpack.c.b16 %v3440, %v3437
        %v3513 = vpack.c.b16 %v3444, %v3441
        %v3514 = vpack.c.b16 %v3445, %v3442
        %v3515 = vpack.c.b16 %v3446, %v3443
        %v3516 = vpack.c.b16 %v3450, %v3447
        %v3517 = vpack.c.b16 %v3451, %v3448
        %v3518 = vpack.c.b16 %v3452, %v3449
        %v3519 = vpack.c.b16 %v3456, %v3453
        %v3520 = vpack.c.b16 %v3457, %v3454
        %v3521 = vpack.c.b16 %v3458, %v3455
        %v3522 = vpack.c.b16 %v3462, %v3459
        %v3523 = vpack.c.b16 %v3463, %v3460
        %v3524 = vpack.c.b16 %v3464, %v3461
        %v3525 = vpack.c.b16 %v3468, %v3465
        %v3526 = vpack.c.b16 %v3469, %v3466
        %v3527 = vpack.c.b16 %v3470, %v3467
        %v3528 = vpack.c.b16 %v3474, %v3471
        %v3529 = vpack.c.b16 %v3475, %v3472
        %v3530 = vpack.c.b16 %v3476, %v3473
        %v3531 = vpack.c.b16 %v3480, %v3477
        %v3532 = vpack.c.b16 %v3481, %v3478
        %v3533 = vpack.c.b16 %v3482, %v3479
        %v3534 = vpack.c.b16 %v3486, %v3483
        %v3535 = vpack.c.b16 %v3487, %v3484
        %v3536 = vpack.c.b16 %v3488, %v3485
        %v3633 = vunpack.c.l.b16 %v3281
        %v3634 = vunpack.c.l.b16 %v3282
        %v3635 = vunpack.c.l.b16 %v3283
        %v3636 = vunpack.c.l.b16 %v3284
        %v3637 = vunpack.c.l.b16 %v3285
        %v3638 = vunpack.c.l.b16 %v3286
        %v3639 = vunpack.c.l.b16 %v3287
        %v3640 = vunpack.c.l.b16 %v3288
        %v3641 = vunpack.c.l.b16 %v3289
        %v3642 = vunpack.c.l.b16 %v3290
        %v3643 = vunpack.c.l.b16 %v3291
        %v3644 = vunpack.c.l.b16 %v3292
        %v3645 = vunpack.c.l.b16 %v3293
        %v3646 = vunpack.c.l.b16 %v3294
        %v3647 = vunpack.c.l.b16 %v3295
        %v3648 = vunpack.c.l.b16 %v3296
        %v3649 = vunpack.c.l.b16 %v3297
        %v3650 = vunpack.c.l.b16 %v3298
        %v3651 = vunpack.c.l.b16 %v3299
        %v3652 = vunpack.c.l.b16 %v3300
        %v3653 = vunpack.c.l.b16 %v3301
        %v3654 = vunpack.c.l.b16 %v3302
        %v3655 = vunpack.c.l.b16 %v3303
        %v3656 = vunpack.c.l.b16 %v3304
        %v3657 = vunpack.c.l.b16 %v3305
        %v3658 = vunpack.c.l.b16 %v3306
        %v3659 = vunpack.c.l.b16 %v3307
        %v3660 = vunpack.c.l.b16 %v3308
        %v3661 = vunpack.c.l.b16 %v3309
        %v3662 = vunpack.c.l.b16 %v3310
        %v3663 = vunpack.c.l.b16 %v3311
        %v3664 = vunpack.c.l.b16 %v3312
        %v3665 = vunpack.c.l.b16 %v3313
        %v3666 = vunpack.c.l.b16 %v3314
        %v3667 = vunpack.c.l.b16 %v3315
        %v3668 = vunpack.c.l.b16 %v3316
        %v3669 = vunpack.c.l.b16 %v3317
        %v3670 = vunpack.c.l.b16 %v3318
        %v3671 = vunpack.c.l.b16 %v3319
        %v3672 = vunpack.c.l.b16 %v3320
        %v3673 = vunpack.c.l.b16 %v3321
        %v3674 = vunpack.c.l.b16 %v3322
        %v3675 = vunpack.c.l.b16 %v3323
        %v3676 = vunpack.c.l.b16 %v3324
        %v3677 = vunpack.c.l.b16 %v3325
        %v3678 = vunpack.c.l.b16 %v3326
        %v3679 = vunpack.c.l.b16 %v3327
        %v3680 = vunpack.c.l.b16 %v3328
        %v3681 = vpack.c.b16 %v3634, %v3633
        %v3682 = vpack.c.b16 %v3636, %v3635
        %v3683 = vpack.c.b16 %v3638, %v3637
        %v3684 = vpack.c.b16 %v3640, %v3639
        %v3685 = vpack.c.b16 %v3642, %v3641
        %v3686 = vpack.c.b16 %v3644, %v3643
        %v3687 = vpack.c.b16 %v3646, %v3645
        %v3688 = vpack.c.b16 %v3648, %v3647
        %v3689 = vpack.c.b16 %v3650, %v3649
        %v3690 = vpack.c.b16 %v3652, %v3651
        %v3691 = vpack.c.b16 %v3654, %v3653
        %v3692 = vpack.c.b16 %v3656, %v3655
        %v3693 = vpack.c.b16 %v3658, %v3657
        %v3694 = vpack.c.b16 %v3660, %v3659
        %v3695 = vpack.c.b16 %v3662, %v3661
        %v3696 = vpack.c.b16 %v3664, %v3663
        %v3697 = vpack.c.b16 %v3666, %v3665
        %v3698 = vpack.c.b16 %v3668, %v3667
        %v3699 = vpack.c.b16 %v3670, %v3669
        %v3700 = vpack.c.b16 %v3672, %v3671
        %v3701 = vpack.c.b16 %v3674, %v3673
        %v3702 = vpack.c.b16 %v3676, %v3675
        %v3703 = vpack.c.b16 %v3678, %v3677
        %v3704 = vpack.c.b16 %v3680, %v3679
        %3729 = vmatprep.subr.bf16.mxu0 0
        %3730 = vmatpush1.bf16.msra.mxu0 %v3688
        %3731 = vmatprep.subr.bf16.mxu0 0
        %3732 = vmatpush1.bf16.msra.mxu0 %v3687
        %3733 = vmatprep.subr.bf16.mxu0 0
        %3734 = vmatpush1.bf16.msra.mxu0 %v3686
        %3735 = vmatprep.subr.bf16.mxu0 0
        %3736 = vmatpush1.bf16.msra.mxu0 %v3685
        %3737 = vmatprep.subr.bf16.mxu0 0
        %3738 = vmatpush1.bf16.msra.mxu0 %v3684
        %3739 = vmatprep.subr.bf16.mxu0 0
        %3740 = vmatpush1.bf16.msra.mxu0 %v3683
        %3741 = vmatprep.subr.bf16.mxu0 0
        %3742 = vmatpush1.bf16.msra.mxu0 %v3682
        %3743 = vmatprep.subr.bf16.mxu0 0
        %3744 = vmatpush1.bf16.msra.mxu0 %v3681
        %3745 = vmatprep.subr.bf16.mxu0 0
        %3746 = vmatpush2.bf16.msra.mxu0 %v3696
        %3747 = vmatprep.subr.bf16.mxu0 0
        %3748 = vmatpush2.bf16.msra.mxu0 %v3695
        %3749 = vmatprep.subr.bf16.mxu0 0
        %3750 = vmatpush2.bf16.msra.mxu0 %v3694
        %3751 = vmatprep.subr.bf16.mxu0 0
        %3752 = vmatpush2.bf16.msra.mxu0 %v3693
        %3753 = vmatprep.subr.bf16.mxu0 0
        %3754 = vmatpush2.bf16.msra.mxu0 %v3692
        %3755 = vmatprep.subr.bf16.mxu0 0
        %3756 = vmatpush2.bf16.msra.mxu0 %v3691
        %3757 = vmatprep.subr.bf16.mxu0 0
        %3758 = vmatpush2.bf16.msra.mxu0 %v3690
        %3759 = vmatprep.subr.bf16.mxu0 0
        %3760 = vmatpush2.bf16.msra.mxu0 %v3689
        %3761 = vmatprep.mubr.bf16.mxu0 %v3490
        %3762 = vmatmul.mubr.bf16.gmra.mxu0 %v3489
        %v3763 = vpop.f32.mrf.mxu0
        %v3764 = vadd.f32 0.0, %v3763
        %v3765 = vpop.f32.mrf.mxu0
        %v3766 = vpop.f32.mrf.mxu0
        %v3767 = vadd.f32 0.0, %v3766
        %v3768 = vpop.f32.mrf.mxu0
        %3769 = vmatprep.mubr.bf16.mxu0 %v3493
        %3770 = vmatmul.mubr.bf16.gmra.mxu0 %v3492
        %v3771 = vpop.f32.mrf.mxu0
        %v3772 = vadd.f32 0.0, %v3771
        %v3773 = vpop.f32.mrf.mxu0
        %v3774 = vpop.f32.mrf.mxu0
        %v3775 = vadd.f32 0.0, %v3774
        %v3776 = vpop.f32.mrf.mxu0
        %3777 = vmatprep.mubr.bf16.mxu0 %v3496
        %3778 = vmatmul.mubr.bf16.gmra.mxu0 %v3495
        %v3779 = vpop.f32.mrf.mxu0
        %v3780 = vadd.f32 0.0, %v3779
        %v3781 = vpop.f32.mrf.mxu0
        %v3782 = vpop.f32.mrf.mxu0
        %v3783 = vadd.f32 0.0, %v3782
        %v3784 = vpop.f32.mrf.mxu0
        %3785 = vmatprep.mubr.bf16.mxu0 %v3499
        %3786 = vmatmul.mubr.bf16.gmra.mxu0 %v3498
        %v3787 = vpop.f32.mrf.mxu0
        %v3788 = vadd.f32 0.0, %v3787
        %v3789 = vpop.f32.mrf.mxu0
        %v3790 = vpop.f32.mrf.mxu0
        %v3791 = vadd.f32 0.0, %v3790
        %v3792 = vpop.f32.mrf.mxu0
        %3793 = vmatprep.mubr.bf16.mxu0 %v3502
        %3794 = vmatmul.mubr.bf16.gmra.mxu0 %v3501
        %v3795 = vpop.f32.mrf.mxu0
        %v3796 = vadd.f32 0.0, %v3795
        %v3797 = vpop.f32.mrf.mxu0
        %v3798 = vpop.f32.mrf.mxu0
        %v3799 = vadd.f32 0.0, %v3798
        %v3800 = vpop.f32.mrf.mxu0
        %3801 = vmatprep.mubr.bf16.mxu0 %v3505
        %3802 = vmatmul.mubr.bf16.gmra.mxu0 %v3504
        %v3803 = vpop.f32.mrf.mxu0
        %v3804 = vadd.f32 0.0, %v3803
        %v3805 = vpop.f32.mrf.mxu0
        %v3806 = vpop.f32.mrf.mxu0
        %v3807 = vadd.f32 0.0, %v3806
        %v3808 = vpop.f32.mrf.mxu0
        %3809 = vmatprep.mubr.bf16.mxu0 %v3508
        %3810 = vmatmul.mubr.bf16.gmra.mxu0 %v3507
        %v3811 = vpop.f32.mrf.mxu0
        %v3812 = vadd.f32 0.0, %v3811
        %v3813 = vpop.f32.mrf.mxu0
        %v3814 = vpop.f32.mrf.mxu0
        %v3815 = vadd.f32 0.0, %v3814
        %v3816 = vpop.f32.mrf.mxu0
        %3817 = vmatprep.mubr.bf16.mxu0 %v3511
        %3818 = vmatmul.mubr.bf16.gmra.mxu0 %v3510
        %v3819 = vpop.f32.mrf.mxu0
        %v3820 = vadd.f32 0.0, %v3819
        %v3821 = vpop.f32.mrf.mxu0
        %v3822 = vpop.f32.mrf.mxu0
        %v3823 = vadd.f32 0.0, %v3822
        %v3824 = vpop.f32.mrf.mxu0
        %3825 = vmatprep.mubr.bf16.mxu0 %v3514
        %3826 = vmatmul.mubr.bf16.gmra.mxu0 %v3513
        %v3827 = vpop.f32.mrf.mxu0
        %v3828 = vadd.f32 0.0, %v3827
        %v3829 = vpop.f32.mrf.mxu0
        %v3830 = vpop.f32.mrf.mxu0
        %v3831 = vadd.f32 0.0, %v3830
        %v3832 = vpop.f32.mrf.mxu0
        %3833 = vmatprep.mubr.bf16.mxu0 %v3517
        %3834 = vmatmul.mubr.bf16.gmra.mxu0 %v3516
        %v3835 = vpop.f32.mrf.mxu0
        %v3836 = vadd.f32 0.0, %v3835
        %v3837 = vpop.f32.mrf.mxu0
        %v3838 = vpop.f32.mrf.mxu0
        %v3839 = vadd.f32 0.0, %v3838
        %v3840 = vpop.f32.mrf.mxu0
        %3841 = vmatprep.mubr.bf16.mxu0 %v3520
        %3842 = vmatmul.mubr.bf16.gmra.mxu0 %v3519
        %v3843 = vpop.f32.mrf.mxu0
        %v3844 = vadd.f32 0.0, %v3843
        %v3845 = vpop.f32.mrf.mxu0
        %v3846 = vpop.f32.mrf.mxu0
        %v3847 = vadd.f32 0.0, %v3846
        %v3848 = vpop.f32.mrf.mxu0
        %3849 = vmatprep.mubr.bf16.mxu0 %v3523
        %3850 = vmatmul.mubr.bf16.gmra.mxu0 %v3522
        %v3851 = vpop.f32.mrf.mxu0
        %v3852 = vadd.f32 0.0, %v3851
        %v3853 = vpop.f32.mrf.mxu0
        %v3854 = vpop.f32.mrf.mxu0
        %v3855 = vadd.f32 0.0, %v3854
        %v3856 = vpop.f32.mrf.mxu0
        %3857 = vmatprep.mubr.bf16.mxu0 %v3526
        %3858 = vmatmul.mubr.bf16.gmra.mxu0 %v3525
        %v3859 = vpop.f32.mrf.mxu0
        %v3860 = vadd.f32 0.0, %v3859
        %v3861 = vpop.f32.mrf.mxu0
        %v3862 = vpop.f32.mrf.mxu0
        %v3863 = vadd.f32 0.0, %v3862
        %v3864 = vpop.f32.mrf.mxu0
        %3865 = vmatprep.mubr.bf16.mxu0 %v3529
        %3866 = vmatmul.mubr.bf16.gmra.mxu0 %v3528
        %v3867 = vpop.f32.mrf.mxu0
        %v3868 = vadd.f32 0.0, %v3867
        %v3869 = vpop.f32.mrf.mxu0
        %v3870 = vpop.f32.mrf.mxu0
        %v3871 = vadd.f32 0.0, %v3870
        %v3872 = vpop.f32.mrf.mxu0
        %3873 = vmatprep.mubr.bf16.mxu0 %v3532
        %3874 = vmatmul.mubr.bf16.gmra.mxu0 %v3531
        %v3875 = vpop.f32.mrf.mxu0
        %v3876 = vadd.f32 0.0, %v3875
        %v3877 = vpop.f32.mrf.mxu0
        %v3878 = vpop.f32.mrf.mxu0
        %v3879 = vadd.f32 0.0, %v3878
        %v3880 = vpop.f32.mrf.mxu0
        %3881 = vmatprep.mubr.bf16.mxu0 %v3535
        %3882 = vmatmul.mubr.bf16.gmra.mxu0 %v3534
        %v3883 = vpop.f32.mrf.mxu0
        %v3884 = vadd.f32 0.0, %v3883
        %v3885 = vpop.f32.mrf.mxu0
        %v3886 = vpop.f32.mrf.mxu0
        %v3887 = vadd.f32 0.0, %v3886
        %v3888 = vpop.f32.mrf.mxu0
        %3889 = vdwg.mxu0
        %3890 = vmatprep.subr.bf16.mxu0 0
        %3891 = vmatpush1.bf16.msra.mxu0 %v3704
        %3892 = vmatprep.subr.bf16.mxu0 0
        %3893 = vmatpush1.bf16.msra.mxu0 %v3703
        %3894 = vmatprep.subr.bf16.mxu0 0
        %3895 = vmatpush1.bf16.msra.mxu0 %v3702
        %3896 = vmatprep.subr.bf16.mxu0 0
        %3897 = vmatpush1.bf16.msra.mxu0 %v3701
        %3898 = vmatprep.subr.bf16.mxu0 0
        %3899 = vmatpush1.bf16.msra.mxu0 %v3700
        %3900 = vmatprep.subr.bf16.mxu0 0
        %3901 = vmatpush1.bf16.msra.mxu0 %v3699
        %3902 = vmatprep.subr.bf16.mxu0 0
        %3903 = vmatpush1.bf16.msra.mxu0 %v3698
        %3904 = vmatprep.subr.bf16.mxu0 0
        %3905 = vmatpush1.bf16.msra.mxu0 %v3697
        %3906 = vmatprep.subr.bf16.mxu0 0
        %3907 = vmatpush2.bf16.msra.mxu0 0
        %3908 = vmatprep.subr.bf16.mxu0 0
        %3909 = vmatpush2.bf16.msra.mxu0 0
        %3910 = vmatprep.subr.bf16.mxu0 0
        %3911 = vmatpush2.bf16.msra.mxu0 0
        %3912 = vmatprep.subr.bf16.mxu0 0
        %3913 = vmatpush2.bf16.msra.mxu0 0
        %3914 = vmatprep.subr.bf16.mxu0 0
        %3915 = vmatpush2.bf16.msra.mxu0 0
        %3916 = vmatprep.subr.bf16.mxu0 0
        %3917 = vmatpush2.bf16.msra.mxu0 0
        %3918 = vmatprep.subr.bf16.mxu0 0
        %3919 = vmatpush2.bf16.msra.mxu0 0
        %3920 = vmatprep.subr.bf16.mxu0 0
        %3921 = vmatpush2.bf16.msra.mxu0 0
        %3922 = vmatprep.mubr.bf16.mxu0 0
        %3923 = vmatmul.mubr.bf16.gmra.mxu0 %v3491
        %v3924 = vpop.f32.mrf.mxu0
        %v3925 = vadd.f32 %v3764, %v3924
        %v3926 = vpop.f32.mrf.mxu0
        %v3927 = vpop.f32.mrf.mxu0
        %v3928 = vadd.f32 %v3767, %v3927
        %v3929 = vpop.f32.mrf.mxu0
        %3930 = vmatprep.mubr.bf16.mxu0 0
        %3931 = vmatmul.mubr.bf16.gmra.mxu0 %v3494
        %v3932 = vpop.f32.mrf.mxu0
        %v3933 = vadd.f32 %v3772, %v3932
        %v3934 = vpop.f32.mrf.mxu0
        %v3935 = vpop.f32.mrf.mxu0
        %v3936 = vadd.f32 %v3775, %v3935
        %v3937 = vpop.f32.mrf.mxu0
        %3938 = vmatprep.mubr.bf16.mxu0 0
        %3939 = vmatmul.mubr.bf16.gmra.mxu0 %v3497
        %v3940 = vpop.f32.mrf.mxu0
        %v3941 = vadd.f32 %v3780, %v3940
        %v3942 = vpop.f32.mrf.mxu0
        %v3943 = vpop.f32.mrf.mxu0
        %v3944 = vadd.f32 %v3783, %v3943
        %v3945 = vpop.f32.mrf.mxu0
        %3946 = vmatprep.mubr.bf16.mxu0 0
        %3947 = vmatmul.mubr.bf16.gmra.mxu0 %v3500
        %v3948 = vpop.f32.mrf.mxu0
        %v3949 = vadd.f32 %v3788, %v3948
        %v3950 = vpop.f32.mrf.mxu0
        %v3951 = vpop.f32.mrf.mxu0
        %v3952 = vadd.f32 %v3791, %v3951
        %v3953 = vpop.f32.mrf.mxu0
        %3954 = vmatprep.mubr.bf16.mxu0 0
        %3955 = vmatmul.mubr.bf16.gmra.mxu0 %v3503
        %v3956 = vpop.f32.mrf.mxu0
        %v3957 = vadd.f32 %v3796, %v3956
        %v3958 = vpop.f32.mrf.mxu0
        %v3959 = vpop.f32.mrf.mxu0
        %v3960 = vadd.f32 %v3799, %v3959
        %v3961 = vpop.f32.mrf.mxu0
        %3962 = vmatprep.mubr.bf16.mxu0 0
        %3963 = vmatmul.mubr.bf16.gmra.mxu0 %v3506
        %v3964 = vpop.f32.mrf.mxu0
        %v3965 = vadd.f32 %v3804, %v3964
        %v3966 = vpop.f32.mrf.mxu0
        %v3967 = vpop.f32.mrf.mxu0
        %v3968 = vadd.f32 %v3807, %v3967
        %v3969 = vpop.f32.mrf.mxu0
        %3970 = vmatprep.mubr.bf16.mxu0 0
        %3971 = vmatmul.mubr.bf16.gmra.mxu0 %v3509
        %v3972 = vpop.f32.mrf.mxu0
        %v3973 = vadd.f32 %v3812, %v3972
        %v3974 = vpop.f32.mrf.mxu0
        %v3975 = vpop.f32.mrf.mxu0
        %v3976 = vadd.f32 %v3815, %v3975
        %v3977 = vpop.f32.mrf.mxu0
        %3978 = vmatprep.mubr.bf16.mxu0 0
        %3979 = vmatmul.mubr.bf16.gmra.mxu0 %v3512
        %v3980 = vpop.f32.mrf.mxu0
        %v3981 = vadd.f32 %v3820, %v3980
        %v3982 = vpop.f32.mrf.mxu0
        %v3983 = vpop.f32.mrf.mxu0
        %v3984 = vadd.f32 %v3823, %v3983
        %v3985 = vpop.f32.mrf.mxu0
        %3986 = vmatprep.mubr.bf16.mxu0 0
        %3987 = vmatmul.mubr.bf16.gmra.mxu0 %v3515
        %v3988 = vpop.f32.mrf.mxu0
        %v3989 = vadd.f32 %v3828, %v3988
        %v3990 = vpop.f32.mrf.mxu0
        %v3991 = vpop.f32.mrf.mxu0
        %v3992 = vadd.f32 %v3831, %v3991
        %v3993 = vpop.f32.mrf.mxu0
        %3994 = vmatprep.mubr.bf16.mxu0 0
        %3995 = vmatmul.mubr.bf16.gmra.mxu0 %v3518
        %v3996 = vpop.f32.mrf.mxu0
        %v3997 = vadd.f32 %v3836, %v3996
        %v3998 = vpop.f32.mrf.mxu0
        %v3999 = vpop.f32.mrf.mxu0
        %v4000 = vadd.f32 %v3839, %v3999
        %v4001 = vpop.f32.mrf.mxu0
        %4002 = vmatprep.mubr.bf16.mxu0 0
        %4003 = vmatmul.mubr.bf16.gmra.mxu0 %v3521
        %v4004 = vpop.f32.mrf.mxu0
        %v4005 = vadd.f32 %v3844, %v4004
        %v4006 = vpop.f32.mrf.mxu0
        %v4007 = vpop.f32.mrf.mxu0
        %v4008 = vadd.f32 %v3847, %v4007
        %v4009 = vpop.f32.mrf.mxu0
        %4010 = vmatprep.mubr.bf16.mxu0 0
        %4011 = vmatmul.mubr.bf16.gmra.mxu0 %v3524
        %v4012 = vpop.f32.mrf.mxu0
        %v4013 = vadd.f32 %v3852, %v4012
        %v4014 = vpop.f32.mrf.mxu0
        %v4015 = vpop.f32.mrf.mxu0
        %v4016 = vadd.f32 %v3855, %v4015
        %v4017 = vpop.f32.mrf.mxu0
        %4018 = vmatprep.mubr.bf16.mxu0 0
        %4019 = vmatmul.mubr.bf16.gmra.mxu0 %v3527
        %v4020 = vpop.f32.mrf.mxu0
        %v4021 = vadd.f32 %v3860, %v4020
        %v4022 = vpop.f32.mrf.mxu0
        %v4023 = vpop.f32.mrf.mxu0
        %v4024 = vadd.f32 %v3863, %v4023
        %v4025 = vpop.f32.mrf.mxu0
        %4026 = vmatprep.mubr.bf16.mxu0 0
        %4027 = vmatmul.mubr.bf16.gmra.mxu0 %v3530
        %v4028 = vpop.f32.mrf.mxu0
        %v4029 = vadd.f32 %v3868, %v4028
        %v4030 = vpop.f32.mrf.mxu0
        %v4031 = vpop.f32.mrf.mxu0
        %v4032 = vadd.f32 %v3871, %v4031
        %v4033 = vpop.f32.mrf.mxu0
        %4034 = vmatprep.mubr.bf16.mxu0 0
        %4035 = vmatmul.mubr.bf16.gmra.mxu0 %v3533
        %v4036 = vpop.f32.mrf.mxu0
        %v4037 = vadd.f32 %v3876, %v4036
        %v4038 = vpop.f32.mrf.mxu0
        %v4039 = vpop.f32.mrf.mxu0
        %v4040 = vadd.f32 %v3879, %v4039
        %v4041 = vpop.f32.mrf.mxu0
        %4042 = vmatprep.mubr.bf16.mxu0 0
        %4043 = vmatmul.mubr.bf16.gmra.mxu0 %v3536
        %v4044 = vpop.f32.mrf.mxu0
        %v4045 = vadd.f32 %v3884, %v4044
        %v4046 = vpop.f32.mrf.mxu0
        %v4047 = vpop.f32.mrf.mxu0
        %v4048 = vadd.f32 %v3887, %v4047
        %v4049 = vpop.f32.mrf.mxu0
        %4050 = vdwg.mxu0
        %v4051 = vadd.f32 %v3090, %v3925
        %v4052 = vadd.f32 %v3093, %v3928
        %v4053 = vadd.f32 %v3098, %v3933
        %v4054 = vadd.f32 %v3101, %v3936
        %v4055 = vadd.f32 %v3106, %v3941
        %v4056 = vadd.f32 %v3109, %v3944
        %v4057 = vadd.f32 %v3114, %v3949
        %v4058 = vadd.f32 %v3117, %v3952
        %v4059 = vadd.f32 %v3122, %v3957
        %v4060 = vadd.f32 %v3125, %v3960
        %v4061 = vadd.f32 %v3130, %v3965
        %v4062 = vadd.f32 %v3133, %v3968
        %v4063 = vadd.f32 %v3138, %v3973
        %v4064 = vadd.f32 %v3141, %v3976
        %v4065 = vadd.f32 %v3146, %v3981
        %v4066 = vadd.f32 %v3149, %v3984
        %v4067 = vadd.f32 %v3154, %v3989
        %v4068 = vadd.f32 %v3157, %v3992
        %v4069 = vadd.f32 %v3162, %v3997
        %v4070 = vadd.f32 %v3165, %v4000
        %v4071 = vadd.f32 %v3170, %v4005
        %v4072 = vadd.f32 %v3173, %v4008
        %v4073 = vadd.f32 %v3178, %v4013
        %v4074 = vadd.f32 %v3181, %v4016
        %v4075 = vadd.f32 %v3186, %v4021
        %v4076 = vadd.f32 %v3189, %v4024
        %v4077 = vadd.f32 %v3194, %v4029
        %v4078 = vadd.f32 %v3197, %v4032
        %v4079 = vadd.f32 %v3202, %v4037
        %v4080 = vadd.f32 %v3205, %v4040
        %v4081 = vadd.f32 %v3210, %v4045
        %v4082 = vadd.f32 %v3213, %v4048
        %v4083 = vld [vmem:[%s4] sm:$0x1]
        %v4085 = vlaneseq
        %v4086 = vshrl.u32 %v4085, 7
        %v4087 = vsub.s32 0, %v4086
        %v4088 = vrot.slane %v4083, %v4087
        %v4090 = vadd.f32 %v4051, %v4088
        %v4091 = vadd.f32 %v4052, %v4088
        %v4092 = vadd.f32 %v4053, %v4088
        %v4093 = vadd.f32 %v4054, %v4088
        %v4094 = vadd.f32 %v4055, %v4088
        %v4095 = vadd.f32 %v4056, %v4088
        %v4096 = vadd.f32 %v4057, %v4088
        %v4097 = vadd.f32 %v4058, %v4088
        %v4098 = vadd.f32 %v4059, %v4088
        %v4099 = vadd.f32 %v4060, %v4088
        %v4100 = vadd.f32 %v4061, %v4088
        %v4101 = vadd.f32 %v4062, %v4088
        %v4102 = vadd.f32 %v4063, %v4088
        %v4103 = vadd.f32 %v4064, %v4088
        %v4104 = vadd.f32 %v4065, %v4088
        %v4105 = vadd.f32 %v4066, %v4088
        %v4106 = vadd.f32 %v4067, %v4088
        %v4107 = vadd.f32 %v4068, %v4088
        %v4108 = vadd.f32 %v4069, %v4088
        %v4109 = vadd.f32 %v4070, %v4088
        %v4110 = vadd.f32 %v4071, %v4088
        %v4111 = vadd.f32 %v4072, %v4088
        %v4112 = vadd.f32 %v4073, %v4088
        %v4113 = vadd.f32 %v4074, %v4088
        %v4114 = vadd.f32 %v4075, %v4088
        %v4115 = vadd.f32 %v4076, %v4088
        %v4116 = vadd.f32 %v4077, %v4088
        %v4117 = vadd.f32 %v4078, %v4088
        %v4118 = vadd.f32 %v4079, %v4088
        %v4119 = vadd.f32 %v4080, %v4088
        %v4120 = vadd.f32 %v4081, %v4088
        %v4121 = vadd.f32 %v4082, %v4088
        %v4122 = vmax.f32 %v4090, 0.0
        %v4123 = vmax.f32 %v4091, 0.0
        %v4124 = vmax.f32 %v4092, 0.0
        %v4125 = vmax.f32 %v4093, 0.0
        %v4126 = vmax.f32 %v4094, 0.0
        %v4127 = vmax.f32 %v4095, 0.0
        %v4128 = vmax.f32 %v4096, 0.0
        %v4129 = vmax.f32 %v4097, 0.0
        %v4130 = vmax.f32 %v4098, 0.0
        %v4131 = vmax.f32 %v4099, 0.0
        %v4132 = vmax.f32 %v4100, 0.0
        %v4133 = vmax.f32 %v4101, 0.0
        %v4134 = vmax.f32 %v4102, 0.0
        %v4135 = vmax.f32 %v4103, 0.0
        %v4136 = vmax.f32 %v4104, 0.0
        %v4137 = vmax.f32 %v4105, 0.0
        %v4138 = vmax.f32 %v4106, 0.0
        %v4139 = vmax.f32 %v4107, 0.0
        %v4140 = vmax.f32 %v4108, 0.0
        %v4141 = vmax.f32 %v4109, 0.0
        %v4142 = vmax.f32 %v4110, 0.0
        %v4143 = vmax.f32 %v4111, 0.0
        %v4144 = vmax.f32 %v4112, 0.0
        %v4145 = vmax.f32 %v4113, 0.0
        %v4146 = vmax.f32 %v4114, 0.0
        %v4147 = vmax.f32 %v4115, 0.0
        %v4148 = vmax.f32 %v4116, 0.0
        %v4149 = vmax.f32 %v4117, 0.0
        %v4150 = vmax.f32 %v4118, 0.0
        %v4151 = vmax.f32 %v4119, 0.0
        %v4152 = vmax.f32 %v4120, 0.0
        %v4153 = vmax.f32 %v4121, 0.0
        %v4154 = vpack.c.bf16 %v4123, %v4122
        %v4155 = vpack.c.bf16 %v4125, %v4124
        %v4156 = vpack.c.bf16 %v4127, %v4126
        %v4157 = vpack.c.bf16 %v4129, %v4128
        %v4158 = vpack.c.bf16 %v4131, %v4130
        %v4159 = vpack.c.bf16 %v4133, %v4132
        %v4160 = vpack.c.bf16 %v4135, %v4134
        %v4161 = vpack.c.bf16 %v4137, %v4136
        %v4162 = vpack.c.bf16 %v4139, %v4138
        %v4163 = vpack.c.bf16 %v4141, %v4140
        %v4164 = vpack.c.bf16 %v4143, %v4142
        %v4165 = vpack.c.bf16 %v4145, %v4144
        %v4166 = vpack.c.bf16 %v4147, %v4146
        %v4167 = vpack.c.bf16 %v4149, %v4148
        %v4168 = vpack.c.bf16 %v4151, %v4150
        %v4169 = vpack.c.bf16 %v4153, %v4152
        %v4170 = vld [vmem:[%s5] sm:$0xf]
        %v4171 = vld [vmem:[%s5 + $0x4] sm:$0xf]
        %v4172 = vld [vmem:[%s5 + $0x8] sm:$0xf]
        %v4173 = vld [vmem:[%s5 + $0xc] sm:$0xf]
        %v4174 = vld [vmem:[%s5 + $0x10] sm:$0xf]
        %v4175 = vld [vmem:[%s5 + $0x14] sm:$0xf]
        %v4176 = vld [vmem:[%s5 + $0x18] sm:$0xf]
        %v4177 = vld [vmem:[%s5 + $0x1c] sm:$0xf]
        %v4178 = vld [vmem:[%s5 + $0x20] sm:$0xf]
        %v4179 = vld [vmem:[%s5 + $0x24] sm:$0xf]
        %v4180 = vld [vmem:[%s5 + $0x28] sm:$0xf]
        %v4181 = vld [vmem:[%s5 + $0x2c] sm:$0xf]
        %v4182 = vld [vmem:[%s5 + $0x30] sm:$0xf]
        %v4183 = vld [vmem:[%s5 + $0x34] sm:$0xf]
        %v4184 = vld [vmem:[%s5 + $0x38] sm:$0xf]
        %v4185 = vld [vmem:[%s5 + $0x3c] sm:$0xf]
        %v4186 = vld [vmem:[%s6] sm:$0x1]
        %v4188 = vlaneseq
        %v4189 = vshrl.u32 %v4188, 7
        %v4190 = vsub.s32 0, %v4189
        %v4191 = vrot.slane %v4186, %v4190
        %v4209 = vunpack.c.l.b16 %v4170
        %v4210 = vunpack.c.l.b16 %v4171
        %v4211 = vunpack.c.l.b16 %v4172
        %v4212 = vunpack.c.l.b16 %v4173
        %v4213 = vunpack.c.l.b16 %v4174
        %v4214 = vunpack.c.l.b16 %v4175
        %v4215 = vunpack.c.l.b16 %v4176
        %v4216 = vunpack.c.l.b16 %v4177
        %v4217 = vunpack.c.l.b16 %v4178
        %v4218 = vunpack.c.l.b16 %v4179
        %v4219 = vunpack.c.l.b16 %v4180
        %v4220 = vunpack.c.l.b16 %v4181
        %v4221 = vunpack.c.l.b16 %v4182
        %v4222 = vunpack.c.l.b16 %v4183
        %v4223 = vunpack.c.l.b16 %v4184
        %v4224 = vunpack.c.l.b16 %v4185
        %v4225 = vpack.c.b16 %v4210, %v4209
        %v4226 = vpack.c.b16 %v4212, %v4211
        %v4227 = vpack.c.b16 %v4214, %v4213
        %v4228 = vpack.c.b16 %v4216, %v4215
        %v4229 = vpack.c.b16 %v4218, %v4217
        %v4230 = vpack.c.b16 %v4220, %v4219
        %v4231 = vpack.c.b16 %v4222, %v4221
        %v4232 = vpack.c.b16 %v4224, %v4223
        %4241 = vmatprep.subr.bf16.mxu0 0
        %4242 = vmatpush1.bf16.msra.mxu0 %v4232
        %4243 = vmatprep.subr.bf16.mxu0 0
        %4244 = vmatpush1.bf16.msra.mxu0 %v4231
        %4245 = vmatprep.subr.bf16.mxu0 0
        %4246 = vmatpush1.bf16.msra.mxu0 %v4230
        %4247 = vmatprep.subr.bf16.mxu0 0
        %4248 = vmatpush1.bf16.msra.mxu0 %v4229
        %4249 = vmatprep.subr.bf16.mxu0 0
        %4250 = vmatpush1.bf16.msra.mxu0 %v4228
        %4251 = vmatprep.subr.bf16.mxu0 0
        %4252 = vmatpush1.bf16.msra.mxu0 %v4227
        %4253 = vmatprep.subr.bf16.mxu0 0
        %4254 = vmatpush1.bf16.msra.mxu0 %v4226
        %4255 = vmatprep.subr.bf16.mxu0 0
        %4256 = vmatpush1.bf16.msra.mxu0 %v4225
        %4257 = vmatprep.subr.bf16.mxu0 0
        %4258 = vmatpush2.bf16.msra.mxu0 0
        %4259 = vmatprep.subr.bf16.mxu0 0
        %4260 = vmatpush2.bf16.msra.mxu0 0
        %4261 = vmatprep.subr.bf16.mxu0 0
        %4262 = vmatpush2.bf16.msra.mxu0 0
        %4263 = vmatprep.subr.bf16.mxu0 0
        %4264 = vmatpush2.bf16.msra.mxu0 0
        %4265 = vmatprep.subr.bf16.mxu0 0
        %4266 = vmatpush2.bf16.msra.mxu0 0
        %4267 = vmatprep.subr.bf16.mxu0 0
        %4268 = vmatpush2.bf16.msra.mxu0 0
        %4269 = vmatprep.subr.bf16.mxu0 0
        %4270 = vmatpush2.bf16.msra.mxu0 0
        %4271 = vmatprep.subr.bf16.mxu0 0
        %4272 = vmatpush2.bf16.msra.mxu0 0
        %4273 = vmatprep.mubr.bf16.mxu0 0
        %4274 = vmatmul.mubr.bf16.gmra.mxu0 %v4154
        %v4275 = vpop.f32.mrf.mxu0
        %v4276 = vadd.f32 %v4191, %v4275
        %v4277 = vpop.f32.mrf.mxu0
        %v4278 = vpop.f32.mrf.mxu0
        %v4279 = vadd.f32 %v4191, %v4278
        %v4280 = vpop.f32.mrf.mxu0
        %4281 = vmatprep.mubr.bf16.mxu0 0
        %4282 = vmatmul.mubr.bf16.gmra.mxu0 %v4155
        %v4283 = vpop.f32.mrf.mxu0
        %v4284 = vadd.f32 %v4191, %v4283
        %v4285 = vpop.f32.mrf.mxu0
        %v4286 = vpop.f32.mrf.mxu0
        %v4287 = vadd.f32 %v4191, %v4286
        %v4288 = vpop.f32.mrf.mxu0
        %4289 = vmatprep.mubr.bf16.mxu0 0
        %4290 = vmatmul.mubr.bf16.gmra.mxu0 %v4156
        %v4291 = vpop.f32.mrf.mxu0
        %v4292 = vadd.f32 %v4191, %v4291
        %v4293 = vpop.f32.mrf.mxu0
        %v4294 = vpop.f32.mrf.mxu0
        %v4295 = vadd.f32 %v4191, %v4294
        %v4296 = vpop.f32.mrf.mxu0
        %4297 = vmatprep.mubr.bf16.mxu0 0
        %4298 = vmatmul.mubr.bf16.gmra.mxu0 %v4157
        %v4299 = vpop.f32.mrf.mxu0
        %v4300 = vadd.f32 %v4191, %v4299
        %v4301 = vpop.f32.mrf.mxu0
        %v4302 = vpop.f32.mrf.mxu0
        %v4303 = vadd.f32 %v4191, %v4302
        %v4304 = vpop.f32.mrf.mxu0
        %4305 = vmatprep.mubr.bf16.mxu0 0
        %4306 = vmatmul.mubr.bf16.gmra.mxu0 %v4158
        %v4307 = vpop.f32.mrf.mxu0
        %v4308 = vadd.f32 %v4191, %v4307
        %v4309 = vpop.f32.mrf.mxu0
        %v4310 = vpop.f32.mrf.mxu0
        %v4311 = vadd.f32 %v4191, %v4310
        %v4312 = vpop.f32.mrf.mxu0
        %4313 = vmatprep.mubr.bf16.mxu0 0
        %4314 = vmatmul.mubr.bf16.gmra.mxu0 %v4159
        %v4315 = vpop.f32.mrf.mxu0
        %v4316 = vadd.f32 %v4191, %v4315
        %v4317 = vpop.f32.mrf.mxu0
        %v4318 = vpop.f32.mrf.mxu0
        %v4319 = vadd.f32 %v4191, %v4318
        %v4320 = vpop.f32.mrf.mxu0
        %4321 = vmatprep.mubr.bf16.mxu0 0
        %4322 = vmatmul.mubr.bf16.gmra.mxu0 %v4160
        %v4323 = vpop.f32.mrf.mxu0
        %v4324 = vadd.f32 %v4191, %v4323
        %v4325 = vpop.f32.mrf.mxu0
        %v4326 = vpop.f32.mrf.mxu0
        %v4327 = vadd.f32 %v4191, %v4326
        %v4328 = vpop.f32.mrf.mxu0
        %4329 = vmatprep.mubr.bf16.mxu0 0
        %4330 = vmatmul.mubr.bf16.gmra.mxu0 %v4161
        %v4331 = vpop.f32.mrf.mxu0
        %v4332 = vadd.f32 %v4191, %v4331
        %v4333 = vpop.f32.mrf.mxu0
        %v4334 = vpop.f32.mrf.mxu0
        %v4335 = vadd.f32 %v4191, %v4334
        %v4336 = vpop.f32.mrf.mxu0
        %4337 = vmatprep.mubr.bf16.mxu0 0
        %4338 = vmatmul.mubr.bf16.gmra.mxu0 %v4162
        %v4339 = vpop.f32.mrf.mxu0
        %v4340 = vadd.f32 %v4191, %v4339
        %v4341 = vpop.f32.mrf.mxu0
        %v4342 = vpop.f32.mrf.mxu0
        %v4343 = vadd.f32 %v4191, %v4342
        %v4344 = vpop.f32.mrf.mxu0
        %4345 = vmatprep.mubr.bf16.mxu0 0
        %4346 = vmatmul.mubr.bf16.gmra.mxu0 %v4163
        %v4347 = vpop.f32.mrf.mxu0
        %v4348 = vadd.f32 %v4191, %v4347
        %v4349 = vpop.f32.mrf.mxu0
        %v4350 = vpop.f32.mrf.mxu0
        %v4351 = vadd.f32 %v4191, %v4350
        %v4352 = vpop.f32.mrf.mxu0
        %4353 = vmatprep.mubr.bf16.mxu0 0
        %4354 = vmatmul.mubr.bf16.gmra.mxu0 %v4164
        %v4355 = vpop.f32.mrf.mxu0
        %v4356 = vadd.f32 %v4191, %v4355
        %v4357 = vpop.f32.mrf.mxu0
        %v4358 = vpop.f32.mrf.mxu0
        %v4359 = vadd.f32 %v4191, %v4358
        %v4360 = vpop.f32.mrf.mxu0
        %4361 = vmatprep.mubr.bf16.mxu0 0
        %4362 = vmatmul.mubr.bf16.gmra.mxu0 %v4165
        %v4363 = vpop.f32.mrf.mxu0
        %v4364 = vadd.f32 %v4191, %v4363
        %v4365 = vpop.f32.mrf.mxu0
        %v4366 = vpop.f32.mrf.mxu0
        %v4367 = vadd.f32 %v4191, %v4366
        %v4368 = vpop.f32.mrf.mxu0
        %4369 = vmatprep.mubr.bf16.mxu0 0
        %4370 = vmatmul.mubr.bf16.gmra.mxu0 %v4166
        %v4371 = vpop.f32.mrf.mxu0
        %v4372 = vadd.f32 %v4191, %v4371
        %v4373 = vpop.f32.mrf.mxu0
        %v4374 = vpop.f32.mrf.mxu0
        %v4375 = vadd.f32 %v4191, %v4374
        %v4376 = vpop.f32.mrf.mxu0
        %4377 = vmatprep.mubr.bf16.mxu0 0
        %4378 = vmatmul.mubr.bf16.gmra.mxu0 %v4167
        %v4379 = vpop.f32.mrf.mxu0
        %v4380 = vadd.f32 %v4191, %v4379
        %v4381 = vpop.f32.mrf.mxu0
        %v4382 = vpop.f32.mrf.mxu0
        %v4383 = vadd.f32 %v4191, %v4382
        %v4384 = vpop.f32.mrf.mxu0
        %4385 = vmatprep.mubr.bf16.mxu0 0
        %4386 = vmatmul.mubr.bf16.gmra.mxu0 %v4168
        %v4387 = vpop.f32.mrf.mxu0
        %v4388 = vadd.f32 %v4191, %v4387
        %v4389 = vpop.f32.mrf.mxu0
        %v4390 = vpop.f32.mrf.mxu0
        %v4391 = vadd.f32 %v4191, %v4390
        %v4392 = vpop.f32.mrf.mxu0
        %4393 = vmatprep.mubr.bf16.mxu0 0
        %4394 = vmatmul.mubr.bf16.gmra.mxu0 %v4169
        %v4395 = vpop.f32.mrf.mxu0
        %v4396 = vadd.f32 %v4191, %v4395
        %v4397 = vpop.f32.mrf.mxu0
        %v4398 = vpop.f32.mrf.mxu0
        %v4399 = vadd.f32 %v4191, %v4398
        %v4400 = vpop.f32.mrf.mxu0
        %4401 = vdwg.mxu0
        %v4402 = vadd.f32 %v4276, %v278
        %v4403 = vadd.f32 %v4279, %v279
        %v4404 = vadd.f32 %v4284, %v280
        %v4405 = vadd.f32 %v4287, %v281
        %v4406 = vadd.f32 %v4292, %v282
        %v4407 = vadd.f32 %v4295, %v283
        %v4408 = vadd.f32 %v4300, %v284
        %v4409 = vadd.f32 %v4303, %v285
        %v4410 = vadd.f32 %v4308, %v286
        %v4411 = vadd.f32 %v4311, %v287
        %v4412 = vadd.f32 %v4316, %v288
        %v4413 = vadd.f32 %v4319, %v289
        %v4414 = vadd.f32 %v4324, %v290
        %v4415 = vadd.f32 %v4327, %v291
        %v4416 = vadd.f32 %v4332, %v292
        %v4417 = vadd.f32 %v4335, %v293
        %v4418 = vadd.f32 %v4340, %v294
        %v4419 = vadd.f32 %v4343, %v295
        %v4420 = vadd.f32 %v4348, %v296
        %v4421 = vadd.f32 %v4351, %v297
        %v4422 = vadd.f32 %v4356, %v298
        %v4423 = vadd.f32 %v4359, %v299
        %v4424 = vadd.f32 %v4364, %v300
        %v4425 = vadd.f32 %v4367, %v301
        %v4426 = vadd.f32 %v4372, %v302
        %v4427 = vadd.f32 %v4375, %v303
        %v4428 = vadd.f32 %v4380, %v304
        %v4429 = vadd.f32 %v4383, %v305
        %v4430 = vadd.f32 %v4388, %v306
        %v4431 = vadd.f32 %v4391, %v307
        %v4432 = vadd.f32 %v4396, %v308
        %v4433 = vadd.f32 %v4399, %v309
        %v4434 = vmax.f32 %v4402, 0.0
        %v4435 = vmax.f32 %v4403, 0.0
        %v4436 = vmax.f32 %v4404, 0.0
        %v4437 = vmax.f32 %v4405, 0.0
        %v4438 = vmax.f32 %v4406, 0.0
        %v4439 = vmax.f32 %v4407, 0.0
        %v4440 = vmax.f32 %v4408, 0.0
        %v4441 = vmax.f32 %v4409, 0.0
        %v4442 = vmax.f32 %v4410, 0.0
        %v4443 = vmax.f32 %v4411, 0.0
        %v4444 = vmax.f32 %v4412, 0.0
        %v4445 = vmax.f32 %v4413, 0.0
        %v4446 = vmax.f32 %v4414, 0.0
        %v4447 = vmax.f32 %v4415, 0.0
        %v4448 = vmax.f32 %v4416, 0.0
        %v4449 = vmax.f32 %v4417, 0.0
        %v4450 = vmax.f32 %v4418, 0.0
        %v4451 = vmax.f32 %v4419, 0.0
        %v4452 = vmax.f32 %v4420, 0.0
        %v4453 = vmax.f32 %v4421, 0.0
        %v4454 = vmax.f32 %v4422, 0.0
        %v4455 = vmax.f32 %v4423, 0.0
        %v4456 = vmax.f32 %v4424, 0.0
        %v4457 = vmax.f32 %v4425, 0.0
        %v4458 = vmax.f32 %v4426, 0.0
        %v4459 = vmax.f32 %v4427, 0.0
        %v4460 = vmax.f32 %v4428, 0.0
        %v4461 = vmax.f32 %v4429, 0.0
        %v4462 = vmax.f32 %v4430, 0.0
        %v4463 = vmax.f32 %v4431, 0.0
        %v4464 = vmax.f32 %v4432, 0.0
        %v4465 = vmax.f32 %v4433, 0.0
        %4466 = vst [vmem:[%s271] sm:$0xff] %v4434
        %4467 = vst [vmem:[%s271 + $0x8] sm:$0xff] %v4435
        %4468 = vst [vmem:[%s271 + $0x10] sm:$0xff] %v4436
        %4469 = vst [vmem:[%s271 + $0x18] sm:$0xff] %v4437
        %4470 = vst [vmem:[%s271 + $0x20] sm:$0xff] %v4438
        %4471 = vst [vmem:[%s271 + $0x28] sm:$0xff] %v4439
        %4472 = vst [vmem:[%s271 + $0x30] sm:$0xff] %v4440
        %4473 = vst [vmem:[%s271 + $0x38] sm:$0xff] %v4441
        %4474 = vst [vmem:[%s271 + $0x40] sm:$0xff] %v4442
        %4475 = vst [vmem:[%s271 + $0x48] sm:$0xff] %v4443
        %4476 = vst [vmem:[%s271 + $0x50] sm:$0xff] %v4444
        %4477 = vst [vmem:[%s271 + $0x58] sm:$0xff] %v4445
        %4478 = vst [vmem:[%s271 + $0x60] sm:$0xff] %v4446
        %4479 = vst [vmem:[%s271 + $0x68] sm:$0xff] %v4447
        %4480 = vst [vmem:[%s271 + $0x70] sm:$0xff] %v4448
        %4481 = vst [vmem:[%s271 + $0x78] sm:$0xff] %v4449
        %4482 = vst [vmem:[%s271 + $0x80] sm:$0xff] %v4450
        %4483 = vst [vmem:[%s271 + $0x88] sm:$0xff] %v4451
        %4484 = vst [vmem:[%s271 + $0x90] sm:$0xff] %v4452
        %4485 = vst [vmem:[%s271 + $0x98] sm:$0xff] %v4453
        %4486 = vst [vmem:[%s271 + $0xa0] sm:$0xff] %v4454
        %4487 = vst [vmem:[%s271 + $0xa8] sm:$0xff] %v4455
        %4488 = vst [vmem:[%s271 + $0xb0] sm:$0xff] %v4456
        %4489 = vst [vmem:[%s271 + $0xb8] sm:$0xff] %v4457
        %4490 = vst [vmem:[%s271 + $0xc0] sm:$0xff] %v4458
        %4491 = vst [vmem:[%s271 + $0xc8] sm:$0xff] %v4459
        %4492 = vst [vmem:[%s271 + $0xd0] sm:$0xff] %v4460
        %4493 = vst [vmem:[%s271 + $0xd8] sm:$0xff] %v4461
        %4494 = vst [vmem:[%s271 + $0xe0] sm:$0xff] %v4462
        %4495 = vst [vmem:[%s271 + $0xe8] sm:$0xff] %v4463
        %4496 = vst [vmem:[%s271 + $0xf0] sm:$0xff] %v4464
        %4497 = vst [vmem:[%s271 + $0xf8] sm:$0xff] %v4465
        %s4498 = sand.u32 %s181, 1
        %s4499 = scalar_lea.sflag [#allocation5], %s4498
        %s4500 = sand.u32 %s181, 1
        %s4501 = smul.addr %s4500, 256
        %s4502 = scalar_lea.vmem [#allocation4], %s4501
        // Predicated region
        $region49: #{bottleneck_forward.1} parent=47 // pred_check
          %p4503 = pneg %p191
        $region50: #{bottleneck_forward.1} parent=47 // pred_check_branch
          %4505 = sbr.rel (%p4503) target = $region52
        $region51: #{bottleneck_forward.1} parent=47 // pred_region
          %s4507 = ssub.s32 4096, 4096
          %4508 = vsyncadd %s4499, %s4507
          %s4509 = smul.addr %s21, 32
          %s4510 = smul.addr %s4509, 128
          %s4511 = scalar_lea.hbm %s7, %s4510
          %s4512 = sshll.u32 %s4502, 4
          %s4513 = int_to_ptr.vmem [resolvable:$true] %s4512
          %4518 = dma.vmem_to_hbm [thread:$0]  %s4513, 4096, %s4511, %s4499, 128, 128, 8
        $region52: #{bottleneck_forward.1} parent=47 // pred_fallthru
          _
      $region48: #{bottleneck_forward.1} parent=5 // pred_fallthru
        _
      %p4519 = scmp.le.s32.totalorder 2, %s16
      // Predicated region
      $region53: #{bottleneck_forward.1} parent=5 // pred_check
        %p4520 = pneg %p4519
      $region54: #{bottleneck_forward.1} parent=5 // pred_check_branch
        %4522 = sbr.rel (%p4520) target = $region56
      $region55: #{bottleneck_forward.1} parent=5 // pred_region
        %s4523 = ssub.s32 %s16, 2
        // Predicated region
        $region57: #{bottleneck_forward.1} parent=55 // pred_check
          %p4524 = pneg %p197
        $region58: #{bottleneck_forward.1} parent=55 // pred_check_branch
          %4526 = sbr.rel (%p4524) target = $region60
        $region59: #{bottleneck_forward.1} parent=55 // pred_region
          %s4527 = sand.u32 %s182, 1
          %s4528 = scalar_lea.sflag [#allocation5], %s4527
          %s4529 = sand.u32 %s182, 1
          %s4530 = smul.addr %s4529, 256
          %s4531 = scalar_lea.vmem [#allocation4], %s4530
          %4532 = dma.done %s4528, 4096
        $region60: #{bottleneck_forward.1} parent=55 // pred_fallthru
          _
      $region56: #{bottleneck_forward.1} parent=5 // pred_fallthru
        _
    $region6: #{bottleneck_forward.1} parent=1 // loop_footer
      %s20 = sadd.s32 1, %s16
    $region7: #{bottleneck_forward.1} parent=1 // loop_footer_branch
      %15 = sbr.rel target = $region3
    $region8: #{bottleneck_forward.1} parent=1 // loop_exit
      _
    %4533 = vsyncpa [#allocation5], 1
    %s4534 = scalar_lea.sflag [#allocation5], 1
    %4535 = vsyncpa %s4534, 1

</llo_original>
